<compile_context>
chip_gen: v5e
topology: v5e:2x2
jax: 0.10.0
libtpu: 0.0.40
codegen_flags: <defaults>
</compile_context>

<pallas_src>
import jax
import jax.numpy as jnp
from jax import lax
from jax.experimental import pallas as pl
from jax.experimental.pallas import tpu as pltpu


# ------------------------------ kernel helpers ------------------------------ #

def _shift2d(x, dy, dx):
    """out[i, j] = x[i + dy, j + dx] if in-bounds else 0 (static dy/dx in {-1,0,1})."""
    H, W = x.shape
    if dy > 0:
        x = jnp.concatenate([x[dy:, :], jnp.zeros((dy, W), x.dtype)], axis=0)
    elif dy < 0:
        x = jnp.concatenate([jnp.zeros((-dy, W), x.dtype), x[: H + dy, :]], axis=0)
    if dx > 0:
        x = jnp.concatenate([x[:, dx:], jnp.zeros((H, dx), x.dtype)], axis=1)
    elif dx < 0:
        x = jnp.concatenate([jnp.zeros((H, -dx), x.dtype), x[:, : W + dx]], axis=1)
    return x


def _conv3x3_chw(x_chans, w_vals, b_vals, cout):
    """3x3 conv, stride 1, zero pad 1, on a list of per-channel (H, W) tiles.

    w_vals: flat Python list of scalar weights, (ky, kx, ci, co) row-major (HWIO).
    b_vals: Python list of cout scalar biases.
    Returns a list of cout (H, W) fp32 tiles.
    """
    cin = len(x_chans)
    H, W = x_chans[0].shape
    # 9 zero-shifted taps per input channel, shared across all output channels.
    taps = [[_shift2d(xc, dy, dx) for dy in (-1, 0, 1) for dx in (-1, 0, 1)]
            for xc in x_chans]
    outs = []
    for co in range(cout):
        acc = jnp.full((H, W), b_vals[co], dtype=jnp.float32)   # bias folded into init
        for t in range(9):                                      # t = ky*3 + kx
            for ci in range(cin):
                wv = w_vals[(t * cin + ci) * cout + co]
                acc = acc + wv * taps[ci][t]
        outs.append(acc)
    return outs


# ---------------------------------- kernel ---------------------------------- #

# Contract the leading (H) axes of R and L: result[w, w'] = sum_h R[h,w] * L[h,w']
# == (transpose(R) @ L)[w, w'] -- i.e. the PyTorch transposed matmul, done on the
# MXU without ever materializing R^T.
_TRANS_LHS_DIMS = (((0,), (0,)), ((), ()))


def _feature_agg_kernel(lq_ref, refs_ref, wl_ref, bl_ref, wr_ref, br_ref, out_ref):
    # lq_ref:   (C, H, W)     one batch element (N squeezed by BlockSpec)
    # refs_ref: (K*C, H, W)   K aligned references, channels flattened
    # w*_ref:   SMEM (9*C*C,) flat HWIO conv weights;  b*_ref: SMEM (C,)
    # out_ref:  (C, H, W)
    C, H, W = out_ref.shape
    K = refs_ref.shape[0] // C

    # Load all conv weights from SMEM once (reused for every k / channel).
    wl = [wl_ref[i] for i in range(9 * C * C)]
    bl = [bl_ref[c] for c in range(C)]
    wr = [wr_ref[i] for i in range(9 * C * C)]
    br = [br_ref[c] for c in range(C)]

    lq = [lq_ref[c].astype(jnp.float32) for c in range(C)]
    L = _conv3x3_chw(lq, wl, bl, C)                         # lq_res(lq_f), per channel

    num = [jnp.zeros((W, W), jnp.float32) for _ in range(C)]   # H == W
    den = [jnp.zeros((W, W), jnp.float32) for _ in range(C)]
    for k in range(K):
        ref_c = [refs_ref[k * C + c].astype(jnp.float32) for c in range(C)]
        R = _conv3x3_chw(ref_c, wr, br, C)                  # ref_res(ref_k)
        for c in range(C):
            sim = jax.nn.sigmoid(
                lax.dot_general(R[c], L[c], _TRANS_LHS_DIMS,
                                preferred_element_type=jnp.float32))   # (W, W)
            num[c] = num[c] + sim * ref_c[c]
            den[c] = den[c] + sim
    for c in range(C):
        out_ref[c, :, :] = (num[c] / den[c] + lq[c]).astype(out_ref.dtype)


# --------------------------------- wrapper ---------------------------------- #

def feature_aggregation(lq_f, refs_a, params):
    """lq_f: (N, C, H, W); refs_a: (N, K, C, H, W) -- the stacked aligned refs."""
    N, C, H, W = lq_f.shape
    K = refs_a.shape[1]
    assert refs_a.shape == (N, K, C, H, W)
    assert H == W, "module's matmul/broadcast requires square spatial dims"

    refs = refs_a.reshape(N, K * C, H, W)
    w_lq = params["w_lq"].reshape(-1)     # (3,3,C,C) HWIO -> flat
    w_rf = params["w_ref"].reshape(-1)
    b_lq = params["b_lq"]
    b_rf = params["b_ref"]

    smem = pl.BlockSpec(memory_space=pltpu.MemorySpace.SMEM)
    return pl.pallas_call(
        _feature_agg_kernel,
        out_shape=jax.ShapeDtypeStruct((N, C, H, W), lq_f.dtype),
        grid=(N,),
        in_specs=[
            pl.BlockSpec((None, C, H, W), lambda n: (n, 0, 0, 0)),
            pl.BlockSpec((None, K * C, H, W), lambda n: (n, 0, 0, 0)),
            smem, smem, smem, smem,
        ],
        out_specs=pl.BlockSpec((None, C, H, W), lambda n: (n, 0, 0, 0)),
        compiler_params=pltpu.CompilerParams(dimension_semantics=("parallel",)),
    )(lq_f, refs, w_lq, b_lq, w_rf, b_rf)


# ----------------------------- pure-JAX reference --------------------------- #

def _conv3x3_ref(x, w, b):
    y = jax.lax.conv_general_dilated(
        x, w, window_strides=(1, 1), padding="SAME",
        dimension_numbers=("NCHW", "HWIO", "NCHW"))
    return y + b.reshape(1, -1, 1, 1)


def feature_aggregation_ref(lq_f, refs_a, params):
    L = _conv3x3_ref(lq_f, params["w_lq"], params["b_lq"])
    num = 0.0
    den = 0.0
    for k in range(refs_a.shape[1]):
        ref = refs_a[:, k]
        r = jnp.swapaxes(_conv3x3_ref(ref, params["w_ref"], params["b_ref"]), 2, 3)
        sim = jax.nn.sigmoid(jnp.matmul(r, L))
        num = num + sim * ref
        den = den + sim
    return num / den + lq_f


# ----------------------------------- main ------------------------------------ #

if __name__ == "__main__":
    key = jax.random.PRNGKey(0)
    k1, k2, k3, k4, k5, k6 = jax.random.split(key, 6)

    N, K, C, H, W = 2, 3, 3, 16, 16                 # in_nc = out_nc = 3 (module default)
    lq_f = jax.random.normal(k1, (N, C, H, W), jnp.float32)
    refs_a = jax.random.normal(k2, (N, K, C, H, W), jnp.float32)
    params = {
        "w_lq": 0.1 * jax.random.normal(k3, (3, 3, C, C), jnp.float32),   # HWIO
        "b_lq": 0.1 * jax.random.normal(k4, (C,), jnp.float32),
        "w_ref": 0.1 * jax.random.normal(k5, (3, 3, C, C), jnp.float32),  # HWIO
        "b_ref": 0.1 * jax.random.normal(k6, (C,), jnp.float32),
    }

    out = jax.jit(feature_aggregation)(lq_f, refs_a, params)
    out = jax.block_until_ready(out)
    assert out.shape == (N, C, H, W), out.shape

    ref_out = feature_aggregation_ref(lq_f, refs_a, params)
    max_err = float(jnp.max(jnp.abs(out - ref_out)))
    assert max_err < 2e-3, f"mismatch vs reference: {max_err}"

    print("KERNEL_OK")
</pallas_src>

<mosaic_0001>
module attributes {stable_mosaic.version = 11 : i64} {
  func.func @_feature_agg_kernel(%arg0: i32, %arg1: memref<1x3x16x16xf32, #tpu.memory_space<vmem>>, %arg2: memref<1x9x16x16xf32, #tpu.memory_space<vmem>>, %arg3: memref<81xf32, #tpu.memory_space<smem>>, %arg4: memref<3xf32, #tpu.memory_space<smem>>, %arg5: memref<81xf32, #tpu.memory_space<smem>>, %arg6: memref<3xf32, #tpu.memory_space<smem>>, %arg7: memref<1x3x16x16xf32, #tpu.memory_space<vmem>>) attributes {dimension_semantics = [#tpu.dimension_semantics<parallel>], iteration_bounds = array<i64: 2>, scalar_prefetch = 0 : i64, scratch_operands = 0 : i64, tpu.core_type = #tpu.core_type<tc>, window_params = [{transform_indices = @transform_0, window_bounds = array<i64: 1, 3, 16, 16>}, {transform_indices = @transform_1, window_bounds = array<i64: 1, 9, 16, 16>}, {transform_indices = @transform_2, window_bounds = array<i64: 81>}, {transform_indices = @transform_3, window_bounds = array<i64: 3>}, {transform_indices = @transform_4, window_bounds = array<i64: 81>}, {transform_indices = @transform_5, window_bounds = array<i64: 3>}, {transform_indices = @transform_6, window_bounds = array<i64: 1, 3, 16, 16>}]} {
    %c0 = arith.constant 0 : index
    %0 = memref.load %arg3[%c0] : memref<81xf32, #tpu.memory_space<smem>>
    %c1 = arith.constant 1 : index
    %1 = memref.load %arg3[%c1] : memref<81xf32, #tpu.memory_space<smem>>
    %c2 = arith.constant 2 : index
    %2 = memref.load %arg3[%c2] : memref<81xf32, #tpu.memory_space<smem>>
    %c3 = arith.constant 3 : index
    %3 = memref.load %arg3[%c3] : memref<81xf32, #tpu.memory_space<smem>>
    %c4 = arith.constant 4 : index
    %4 = memref.load %arg3[%c4] : memref<81xf32, #tpu.memory_space<smem>>
    %c5 = arith.constant 5 : index
    %5 = memref.load %arg3[%c5] : memref<81xf32, #tpu.memory_space<smem>>
    %c6 = arith.constant 6 : index
    %6 = memref.load %arg3[%c6] : memref<81xf32, #tpu.memory_space<smem>>
    %c7 = arith.constant 7 : index
    %7 = memref.load %arg3[%c7] : memref<81xf32, #tpu.memory_space<smem>>
    %c8 = arith.constant 8 : index
    %8 = memref.load %arg3[%c8] : memref<81xf32, #tpu.memory_space<smem>>
    %c9 = arith.constant 9 : index
    %9 = memref.load %arg3[%c9] : memref<81xf32, #tpu.memory_space<smem>>
    %c10 = arith.constant 10 : index
    %10 = memref.load %arg3[%c10] : memref<81xf32, #tpu.memory_space<smem>>
    %c11 = arith.constant 11 : index
    %11 = memref.load %arg3[%c11] : memref<81xf32, #tpu.memory_space<smem>>
    %c12 = arith.constant 12 : index
    %12 = memref.load %arg3[%c12] : memref<81xf32, #tpu.memory_space<smem>>
    %c13 = arith.constant 13 : index
    %13 = memref.load %arg3[%c13] : memref<81xf32, #tpu.memory_space<smem>>
    %c14 = arith.constant 14 : index
    %14 = memref.load %arg3[%c14] : memref<81xf32, #tpu.memory_space<smem>>
    %c15 = arith.constant 15 : index
    %15 = memref.load %arg3[%c15] : memref<81xf32, #tpu.memory_space<smem>>
    %c16 = arith.constant 16 : index
    %16 = memref.load %arg3[%c16] : memref<81xf32, #tpu.memory_space<smem>>
    %c17 = arith.constant 17 : index
    %17 = memref.load %arg3[%c17] : memref<81xf32, #tpu.memory_space<smem>>
    %c18 = arith.constant 18 : index
    %18 = memref.load %arg3[%c18] : memref<81xf32, #tpu.memory_space<smem>>
    %c19 = arith.constant 19 : index
    %19 = memref.load %arg3[%c19] : memref<81xf32, #tpu.memory_space<smem>>
    %c20 = arith.constant 20 : index
    %20 = memref.load %arg3[%c20] : memref<81xf32, #tpu.memory_space<smem>>
    %c21 = arith.constant 21 : index
    %21 = memref.load %arg3[%c21] : memref<81xf32, #tpu.memory_space<smem>>
    %c22 = arith.constant 22 : index
    %22 = memref.load %arg3[%c22] : memref<81xf32, #tpu.memory_space<smem>>
    %c23 = arith.constant 23 : index
    %23 = memref.load %arg3[%c23] : memref<81xf32, #tpu.memory_space<smem>>
    %c24 = arith.constant 24 : index
    %24 = memref.load %arg3[%c24] : memref<81xf32, #tpu.memory_space<smem>>
    %c25 = arith.constant 25 : index
    %25 = memref.load %arg3[%c25] : memref<81xf32, #tpu.memory_space<smem>>
    %c26 = arith.constant 26 : index
    %26 = memref.load %arg3[%c26] : memref<81xf32, #tpu.memory_space<smem>>
    %c27 = arith.constant 27 : index
    %27 = memref.load %arg3[%c27] : memref<81xf32, #tpu.memory_space<smem>>
    %c28 = arith.constant 28 : index
    %28 = memref.load %arg3[%c28] : memref<81xf32, #tpu.memory_space<smem>>
    %c29 = arith.constant 29 : index
    %29 = memref.load %arg3[%c29] : memref<81xf32, #tpu.memory_space<smem>>
    %c30 = arith.constant 30 : index
    %30 = memref.load %arg3[%c30] : memref<81xf32, #tpu.memory_space<smem>>
    %c31 = arith.constant 31 : index
    %31 = memref.load %arg3[%c31] : memref<81xf32, #tpu.memory_space<smem>>
    %c32 = arith.constant 32 : index
    %32 = memref.load %arg3[%c32] : memref<81xf32, #tpu.memory_space<smem>>
    %c33 = arith.constant 33 : index
    %33 = memref.load %arg3[%c33] : memref<81xf32, #tpu.memory_space<smem>>
    %c34 = arith.constant 34 : index
    %34 = memref.load %arg3[%c34] : memref<81xf32, #tpu.memory_space<smem>>
    %c35 = arith.constant 35 : index
    %35 = memref.load %arg3[%c35] : memref<81xf32, #tpu.memory_space<smem>>
    %c36 = arith.constant 36 : index
    %36 = memref.load %arg3[%c36] : memref<81xf32, #tpu.memory_space<smem>>
    %c37 = arith.constant 37 : index
    %37 = memref.load %arg3[%c37] : memref<81xf32, #tpu.memory_space<smem>>
    %c38 = arith.constant 38 : index
    %38 = memref.load %arg3[%c38] : memref<81xf32, #tpu.memory_space<smem>>
    %c39 = arith.constant 39 : index
    %39 = memref.load %arg3[%c39] : memref<81xf32, #tpu.memory_space<smem>>
    %c40 = arith.constant 40 : index
    %40 = memref.load %arg3[%c40] : memref<81xf32, #tpu.memory_space<smem>>
    %c41 = arith.constant 41 : index
    %41 = memref.load %arg3[%c41] : memref<81xf32, #tpu.memory_space<smem>>
    %c42 = arith.constant 42 : index
    %42 = memref.load %arg3[%c42] : memref<81xf32, #tpu.memory_space<smem>>
    %c43 = arith.constant 43 : index
    %43 = memref.load %arg3[%c43] : memref<81xf32, #tpu.memory_space<smem>>
    %c44 = arith.constant 44 : index
    %44 = memref.load %arg3[%c44] : memref<81xf32, #tpu.memory_space<smem>>
    %c45 = arith.constant 45 : index
    %45 = memref.load %arg3[%c45] : memref<81xf32, #tpu.memory_space<smem>>
    %c46 = arith.constant 46 : index
    %46 = memref.load %arg3[%c46] : memref<81xf32, #tpu.memory_space<smem>>
    %c47 = arith.constant 47 : index
    %47 = memref.load %arg3[%c47] : memref<81xf32, #tpu.memory_space<smem>>
    %c48 = arith.constant 48 : index
    %48 = memref.load %arg3[%c48] : memref<81xf32, #tpu.memory_space<smem>>
    %c49 = arith.constant 49 : index
    %49 = memref.load %arg3[%c49] : memref<81xf32, #tpu.memory_space<smem>>
    %c50 = arith.constant 50 : index
    %50 = memref.load %arg3[%c50] : memref<81xf32, #tpu.memory_space<smem>>
    %c51 = arith.constant 51 : index
    %51 = memref.load %arg3[%c51] : memref<81xf32, #tpu.memory_space<smem>>
    %c52 = arith.constant 52 : index
    %52 = memref.load %arg3[%c52] : memref<81xf32, #tpu.memory_space<smem>>
    %c53 = arith.constant 53 : index
    %53 = memref.load %arg3[%c53] : memref<81xf32, #tpu.memory_space<smem>>
    %c54 = arith.constant 54 : index
    %54 = memref.load %arg3[%c54] : memref<81xf32, #tpu.memory_space<smem>>
    %c55 = arith.constant 55 : index
    %55 = memref.load %arg3[%c55] : memref<81xf32, #tpu.memory_space<smem>>
    %c56 = arith.constant 56 : index
    %56 = memref.load %arg3[%c56] : memref<81xf32, #tpu.memory_space<smem>>
    %c57 = arith.constant 57 : index
    %57 = memref.load %arg3[%c57] : memref<81xf32, #tpu.memory_space<smem>>
    %c58 = arith.constant 58 : index
    %58 = memref.load %arg3[%c58] : memref<81xf32, #tpu.memory_space<smem>>
    %c59 = arith.constant 59 : index
    %59 = memref.load %arg3[%c59] : memref<81xf32, #tpu.memory_space<smem>>
    %c60 = arith.constant 60 : index
    %60 = memref.load %arg3[%c60] : memref<81xf32, #tpu.memory_space<smem>>
    %c61 = arith.constant 61 : index
    %61 = memref.load %arg3[%c61] : memref<81xf32, #tpu.memory_space<smem>>
    %c62 = arith.constant 62 : index
    %62 = memref.load %arg3[%c62] : memref<81xf32, #tpu.memory_space<smem>>
    %c63 = arith.constant 63 : index
    %63 = memref.load %arg3[%c63] : memref<81xf32, #tpu.memory_space<smem>>
    %c64 = arith.constant 64 : index
    %64 = memref.load %arg3[%c64] : memref<81xf32, #tpu.memory_space<smem>>
    %c65 = arith.constant 65 : index
    %65 = memref.load %arg3[%c65] : memref<81xf32, #tpu.memory_space<smem>>
    %c66 = arith.constant 66 : index
    %66 = memref.load %arg3[%c66] : memref<81xf32, #tpu.memory_space<smem>>
    %c67 = arith.constant 67 : index
    %67 = memref.load %arg3[%c67] : memref<81xf32, #tpu.memory_space<smem>>
    %c68 = arith.constant 68 : index
    %68 = memref.load %arg3[%c68] : memref<81xf32, #tpu.memory_space<smem>>
    %c69 = arith.constant 69 : index
    %69 = memref.load %arg3[%c69] : memref<81xf32, #tpu.memory_space<smem>>
    %c70 = arith.constant 70 : index
    %70 = memref.load %arg3[%c70] : memref<81xf32, #tpu.memory_space<smem>>
    %c71 = arith.constant 71 : index
    %71 = memref.load %arg3[%c71] : memref<81xf32, #tpu.memory_space<smem>>
    %c72 = arith.constant 72 : index
    %72 = memref.load %arg3[%c72] : memref<81xf32, #tpu.memory_space<smem>>
    %c73 = arith.constant 73 : index
    %73 = memref.load %arg3[%c73] : memref<81xf32, #tpu.memory_space<smem>>
    %c74 = arith.constant 74 : index
    %74 = memref.load %arg3[%c74] : memref<81xf32, #tpu.memory_space<smem>>
    %c75 = arith.constant 75 : index
    %75 = memref.load %arg3[%c75] : memref<81xf32, #tpu.memory_space<smem>>
    %c76 = arith.constant 76 : index
    %76 = memref.load %arg3[%c76] : memref<81xf32, #tpu.memory_space<smem>>
    %c77 = arith.constant 77 : index
    %77 = memref.load %arg3[%c77] : memref<81xf32, #tpu.memory_space<smem>>
    %c78 = arith.constant 78 : index
    %78 = memref.load %arg3[%c78] : memref<81xf32, #tpu.memory_space<smem>>
    %c79 = arith.constant 79 : index
    %79 = memref.load %arg3[%c79] : memref<81xf32, #tpu.memory_space<smem>>
    %c80 = arith.constant 80 : index
    %80 = memref.load %arg3[%c80] : memref<81xf32, #tpu.memory_space<smem>>
    %c0_0 = arith.constant 0 : index
    %81 = memref.load %arg4[%c0_0] : memref<3xf32, #tpu.memory_space<smem>>
    %c1_1 = arith.constant 1 : index
    %82 = memref.load %arg4[%c1_1] : memref<3xf32, #tpu.memory_space<smem>>
    %c2_2 = arith.constant 2 : index
    %83 = memref.load %arg4[%c2_2] : memref<3xf32, #tpu.memory_space<smem>>
    %c0_3 = arith.constant 0 : index
    %84 = memref.load %arg5[%c0_3] : memref<81xf32, #tpu.memory_space<smem>>
    %c1_4 = arith.constant 1 : index
    %85 = memref.load %arg5[%c1_4] : memref<81xf32, #tpu.memory_space<smem>>
    %c2_5 = arith.constant 2 : index
    %86 = memref.load %arg5[%c2_5] : memref<81xf32, #tpu.memory_space<smem>>
    %c3_6 = arith.constant 3 : index
    %87 = memref.load %arg5[%c3_6] : memref<81xf32, #tpu.memory_space<smem>>
    %c4_7 = arith.constant 4 : index
    %88 = memref.load %arg5[%c4_7] : memref<81xf32, #tpu.memory_space<smem>>
    %c5_8 = arith.constant 5 : index
    %89 = memref.load %arg5[%c5_8] : memref<81xf32, #tpu.memory_space<smem>>
    %c6_9 = arith.constant 6 : index
    %90 = memref.load %arg5[%c6_9] : memref<81xf32, #tpu.memory_space<smem>>
    %c7_10 = arith.constant 7 : index
    %91 = memref.load %arg5[%c7_10] : memref<81xf32, #tpu.memory_space<smem>>
    %c8_11 = arith.constant 8 : index
    %92 = memref.load %arg5[%c8_11] : memref<81xf32, #tpu.memory_space<smem>>
    %c9_12 = arith.constant 9 : index
    %93 = memref.load %arg5[%c9_12] : memref<81xf32, #tpu.memory_space<smem>>
    %c10_13 = arith.constant 10 : index
    %94 = memref.load %arg5[%c10_13] : memref<81xf32, #tpu.memory_space<smem>>
    %c11_14 = arith.constant 11 : index
    %95 = memref.load %arg5[%c11_14] : memref<81xf32, #tpu.memory_space<smem>>
    %c12_15 = arith.constant 12 : index
    %96 = memref.load %arg5[%c12_15] : memref<81xf32, #tpu.memory_space<smem>>
    %c13_16 = arith.constant 13 : index
    %97 = memref.load %arg5[%c13_16] : memref<81xf32, #tpu.memory_space<smem>>
    %c14_17 = arith.constant 14 : index
    %98 = memref.load %arg5[%c14_17] : memref<81xf32, #tpu.memory_space<smem>>
    %c15_18 = arith.constant 15 : index
    %99 = memref.load %arg5[%c15_18] : memref<81xf32, #tpu.memory_space<smem>>
    %c16_19 = arith.constant 16 : index
    %100 = memref.load %arg5[%c16_19] : memref<81xf32, #tpu.memory_space<smem>>
    %c17_20 = arith.constant 17 : index
    %101 = memref.load %arg5[%c17_20] : memref<81xf32, #tpu.memory_space<smem>>
    %c18_21 = arith.constant 18 : index
    %102 = memref.load %arg5[%c18_21] : memref<81xf32, #tpu.memory_space<smem>>
    %c19_22 = arith.constant 19 : index
    %103 = memref.load %arg5[%c19_22] : memref<81xf32, #tpu.memory_space<smem>>
    %c20_23 = arith.constant 20 : index
    %104 = memref.load %arg5[%c20_23] : memref<81xf32, #tpu.memory_space<smem>>
    %c21_24 = arith.constant 21 : index
    %105 = memref.load %arg5[%c21_24] : memref<81xf32, #tpu.memory_space<smem>>
    %c22_25 = arith.constant 22 : index
    %106 = memref.load %arg5[%c22_25] : memref<81xf32, #tpu.memory_space<smem>>
    %c23_26 = arith.constant 23 : index
    %107 = memref.load %arg5[%c23_26] : memref<81xf32, #tpu.memory_space<smem>>
    %c24_27 = arith.constant 24 : index
    %108 = memref.load %arg5[%c24_27] : memref<81xf32, #tpu.memory_space<smem>>
    %c25_28 = arith.constant 25 : index
    %109 = memref.load %arg5[%c25_28] : memref<81xf32, #tpu.memory_space<smem>>
    %c26_29 = arith.constant 26 : index
    %110 = memref.load %arg5[%c26_29] : memref<81xf32, #tpu.memory_space<smem>>
    %c27_30 = arith.constant 27 : index
    %111 = memref.load %arg5[%c27_30] : memref<81xf32, #tpu.memory_space<smem>>
    %c28_31 = arith.constant 28 : index
    %112 = memref.load %arg5[%c28_31] : memref<81xf32, #tpu.memory_space<smem>>
    %c29_32 = arith.constant 29 : index
    %113 = memref.load %arg5[%c29_32] : memref<81xf32, #tpu.memory_space<smem>>
    %c30_33 = arith.constant 30 : index
    %114 = memref.load %arg5[%c30_33] : memref<81xf32, #tpu.memory_space<smem>>
    %c31_34 = arith.constant 31 : index
    %115 = memref.load %arg5[%c31_34] : memref<81xf32, #tpu.memory_space<smem>>
    %c32_35 = arith.constant 32 : index
    %116 = memref.load %arg5[%c32_35] : memref<81xf32, #tpu.memory_space<smem>>
    %c33_36 = arith.constant 33 : index
    %117 = memref.load %arg5[%c33_36] : memref<81xf32, #tpu.memory_space<smem>>
    %c34_37 = arith.constant 34 : index
    %118 = memref.load %arg5[%c34_37] : memref<81xf32, #tpu.memory_space<smem>>
    %c35_38 = arith.constant 35 : index
    %119 = memref.load %arg5[%c35_38] : memref<81xf32, #tpu.memory_space<smem>>
    %c36_39 = arith.constant 36 : index
    %120 = memref.load %arg5[%c36_39] : memref<81xf32, #tpu.memory_space<smem>>
    %c37_40 = arith.constant 37 : index
    %121 = memref.load %arg5[%c37_40] : memref<81xf32, #tpu.memory_space<smem>>
    %c38_41 = arith.constant 38 : index
    %122 = memref.load %arg5[%c38_41] : memref<81xf32, #tpu.memory_space<smem>>
    %c39_42 = arith.constant 39 : index
    %123 = memref.load %arg5[%c39_42] : memref<81xf32, #tpu.memory_space<smem>>
    %c40_43 = arith.constant 40 : index
    %124 = memref.load %arg5[%c40_43] : memref<81xf32, #tpu.memory_space<smem>>
    %c41_44 = arith.constant 41 : index
    %125 = memref.load %arg5[%c41_44] : memref<81xf32, #tpu.memory_space<smem>>
    %c42_45 = arith.constant 42 : index
    %126 = memref.load %arg5[%c42_45] : memref<81xf32, #tpu.memory_space<smem>>
    %c43_46 = arith.constant 43 : index
    %127 = memref.load %arg5[%c43_46] : memref<81xf32, #tpu.memory_space<smem>>
    %c44_47 = arith.constant 44 : index
    %128 = memref.load %arg5[%c44_47] : memref<81xf32, #tpu.memory_space<smem>>
    %c45_48 = arith.constant 45 : index
    %129 = memref.load %arg5[%c45_48] : memref<81xf32, #tpu.memory_space<smem>>
    %c46_49 = arith.constant 46 : index
    %130 = memref.load %arg5[%c46_49] : memref<81xf32, #tpu.memory_space<smem>>
    %c47_50 = arith.constant 47 : index
    %131 = memref.load %arg5[%c47_50] : memref<81xf32, #tpu.memory_space<smem>>
    %c48_51 = arith.constant 48 : index
    %132 = memref.load %arg5[%c48_51] : memref<81xf32, #tpu.memory_space<smem>>
    %c49_52 = arith.constant 49 : index
    %133 = memref.load %arg5[%c49_52] : memref<81xf32, #tpu.memory_space<smem>>
    %c50_53 = arith.constant 50 : index
    %134 = memref.load %arg5[%c50_53] : memref<81xf32, #tpu.memory_space<smem>>
    %c51_54 = arith.constant 51 : index
    %135 = memref.load %arg5[%c51_54] : memref<81xf32, #tpu.memory_space<smem>>
    %c52_55 = arith.constant 52 : index
    %136 = memref.load %arg5[%c52_55] : memref<81xf32, #tpu.memory_space<smem>>
    %c53_56 = arith.constant 53 : index
    %137 = memref.load %arg5[%c53_56] : memref<81xf32, #tpu.memory_space<smem>>
    %c54_57 = arith.constant 54 : index
    %138 = memref.load %arg5[%c54_57] : memref<81xf32, #tpu.memory_space<smem>>
    %c55_58 = arith.constant 55 : index
    %139 = memref.load %arg5[%c55_58] : memref<81xf32, #tpu.memory_space<smem>>
    %c56_59 = arith.constant 56 : index
    %140 = memref.load %arg5[%c56_59] : memref<81xf32, #tpu.memory_space<smem>>
    %c57_60 = arith.constant 57 : index
    %141 = memref.load %arg5[%c57_60] : memref<81xf32, #tpu.memory_space<smem>>
    %c58_61 = arith.constant 58 : index
    %142 = memref.load %arg5[%c58_61] : memref<81xf32, #tpu.memory_space<smem>>
    %c59_62 = arith.constant 59 : index
    %143 = memref.load %arg5[%c59_62] : memref<81xf32, #tpu.memory_space<smem>>
    %c60_63 = arith.constant 60 : index
    %144 = memref.load %arg5[%c60_63] : memref<81xf32, #tpu.memory_space<smem>>
    %c61_64 = arith.constant 61 : index
    %145 = memref.load %arg5[%c61_64] : memref<81xf32, #tpu.memory_space<smem>>
    %c62_65 = arith.constant 62 : index
    %146 = memref.load %arg5[%c62_65] : memref<81xf32, #tpu.memory_space<smem>>
    %c63_66 = arith.constant 63 : index
    %147 = memref.load %arg5[%c63_66] : memref<81xf32, #tpu.memory_space<smem>>
    %c64_67 = arith.constant 64 : index
    %148 = memref.load %arg5[%c64_67] : memref<81xf32, #tpu.memory_space<smem>>
    %c65_68 = arith.constant 65 : index
    %149 = memref.load %arg5[%c65_68] : memref<81xf32, #tpu.memory_space<smem>>
    %c66_69 = arith.constant 66 : index
    %150 = memref.load %arg5[%c66_69] : memref<81xf32, #tpu.memory_space<smem>>
    %c67_70 = arith.constant 67 : index
    %151 = memref.load %arg5[%c67_70] : memref<81xf32, #tpu.memory_space<smem>>
    %c68_71 = arith.constant 68 : index
    %152 = memref.load %arg5[%c68_71] : memref<81xf32, #tpu.memory_space<smem>>
    %c69_72 = arith.constant 69 : index
    %153 = memref.load %arg5[%c69_72] : memref<81xf32, #tpu.memory_space<smem>>
    %c70_73 = arith.constant 70 : index
    %154 = memref.load %arg5[%c70_73] : memref<81xf32, #tpu.memory_space<smem>>
    %c71_74 = arith.constant 71 : index
    %155 = memref.load %arg5[%c71_74] : memref<81xf32, #tpu.memory_space<smem>>
    %c72_75 = arith.constant 72 : index
    %156 = memref.load %arg5[%c72_75] : memref<81xf32, #tpu.memory_space<smem>>
    %c73_76 = arith.constant 73 : index
    %157 = memref.load %arg5[%c73_76] : memref<81xf32, #tpu.memory_space<smem>>
    %c74_77 = arith.constant 74 : index
    %158 = memref.load %arg5[%c74_77] : memref<81xf32, #tpu.memory_space<smem>>
    %c75_78 = arith.constant 75 : index
    %159 = memref.load %arg5[%c75_78] : memref<81xf32, #tpu.memory_space<smem>>
    %c76_79 = arith.constant 76 : index
    %160 = memref.load %arg5[%c76_79] : memref<81xf32, #tpu.memory_space<smem>>
    %c77_80 = arith.constant 77 : index
    %161 = memref.load %arg5[%c77_80] : memref<81xf32, #tpu.memory_space<smem>>
    %c78_81 = arith.constant 78 : index
    %162 = memref.load %arg5[%c78_81] : memref<81xf32, #tpu.memory_space<smem>>
    %c79_82 = arith.constant 79 : index
    %163 = memref.load %arg5[%c79_82] : memref<81xf32, #tpu.memory_space<smem>>
    %c80_83 = arith.constant 80 : index
    %164 = memref.load %arg5[%c80_83] : memref<81xf32, #tpu.memory_space<smem>>
    %c0_84 = arith.constant 0 : index
    %165 = memref.load %arg6[%c0_84] : memref<3xf32, #tpu.memory_space<smem>>
    %c1_85 = arith.constant 1 : index
    %166 = memref.load %arg6[%c1_85] : memref<3xf32, #tpu.memory_space<smem>>
    %c2_86 = arith.constant 2 : index
    %167 = memref.load %arg6[%c2_86] : memref<3xf32, #tpu.memory_space<smem>>
    %c0_87 = arith.constant 0 : index
    %c0_88 = arith.constant 0 : index
    %c0_89 = arith.constant 0 : index
    %c0_90 = arith.constant 0 : index
    %168 = vector.load %arg1[%c0_87, %c0_88, %c0_89, %c0_90] : memref<1x3x16x16xf32, #tpu.memory_space<vmem>>, vector<1x1x16x16xf32>
    %169 = vector.shape_cast %168 : vector<1x1x16x16xf32> to vector<16x16xf32>
    %c0_91 = arith.constant 0 : index
    %c1_92 = arith.constant 1 : index
    %c0_93 = arith.constant 0 : index
    %c0_94 = arith.constant 0 : index
    %170 = vector.load %arg1[%c0_91, %c1_92, %c0_93, %c0_94] : memref<1x3x16x16xf32, #tpu.memory_space<vmem>>, vector<1x1x16x16xf32>
    %171 = vector.shape_cast %170 : vector<1x1x16x16xf32> to vector<16x16xf32>
    %c0_95 = arith.constant 0 : index
    %c2_96 = arith.constant 2 : index
    %c0_97 = arith.constant 0 : index
    %c0_98 = arith.constant 0 : index
    %172 = vector.load %arg1[%c0_95, %c2_96, %c0_97, %c0_98] : memref<1x3x16x16xf32, #tpu.memory_space<vmem>>, vector<1x1x16x16xf32>
    %173 = vector.shape_cast %172 : vector<1x1x16x16xf32> to vector<16x16xf32>
    %cst = arith.constant 0.000000e+00 : f32
    %174 = vector.broadcast %cst : f32 to vector<1x16xf32>
    %175 = vector.extract_strided_slice %169 {offsets = [0, 0], sizes = [15, 16], strides = [1, 1]} : vector<16x16xf32> to vector<15x16xf32>
    %176 = tpu.concatenate %174, %175 in 0 : vector<1x16xf32>, vector<15x16xf32> -> vector<16x16xf32>
    %cst_99 = arith.constant 0.000000e+00 : f32
    %177 = vector.broadcast %cst_99 : f32 to vector<16x1xf32>
    %178 = vector.extract_strided_slice %176 {offsets = [0, 0], sizes = [16, 15], strides = [1, 1]} : vector<16x16xf32> to vector<16x15xf32>
    %179 = tpu.concatenate %177, %178 in 1 : vector<16x1xf32>, vector<16x15xf32> -> vector<16x16xf32>
    %cst_100 = arith.constant 0.000000e+00 : f32
    %180 = vector.broadcast %cst_100 : f32 to vector<1x16xf32>
    %181 = vector.extract_strided_slice %169 {offsets = [0, 0], sizes = [15, 16], strides = [1, 1]} : vector<16x16xf32> to vector<15x16xf32>
    %182 = tpu.concatenate %180, %181 in 0 : vector<1x16xf32>, vector<15x16xf32> -> vector<16x16xf32>
    %cst_101 = arith.constant 0.000000e+00 : f32
    %183 = vector.broadcast %cst_101 : f32 to vector<1x16xf32>
    %184 = vector.extract_strided_slice %169 {offsets = [0, 0], sizes = [15, 16], strides = [1, 1]} : vector<16x16xf32> to vector<15x16xf32>
    %185 = tpu.concatenate %183, %184 in 0 : vector<1x16xf32>, vector<15x16xf32> -> vector<16x16xf32>
    %186 = vector.extract_strided_slice %185 {offsets = [0, 1], sizes = [16, 15], strides = [1, 1]} : vector<16x16xf32> to vector<16x15xf32>
    %cst_102 = arith.constant 0.000000e+00 : f32
    %187 = vector.broadcast %cst_102 : f32 to vector<16x1xf32>
    %188 = tpu.concatenate %186, %187 in 1 : vector<16x15xf32>, vector<16x1xf32> -> vector<16x16xf32>
    %cst_103 = arith.constant 0.000000e+00 : f32
    %189 = vector.broadcast %cst_103 : f32 to vector<16x1xf32>
    %190 = vector.extract_strided_slice %169 {offsets = [0, 0], sizes = [16, 15], strides = [1, 1]} : vector<16x16xf32> to vector<16x15xf32>
    %191 = tpu.concatenate %189, %190 in 1 : vector<16x1xf32>, vector<16x15xf32> -> vector<16x16xf32>
    %192 = vector.extract_strided_slice %169 {offsets = [0, 1], sizes = [16, 15], strides = [1, 1]} : vector<16x16xf32> to vector<16x15xf32>
    %cst_104 = arith.constant 0.000000e+00 : f32
    %193 = vector.broadcast %cst_104 : f32 to vector<16x1xf32>
    %194 = tpu.concatenate %192, %193 in 1 : vector<16x15xf32>, vector<16x1xf32> -> vector<16x16xf32>
    %195 = vector.extract_strided_slice %169 {offsets = [1, 0], sizes = [15, 16], strides = [1, 1]} : vector<16x16xf32> to vector<15x16xf32>
    %cst_105 = arith.constant 0.000000e+00 : f32
    %196 = vector.broadcast %cst_105 : f32 to vector<1x16xf32>
    %197 = tpu.concatenate %195, %196 in 0 : vector<15x16xf32>, vector<1x16xf32> -> vector<16x16xf32>
    %cst_106 = arith.constant 0.000000e+00 : f32
    %198 = vector.broadcast %cst_106 : f32 to vector<16x1xf32>
    %199 = vector.extract_strided_slice %197 {offsets = [0, 0], sizes = [16, 15], strides = [1, 1]} : vector<16x16xf32> to vector<16x15xf32>
    %200 = tpu.concatenate %198, %199 in 1 : vector<16x1xf32>, vector<16x15xf32> -> vector<16x16xf32>
    %201 = vector.extract_strided_slice %169 {offsets = [1, 0], sizes = [15, 16], strides = [1, 1]} : vector<16x16xf32> to vector<15x16xf32>
    %cst_107 = arith.constant 0.000000e+00 : f32
    %202 = vector.broadcast %cst_107 : f32 to vector<1x16xf32>
    %203 = tpu.concatenate %201, %202 in 0 : vector<15x16xf32>, vector<1x16xf32> -> vector<16x16xf32>
    %204 = vector.extract_strided_slice %169 {offsets = [1, 0], sizes = [15, 16], strides = [1, 1]} : vector<16x16xf32> to vector<15x16xf32>
    %cst_108 = arith.constant 0.000000e+00 : f32
    %205 = vector.broadcast %cst_108 : f32 to vector<1x16xf32>
    %206 = tpu.concatenate %204, %205 in 0 : vector<15x16xf32>, vector<1x16xf32> -> vector<16x16xf32>
    %207 = vector.extract_strided_slice %206 {offsets = [0, 1], sizes = [16, 15], strides = [1, 1]} : vector<16x16xf32> to vector<16x15xf32>
    %cst_109 = arith.constant 0.000000e+00 : f32
    %208 = vector.broadcast %cst_109 : f32 to vector<16x1xf32>
    %209 = tpu.concatenate %207, %208 in 1 : vector<16x15xf32>, vector<16x1xf32> -> vector<16x16xf32>
    %cst_110 = arith.constant 0.000000e+00 : f32
    %210 = vector.broadcast %cst_110 : f32 to vector<1x16xf32>
    %211 = vector.extract_strided_slice %171 {offsets = [0, 0], sizes = [15, 16], strides = [1, 1]} : vector<16x16xf32> to vector<15x16xf32>
    %212 = tpu.concatenate %210, %211 in 0 : vector<1x16xf32>, vector<15x16xf32> -> vector<16x16xf32>
    %cst_111 = arith.constant 0.000000e+00 : f32
    %213 = vector.broadcast %cst_111 : f32 to vector<16x1xf32>
    %214 = vector.extract_strided_slice %212 {offsets = [0, 0], sizes = [16, 15], strides = [1, 1]} : vector<16x16xf32> to vector<16x15xf32>
    %215 = tpu.concatenate %213, %214 in 1 : vector<16x1xf32>, vector<16x15xf32> -> vector<16x16xf32>
    %cst_112 = arith.constant 0.000000e+00 : f32
    %216 = vector.broadcast %cst_112 : f32 to vector<1x16xf32>
    %217 = vector.extract_strided_slice %171 {offsets = [0, 0], sizes = [15, 16], strides = [1, 1]} : vector<16x16xf32> to vector<15x16xf32>
    %218 = tpu.concatenate %216, %217 in 0 : vector<1x16xf32>, vector<15x16xf32> -> vector<16x16xf32>
    %cst_113 = arith.constant 0.000000e+00 : f32
    %219 = vector.broadcast %cst_113 : f32 to vector<1x16xf32>
    %220 = vector.extract_strided_slice %171 {offsets = [0, 0], sizes = [15, 16], strides = [1, 1]} : vector<16x16xf32> to vector<15x16xf32>
    %221 = tpu.concatenate %219, %220 in 0 : vector<1x16xf32>, vector<15x16xf32> -> vector<16x16xf32>
    %222 = vector.extract_strided_slice %221 {offsets = [0, 1], sizes = [16, 15], strides = [1, 1]} : vector<16x16xf32> to vector<16x15xf32>
    %cst_114 = arith.constant 0.000000e+00 : f32
    %223 = vector.broadcast %cst_114 : f32 to vector<16x1xf32>
    %224 = tpu.concatenate %222, %223 in 1 : vector<16x15xf32>, vector<16x1xf32> -> vector<16x16xf32>
    %cst_115 = arith.constant 0.000000e+00 : f32
    %225 = vector.broadcast %cst_115 : f32 to vector<16x1xf32>
    %226 = vector.extract_strided_slice %171 {offsets = [0, 0], sizes = [16, 15], strides = [1, 1]} : vector<16x16xf32> to vector<16x15xf32>
    %227 = tpu.concatenate %225, %226 in 1 : vector<16x1xf32>, vector<16x15xf32> -> vector<16x16xf32>
    %228 = vector.extract_strided_slice %171 {offsets = [0, 1], sizes = [16, 15], strides = [1, 1]} : vector<16x16xf32> to vector<16x15xf32>
    %cst_116 = arith.constant 0.000000e+00 : f32
    %229 = vector.broadcast %cst_116 : f32 to vector<16x1xf32>
    %230 = tpu.concatenate %228, %229 in 1 : vector<16x15xf32>, vector<16x1xf32> -> vector<16x16xf32>
    %231 = vector.extract_strided_slice %171 {offsets = [1, 0], sizes = [15, 16], strides = [1, 1]} : vector<16x16xf32> to vector<15x16xf32>
    %cst_117 = arith.constant 0.000000e+00 : f32
    %232 = vector.broadcast %cst_117 : f32 to vector<1x16xf32>
    %233 = tpu.concatenate %231, %232 in 0 : vector<15x16xf32>, vector<1x16xf32> -> vector<16x16xf32>
    %cst_118 = arith.constant 0.000000e+00 : f32
    %234 = vector.broadcast %cst_118 : f32 to vector<16x1xf32>
    %235 = vector.extract_strided_slice %233 {offsets = [0, 0], sizes = [16, 15], strides = [1, 1]} : vector<16x16xf32> to vector<16x15xf32>
    %236 = tpu.concatenate %234, %235 in 1 : vector<16x1xf32>, vector<16x15xf32> -> vector<16x16xf32>
    %237 = vector.extract_strided_slice %171 {offsets = [1, 0], sizes = [15, 16], strides = [1, 1]} : vector<16x16xf32> to vector<15x16xf32>
    %cst_119 = arith.constant 0.000000e+00 : f32
    %238 = vector.broadcast %cst_119 : f32 to vector<1x16xf32>
    %239 = tpu.concatenate %237, %238 in 0 : vector<15x16xf32>, vector<1x16xf32> -> vector<16x16xf32>
    %240 = vector.extract_strided_slice %171 {offsets = [1, 0], sizes = [15, 16], strides = [1, 1]} : vector<16x16xf32> to vector<15x16xf32>
    %cst_120 = arith.constant 0.000000e+00 : f32
    %241 = vector.broadcast %cst_120 : f32 to vector<1x16xf32>
    %242 = tpu.concatenate %240, %241 in 0 : vector<15x16xf32>, vector<1x16xf32> -> vector<16x16xf32>
    %243 = vector.extract_strided_slice %242 {offsets = [0, 1], sizes = [16, 15], strides = [1, 1]} : vector<16x16xf32> to vector<16x15xf32>
    %cst_121 = arith.constant 0.000000e+00 : f32
    %244 = vector.broadcast %cst_121 : f32 to vector<16x1xf32>
    %245 = tpu.concatenate %243, %244 in 1 : vector<16x15xf32>, vector<16x1xf32> -> vector<16x16xf32>
    %cst_122 = arith.constant 0.000000e+00 : f32
    %246 = vector.broadcast %cst_122 : f32 to vector<1x16xf32>
    %247 = vector.extract_strided_slice %173 {offsets = [0, 0], sizes = [15, 16], strides = [1, 1]} : vector<16x16xf32> to vector<15x16xf32>
    %248 = tpu.concatenate %246, %247 in 0 : vector<1x16xf32>, vector<15x16xf32> -> vector<16x16xf32>
    %cst_123 = arith.constant 0.000000e+00 : f32
    %249 = vector.broadcast %cst_123 : f32 to vector<16x1xf32>
    %250 = vector.extract_strided_slice %248 {offsets = [0, 0], sizes = [16, 15], strides = [1, 1]} : vector<16x16xf32> to vector<16x15xf32>
    %251 = tpu.concatenate %249, %250 in 1 : vector<16x1xf32>, vector<16x15xf32> -> vector<16x16xf32>
    %cst_124 = arith.constant 0.000000e+00 : f32
    %252 = vector.broadcast %cst_124 : f32 to vector<1x16xf32>
    %253 = vector.extract_strided_slice %173 {offsets = [0, 0], sizes = [15, 16], strides = [1, 1]} : vector<16x16xf32> to vector<15x16xf32>
    %254 = tpu.concatenate %252, %253 in 0 : vector<1x16xf32>, vector<15x16xf32> -> vector<16x16xf32>
    %cst_125 = arith.constant 0.000000e+00 : f32
    %255 = vector.broadcast %cst_125 : f32 to vector<1x16xf32>
    %256 = vector.extract_strided_slice %173 {offsets = [0, 0], sizes = [15, 16], strides = [1, 1]} : vector<16x16xf32> to vector<15x16xf32>
    %257 = tpu.concatenate %255, %256 in 0 : vector<1x16xf32>, vector<15x16xf32> -> vector<16x16xf32>
    %258 = vector.extract_strided_slice %257 {offsets = [0, 1], sizes = [16, 15], strides = [1, 1]} : vector<16x16xf32> to vector<16x15xf32>
    %cst_126 = arith.constant 0.000000e+00 : f32
    %259 = vector.broadcast %cst_126 : f32 to vector<16x1xf32>
    %260 = tpu.concatenate %258, %259 in 1 : vector<16x15xf32>, vector<16x1xf32> -> vector<16x16xf32>
    %cst_127 = arith.constant 0.000000e+00 : f32
    %261 = vector.broadcast %cst_127 : f32 to vector<16x1xf32>
    %262 = vector.extract_strided_slice %173 {offsets = [0, 0], sizes = [16, 15], strides = [1, 1]} : vector<16x16xf32> to vector<16x15xf32>
    %263 = tpu.concatenate %261, %262 in 1 : vector<16x1xf32>, vector<16x15xf32> -> vector<16x16xf32>
    %264 = vector.extract_strided_slice %173 {offsets = [0, 1], sizes = [16, 15], strides = [1, 1]} : vector<16x16xf32> to vector<16x15xf32>
    %cst_128 = arith.constant 0.000000e+00 : f32
    %265 = vector.broadcast %cst_128 : f32 to vector<16x1xf32>
    %266 = tpu.concatenate %264, %265 in 1 : vector<16x15xf32>, vector<16x1xf32> -> vector<16x16xf32>
    %267 = vector.extract_strided_slice %173 {offsets = [1, 0], sizes = [15, 16], strides = [1, 1]} : vector<16x16xf32> to vector<15x16xf32>
    %cst_129 = arith.constant 0.000000e+00 : f32
    %268 = vector.broadcast %cst_129 : f32 to vector<1x16xf32>
    %269 = tpu.concatenate %267, %268 in 0 : vector<15x16xf32>, vector<1x16xf32> -> vector<16x16xf32>
    %cst_130 = arith.constant 0.000000e+00 : f32
    %270 = vector.broadcast %cst_130 : f32 to vector<16x1xf32>
    %271 = vector.extract_strided_slice %269 {offsets = [0, 0], sizes = [16, 15], strides = [1, 1]} : vector<16x16xf32> to vector<16x15xf32>
    %272 = tpu.concatenate %270, %271 in 1 : vector<16x1xf32>, vector<16x15xf32> -> vector<16x16xf32>
    %273 = vector.extract_strided_slice %173 {offsets = [1, 0], sizes = [15, 16], strides = [1, 1]} : vector<16x16xf32> to vector<15x16xf32>
    %cst_131 = arith.constant 0.000000e+00 : f32
    %274 = vector.broadcast %cst_131 : f32 to vector<1x16xf32>
    %275 = tpu.concatenate %273, %274 in 0 : vector<15x16xf32>, vector<1x16xf32> -> vector<16x16xf32>
    %276 = vector.extract_strided_slice %173 {offsets = [1, 0], sizes = [15, 16], strides = [1, 1]} : vector<16x16xf32> to vector<15x16xf32>
    %cst_132 = arith.constant 0.000000e+00 : f32
    %277 = vector.broadcast %cst_132 : f32 to vector<1x16xf32>
    %278 = tpu.concatenate %276, %277 in 0 : vector<15x16xf32>, vector<1x16xf32> -> vector<16x16xf32>
    %279 = vector.extract_strided_slice %278 {offsets = [0, 1], sizes = [16, 15], strides = [1, 1]} : vector<16x16xf32> to vector<16x15xf32>
    %cst_133 = arith.constant 0.000000e+00 : f32
    %280 = vector.broadcast %cst_133 : f32 to vector<16x1xf32>
    %281 = tpu.concatenate %279, %280 in 1 : vector<16x15xf32>, vector<16x1xf32> -> vector<16x16xf32>
    %282 = vector.broadcast %81 : f32 to vector<16x16xf32>
    %283 = vector.broadcast %0 : f32 to vector<16x16xf32>
    %284 = arith.mulf %283, %179 : vector<16x16xf32>
    %285 = arith.addf %282, %284 : vector<16x16xf32>
    %286 = vector.broadcast %3 : f32 to vector<16x16xf32>
    %287 = arith.mulf %286, %215 : vector<16x16xf32>
    %288 = arith.addf %285, %287 : vector<16x16xf32>
    %289 = vector.broadcast %6 : f32 to vector<16x16xf32>
    %290 = arith.mulf %289, %251 : vector<16x16xf32>
    %291 = arith.addf %288, %290 : vector<16x16xf32>
    %292 = vector.broadcast %9 : f32 to vector<16x16xf32>
    %293 = arith.mulf %292, %182 : vector<16x16xf32>
    %294 = arith.addf %291, %293 : vector<16x16xf32>
    %295 = vector.broadcast %12 : f32 to vector<16x16xf32>
    %296 = arith.mulf %295, %218 : vector<16x16xf32>
    %297 = arith.addf %294, %296 : vector<16x16xf32>
    %298 = vector.broadcast %15 : f32 to vector<16x16xf32>
    %299 = arith.mulf %298, %254 : vector<16x16xf32>
    %300 = arith.addf %297, %299 : vector<16x16xf32>
    %301 = vector.broadcast %18 : f32 to vector<16x16xf32>
    %302 = arith.mulf %301, %188 : vector<16x16xf32>
    %303 = arith.addf %300, %302 : vector<16x16xf32>
    %304 = vector.broadcast %21 : f32 to vector<16x16xf32>
    %305 = arith.mulf %304, %224 : vector<16x16xf32>
    %306 = arith.addf %303, %305 : vector<16x16xf32>
    %307 = vector.broadcast %24 : f32 to vector<16x16xf32>
    %308 = arith.mulf %307, %260 : vector<16x16xf32>
    %309 = arith.addf %306, %308 : vector<16x16xf32>
    %310 = vector.broadcast %27 : f32 to vector<16x16xf32>
    %311 = arith.mulf %310, %191 : vector<16x16xf32>
    %312 = arith.addf %309, %311 : vector<16x16xf32>
    %313 = vector.broadcast %30 : f32 to vector<16x16xf32>
    %314 = arith.mulf %313, %227 : vector<16x16xf32>
    %315 = arith.addf %312, %314 : vector<16x16xf32>
    %316 = vector.broadcast %33 : f32 to vector<16x16xf32>
    %317 = arith.mulf %316, %263 : vector<16x16xf32>
    %318 = arith.addf %315, %317 : vector<16x16xf32>
    %319 = vector.broadcast %36 : f32 to vector<16x16xf32>
    %320 = arith.mulf %319, %169 : vector<16x16xf32>
    %321 = arith.addf %318, %320 : vector<16x16xf32>
    %322 = vector.broadcast %39 : f32 to vector<16x16xf32>
    %323 = arith.mulf %322, %171 : vector<16x16xf32>
    %324 = arith.addf %321, %323 : vector<16x16xf32>
    %325 = vector.broadcast %42 : f32 to vector<16x16xf32>
    %326 = arith.mulf %325, %173 : vector<16x16xf32>
    %327 = arith.addf %324, %326 : vector<16x16xf32>
    %328 = vector.broadcast %45 : f32 to vector<16x16xf32>
    %329 = arith.mulf %328, %194 : vector<16x16xf32>
    %330 = arith.addf %327, %329 : vector<16x16xf32>
    %331 = vector.broadcast %48 : f32 to vector<16x16xf32>
    %332 = arith.mulf %331, %230 : vector<16x16xf32>
    %333 = arith.addf %330, %332 : vector<16x16xf32>
    %334 = vector.broadcast %51 : f32 to vector<16x16xf32>
    %335 = arith.mulf %334, %266 : vector<16x16xf32>
    %336 = arith.addf %333, %335 : vector<16x16xf32>
    %337 = vector.broadcast %54 : f32 to vector<16x16xf32>
    %338 = arith.mulf %337, %200 : vector<16x16xf32>
    %339 = arith.addf %336, %338 : vector<16x16xf32>
    %340 = vector.broadcast %57 : f32 to vector<16x16xf32>
    %341 = arith.mulf %340, %236 : vector<16x16xf32>
    %342 = arith.addf %339, %341 : vector<16x16xf32>
    %343 = vector.broadcast %60 : f32 to vector<16x16xf32>
    %344 = arith.mulf %343, %272 : vector<16x16xf32>
    %345 = arith.addf %342, %344 : vector<16x16xf32>
    %346 = vector.broadcast %63 : f32 to vector<16x16xf32>
    %347 = arith.mulf %346, %203 : vector<16x16xf32>
    %348 = arith.addf %345, %347 : vector<16x16xf32>
    %349 = vector.broadcast %66 : f32 to vector<16x16xf32>
    %350 = arith.mulf %349, %239 : vector<16x16xf32>
    %351 = arith.addf %348, %350 : vector<16x16xf32>
    %352 = vector.broadcast %69 : f32 to vector<16x16xf32>
    %353 = arith.mulf %352, %275 : vector<16x16xf32>
    %354 = arith.addf %351, %353 : vector<16x16xf32>
    %355 = vector.broadcast %72 : f32 to vector<16x16xf32>
    %356 = arith.mulf %355, %209 : vector<16x16xf32>
    %357 = arith.addf %354, %356 : vector<16x16xf32>
    %358 = vector.broadcast %75 : f32 to vector<16x16xf32>
    %359 = arith.mulf %358, %245 : vector<16x16xf32>
    %360 = arith.addf %357, %359 : vector<16x16xf32>
    %361 = vector.broadcast %78 : f32 to vector<16x16xf32>
    %362 = arith.mulf %361, %281 : vector<16x16xf32>
    %363 = arith.addf %360, %362 : vector<16x16xf32>
    %364 = vector.broadcast %82 : f32 to vector<16x16xf32>
    %365 = vector.broadcast %1 : f32 to vector<16x16xf32>
    %366 = arith.mulf %365, %179 : vector<16x16xf32>
    %367 = arith.addf %364, %366 : vector<16x16xf32>
    %368 = vector.broadcast %4 : f32 to vector<16x16xf32>
    %369 = arith.mulf %368, %215 : vector<16x16xf32>
    %370 = arith.addf %367, %369 : vector<16x16xf32>
    %371 = vector.broadcast %7 : f32 to vector<16x16xf32>
    %372 = arith.mulf %371, %251 : vector<16x16xf32>
    %373 = arith.addf %370, %372 : vector<16x16xf32>
    %374 = vector.broadcast %10 : f32 to vector<16x16xf32>
    %375 = arith.mulf %374, %182 : vector<16x16xf32>
    %376 = arith.addf %373, %375 : vector<16x16xf32>
    %377 = vector.broadcast %13 : f32 to vector<16x16xf32>
    %378 = arith.mulf %377, %218 : vector<16x16xf32>
    %379 = arith.addf %376, %378 : vector<16x16xf32>
    %380 = vector.broadcast %16 : f32 to vector<16x16xf32>
    %381 = arith.mulf %380, %254 : vector<16x16xf32>
    %382 = arith.addf %379, %381 : vector<16x16xf32>
    %383 = vector.broadcast %19 : f32 to vector<16x16xf32>
    %384 = arith.mulf %383, %188 : vector<16x16xf32>
    %385 = arith.addf %382, %384 : vector<16x16xf32>
    %386 = vector.broadcast %22 : f32 to vector<16x16xf32>
    %387 = arith.mulf %386, %224 : vector<16x16xf32>
    %388 = arith.addf %385, %387 : vector<16x16xf32>
    %389 = vector.broadcast %25 : f32 to vector<16x16xf32>
    %390 = arith.mulf %389, %260 : vector<16x16xf32>
    %391 = arith.addf %388, %390 : vector<16x16xf32>
    %392 = vector.broadcast %28 : f32 to vector<16x16xf32>
    %393 = arith.mulf %392, %191 : vector<16x16xf32>
    %394 = arith.addf %391, %393 : vector<16x16xf32>
    %395 = vector.broadcast %31 : f32 to vector<16x16xf32>
    %396 = arith.mulf %395, %227 : vector<16x16xf32>
    %397 = arith.addf %394, %396 : vector<16x16xf32>
    %398 = vector.broadcast %34 : f32 to vector<16x16xf32>
    %399 = arith.mulf %398, %263 : vector<16x16xf32>
    %400 = arith.addf %397, %399 : vector<16x16xf32>
    %401 = vector.broadcast %37 : f32 to vector<16x16xf32>
    %402 = arith.mulf %401, %169 : vector<16x16xf32>
    %403 = arith.addf %400, %402 : vector<16x16xf32>
    %404 = vector.broadcast %40 : f32 to vector<16x16xf32>
    %405 = arith.mulf %404, %171 : vector<16x16xf32>
    %406 = arith.addf %403, %405 : vector<16x16xf32>
    %407 = vector.broadcast %43 : f32 to vector<16x16xf32>
    %408 = arith.mulf %407, %173 : vector<16x16xf32>
    %409 = arith.addf %406, %408 : vector<16x16xf32>
    %410 = vector.broadcast %46 : f32 to vector<16x16xf32>
    %411 = arith.mulf %410, %194 : vector<16x16xf32>
    %412 = arith.addf %409, %411 : vector<16x16xf32>
    %413 = vector.broadcast %49 : f32 to vector<16x16xf32>
    %414 = arith.mulf %413, %230 : vector<16x16xf32>
    %415 = arith.addf %412, %414 : vector<16x16xf32>
    %416 = vector.broadcast %52 : f32 to vector<16x16xf32>
    %417 = arith.mulf %416, %266 : vector<16x16xf32>
    %418 = arith.addf %415, %417 : vector<16x16xf32>
    %419 = vector.broadcast %55 : f32 to vector<16x16xf32>
    %420 = arith.mulf %419, %200 : vector<16x16xf32>
    %421 = arith.addf %418, %420 : vector<16x16xf32>
    %422 = vector.broadcast %58 : f32 to vector<16x16xf32>
    %423 = arith.mulf %422, %236 : vector<16x16xf32>
    %424 = arith.addf %421, %423 : vector<16x16xf32>
    %425 = vector.broadcast %61 : f32 to vector<16x16xf32>
    %426 = arith.mulf %425, %272 : vector<16x16xf32>
    %427 = arith.addf %424, %426 : vector<16x16xf32>
    %428 = vector.broadcast %64 : f32 to vector<16x16xf32>
    %429 = arith.mulf %428, %203 : vector<16x16xf32>
    %430 = arith.addf %427, %429 : vector<16x16xf32>
    %431 = vector.broadcast %67 : f32 to vector<16x16xf32>
    %432 = arith.mulf %431, %239 : vector<16x16xf32>
    %433 = arith.addf %430, %432 : vector<16x16xf32>
    %434 = vector.broadcast %70 : f32 to vector<16x16xf32>
    %435 = arith.mulf %434, %275 : vector<16x16xf32>
    %436 = arith.addf %433, %435 : vector<16x16xf32>
    %437 = vector.broadcast %73 : f32 to vector<16x16xf32>
    %438 = arith.mulf %437, %209 : vector<16x16xf32>
    %439 = arith.addf %436, %438 : vector<16x16xf32>
    %440 = vector.broadcast %76 : f32 to vector<16x16xf32>
    %441 = arith.mulf %440, %245 : vector<16x16xf32>
    %442 = arith.addf %439, %441 : vector<16x16xf32>
    %443 = vector.broadcast %79 : f32 to vector<16x16xf32>
    %444 = arith.mulf %443, %281 : vector<16x16xf32>
    %445 = arith.addf %442, %444 : vector<16x16xf32>
    %446 = vector.broadcast %83 : f32 to vector<16x16xf32>
    %447 = vector.broadcast %2 : f32 to vector<16x16xf32>
    %448 = arith.mulf %447, %179 : vector<16x16xf32>
    %449 = arith.addf %446, %448 : vector<16x16xf32>
    %450 = vector.broadcast %5 : f32 to vector<16x16xf32>
    %451 = arith.mulf %450, %215 : vector<16x16xf32>
    %452 = arith.addf %449, %451 : vector<16x16xf32>
    %453 = vector.broadcast %8 : f32 to vector<16x16xf32>
    %454 = arith.mulf %453, %251 : vector<16x16xf32>
    %455 = arith.addf %452, %454 : vector<16x16xf32>
    %456 = vector.broadcast %11 : f32 to vector<16x16xf32>
    %457 = arith.mulf %456, %182 : vector<16x16xf32>
    %458 = arith.addf %455, %457 : vector<16x16xf32>
    %459 = vector.broadcast %14 : f32 to vector<16x16xf32>
    %460 = arith.mulf %459, %218 : vector<16x16xf32>
    %461 = arith.addf %458, %460 : vector<16x16xf32>
    %462 = vector.broadcast %17 : f32 to vector<16x16xf32>
    %463 = arith.mulf %462, %254 : vector<16x16xf32>
    %464 = arith.addf %461, %463 : vector<16x16xf32>
    %465 = vector.broadcast %20 : f32 to vector<16x16xf32>
    %466 = arith.mulf %465, %188 : vector<16x16xf32>
    %467 = arith.addf %464, %466 : vector<16x16xf32>
    %468 = vector.broadcast %23 : f32 to vector<16x16xf32>
    %469 = arith.mulf %468, %224 : vector<16x16xf32>
    %470 = arith.addf %467, %469 : vector<16x16xf32>
    %471 = vector.broadcast %26 : f32 to vector<16x16xf32>
    %472 = arith.mulf %471, %260 : vector<16x16xf32>
    %473 = arith.addf %470, %472 : vector<16x16xf32>
    %474 = vector.broadcast %29 : f32 to vector<16x16xf32>
    %475 = arith.mulf %474, %191 : vector<16x16xf32>
    %476 = arith.addf %473, %475 : vector<16x16xf32>
    %477 = vector.broadcast %32 : f32 to vector<16x16xf32>
    %478 = arith.mulf %477, %227 : vector<16x16xf32>
    %479 = arith.addf %476, %478 : vector<16x16xf32>
    %480 = vector.broadcast %35 : f32 to vector<16x16xf32>
    %481 = arith.mulf %480, %263 : vector<16x16xf32>
    %482 = arith.addf %479, %481 : vector<16x16xf32>
    %483 = vector.broadcast %38 : f32 to vector<16x16xf32>
    %484 = arith.mulf %483, %169 : vector<16x16xf32>
    %485 = arith.addf %482, %484 : vector<16x16xf32>
    %486 = vector.broadcast %41 : f32 to vector<16x16xf32>
    %487 = arith.mulf %486, %171 : vector<16x16xf32>
    %488 = arith.addf %485, %487 : vector<16x16xf32>
    %489 = vector.broadcast %44 : f32 to vector<16x16xf32>
    %490 = arith.mulf %489, %173 : vector<16x16xf32>
    %491 = arith.addf %488, %490 : vector<16x16xf32>
    %492 = vector.broadcast %47 : f32 to vector<16x16xf32>
    %493 = arith.mulf %492, %194 : vector<16x16xf32>
    %494 = arith.addf %491, %493 : vector<16x16xf32>
    %495 = vector.broadcast %50 : f32 to vector<16x16xf32>
    %496 = arith.mulf %495, %230 : vector<16x16xf32>
    %497 = arith.addf %494, %496 : vector<16x16xf32>
    %498 = vector.broadcast %53 : f32 to vector<16x16xf32>
    %499 = arith.mulf %498, %266 : vector<16x16xf32>
    %500 = arith.addf %497, %499 : vector<16x16xf32>
    %501 = vector.broadcast %56 : f32 to vector<16x16xf32>
    %502 = arith.mulf %501, %200 : vector<16x16xf32>
    %503 = arith.addf %500, %502 : vector<16x16xf32>
    %504 = vector.broadcast %59 : f32 to vector<16x16xf32>
    %505 = arith.mulf %504, %236 : vector<16x16xf32>
    %506 = arith.addf %503, %505 : vector<16x16xf32>
    %507 = vector.broadcast %62 : f32 to vector<16x16xf32>
    %508 = arith.mulf %507, %272 : vector<16x16xf32>
    %509 = arith.addf %506, %508 : vector<16x16xf32>
    %510 = vector.broadcast %65 : f32 to vector<16x16xf32>
    %511 = arith.mulf %510, %203 : vector<16x16xf32>
    %512 = arith.addf %509, %511 : vector<16x16xf32>
    %513 = vector.broadcast %68 : f32 to vector<16x16xf32>
    %514 = arith.mulf %513, %239 : vector<16x16xf32>
    %515 = arith.addf %512, %514 : vector<16x16xf32>
    %516 = vector.broadcast %71 : f32 to vector<16x16xf32>
    %517 = arith.mulf %516, %275 : vector<16x16xf32>
    %518 = arith.addf %515, %517 : vector<16x16xf32>
    %519 = vector.broadcast %74 : f32 to vector<16x16xf32>
    %520 = arith.mulf %519, %209 : vector<16x16xf32>
    %521 = arith.addf %518, %520 : vector<16x16xf32>
    %522 = vector.broadcast %77 : f32 to vector<16x16xf32>
    %523 = arith.mulf %522, %245 : vector<16x16xf32>
    %524 = arith.addf %521, %523 : vector<16x16xf32>
    %525 = vector.broadcast %80 : f32 to vector<16x16xf32>
    %526 = arith.mulf %525, %281 : vector<16x16xf32>
    %527 = arith.addf %524, %526 : vector<16x16xf32>
    %cst_134 = arith.constant 0.000000e+00 : f32
    %528 = vector.broadcast %cst_134 : f32 to vector<16x16xf32>
    %cst_135 = arith.constant 0.000000e+00 : f32
    %529 = vector.broadcast %cst_135 : f32 to vector<16x16xf32>
    %cst_136 = arith.constant 0.000000e+00 : f32
    %530 = vector.broadcast %cst_136 : f32 to vector<16x16xf32>
    %cst_137 = arith.constant 0.000000e+00 : f32
    %531 = vector.broadcast %cst_137 : f32 to vector<16x16xf32>
    %cst_138 = arith.constant 0.000000e+00 : f32
    %532 = vector.broadcast %cst_138 : f32 to vector<16x16xf32>
    %cst_139 = arith.constant 0.000000e+00 : f32
    %533 = vector.broadcast %cst_139 : f32 to vector<16x16xf32>
    %c0_140 = arith.constant 0 : index
    %c0_141 = arith.constant 0 : index
    %c0_142 = arith.constant 0 : index
    %c0_143 = arith.constant 0 : index
    %534 = vector.load %arg2[%c0_140, %c0_141, %c0_142, %c0_143] : memref<1x9x16x16xf32, #tpu.memory_space<vmem>>, vector<1x1x16x16xf32>
    %535 = vector.shape_cast %534 : vector<1x1x16x16xf32> to vector<16x16xf32>
    %c0_144 = arith.constant 0 : index
    %c1_145 = arith.constant 1 : index
    %c0_146 = arith.constant 0 : index
    %c0_147 = arith.constant 0 : index
    %536 = vector.load %arg2[%c0_144, %c1_145, %c0_146, %c0_147] : memref<1x9x16x16xf32, #tpu.memory_space<vmem>>, vector<1x1x16x16xf32>
    %537 = vector.shape_cast %536 : vector<1x1x16x16xf32> to vector<16x16xf32>
    %c0_148 = arith.constant 0 : index
    %c2_149 = arith.constant 2 : index
    %c0_150 = arith.constant 0 : index
    %c0_151 = arith.constant 0 : index
    %538 = vector.load %arg2[%c0_148, %c2_149, %c0_150, %c0_151] : memref<1x9x16x16xf32, #tpu.memory_space<vmem>>, vector<1x1x16x16xf32>
    %539 = vector.shape_cast %538 : vector<1x1x16x16xf32> to vector<16x16xf32>
    %cst_152 = arith.constant 0.000000e+00 : f32
    %540 = vector.broadcast %cst_152 : f32 to vector<1x16xf32>
    %541 = vector.extract_strided_slice %535 {offsets = [0, 0], sizes = [15, 16], strides = [1, 1]} : vector<16x16xf32> to vector<15x16xf32>
    %542 = tpu.concatenate %540, %541 in 0 : vector<1x16xf32>, vector<15x16xf32> -> vector<16x16xf32>
    %cst_153 = arith.constant 0.000000e+00 : f32
    %543 = vector.broadcast %cst_153 : f32 to vector<16x1xf32>
    %544 = vector.extract_strided_slice %542 {offsets = [0, 0], sizes = [16, 15], strides = [1, 1]} : vector<16x16xf32> to vector<16x15xf32>
    %545 = tpu.concatenate %543, %544 in 1 : vector<16x1xf32>, vector<16x15xf32> -> vector<16x16xf32>
    %cst_154 = arith.constant 0.000000e+00 : f32
    %546 = vector.broadcast %cst_154 : f32 to vector<1x16xf32>
    %547 = vector.extract_strided_slice %535 {offsets = [0, 0], sizes = [15, 16], strides = [1, 1]} : vector<16x16xf32> to vector<15x16xf32>
    %548 = tpu.concatenate %546, %547 in 0 : vector<1x16xf32>, vector<15x16xf32> -> vector<16x16xf32>
    %cst_155 = arith.constant 0.000000e+00 : f32
    %549 = vector.broadcast %cst_155 : f32 to vector<1x16xf32>
    %550 = vector.extract_strided_slice %535 {offsets = [0, 0], sizes = [15, 16], strides = [1, 1]} : vector<16x16xf32> to vector<15x16xf32>
    %551 = tpu.concatenate %549, %550 in 0 : vector<1x16xf32>, vector<15x16xf32> -> vector<16x16xf32>
    %552 = vector.extract_strided_slice %551 {offsets = [0, 1], sizes = [16, 15], strides = [1, 1]} : vector<16x16xf32> to vector<16x15xf32>
    %cst_156 = arith.constant 0.000000e+00 : f32
    %553 = vector.broadcast %cst_156 : f32 to vector<16x1xf32>
    %554 = tpu.concatenate %552, %553 in 1 : vector<16x15xf32>, vector<16x1xf32> -> vector<16x16xf32>
    %cst_157 = arith.constant 0.000000e+00 : f32
    %555 = vector.broadcast %cst_157 : f32 to vector<16x1xf32>
    %556 = vector.extract_strided_slice %535 {offsets = [0, 0], sizes = [16, 15], strides = [1, 1]} : vector<16x16xf32> to vector<16x15xf32>
    %557 = tpu.concatenate %555, %556 in 1 : vector<16x1xf32>, vector<16x15xf32> -> vector<16x16xf32>
    %558 = vector.extract_strided_slice %535 {offsets = [0, 1], sizes = [16, 15], strides = [1, 1]} : vector<16x16xf32> to vector<16x15xf32>
    %cst_158 = arith.constant 0.000000e+00 : f32
    %559 = vector.broadcast %cst_158 : f32 to vector<16x1xf32>
    %560 = tpu.concatenate %558, %559 in 1 : vector<16x15xf32>, vector<16x1xf32> -> vector<16x16xf32>
    %561 = vector.extract_strided_slice %535 {offsets = [1, 0], sizes = [15, 16], strides = [1, 1]} : vector<16x16xf32> to vector<15x16xf32>
    %cst_159 = arith.constant 0.000000e+00 : f32
    %562 = vector.broadcast %cst_159 : f32 to vector<1x16xf32>
    %563 = tpu.concatenate %561, %562 in 0 : vector<15x16xf32>, vector<1x16xf32> -> vector<16x16xf32>
    %cst_160 = arith.constant 0.000000e+00 : f32
    %564 = vector.broadcast %cst_160 : f32 to vector<16x1xf32>
    %565 = vector.extract_strided_slice %563 {offsets = [0, 0], sizes = [16, 15], strides = [1, 1]} : vector<16x16xf32> to vector<16x15xf32>
    %566 = tpu.concatenate %564, %565 in 1 : vector<16x1xf32>, vector<16x15xf32> -> vector<16x16xf32>
    %567 = vector.extract_strided_slice %535 {offsets = [1, 0], sizes = [15, 16], strides = [1, 1]} : vector<16x16xf32> to vector<15x16xf32>
    %cst_161 = arith.constant 0.000000e+00 : f32
    %568 = vector.broadcast %cst_161 : f32 to vector<1x16xf32>
    %569 = tpu.concatenate %567, %568 in 0 : vector<15x16xf32>, vector<1x16xf32> -> vector<16x16xf32>
    %570 = vector.extract_strided_slice %535 {offsets = [1, 0], sizes = [15, 16], strides = [1, 1]} : vector<16x16xf32> to vector<15x16xf32>
    %cst_162 = arith.constant 0.000000e+00 : f32
    %571 = vector.broadcast %cst_162 : f32 to vector<1x16xf32>
    %572 = tpu.concatenate %570, %571 in 0 : vector<15x16xf32>, vector<1x16xf32> -> vector<16x16xf32>
    %573 = vector.extract_strided_slice %572 {offsets = [0, 1], sizes = [16, 15], strides = [1, 1]} : vector<16x16xf32> to vector<16x15xf32>
    %cst_163 = arith.constant 0.000000e+00 : f32
    %574 = vector.broadcast %cst_163 : f32 to vector<16x1xf32>
    %575 = tpu.concatenate %573, %574 in 1 : vector<16x15xf32>, vector<16x1xf32> -> vector<16x16xf32>
    %cst_164 = arith.constant 0.000000e+00 : f32
    %576 = vector.broadcast %cst_164 : f32 to vector<1x16xf32>
    %577 = vector.extract_strided_slice %537 {offsets = [0, 0], sizes = [15, 16], strides = [1, 1]} : vector<16x16xf32> to vector<15x16xf32>
    %578 = tpu.concatenate %576, %577 in 0 : vector<1x16xf32>, vector<15x16xf32> -> vector<16x16xf32>
    %cst_165 = arith.constant 0.000000e+00 : f32
    %579 = vector.broadcast %cst_165 : f32 to vector<16x1xf32>
    %580 = vector.extract_strided_slice %578 {offsets = [0, 0], sizes = [16, 15], strides = [1, 1]} : vector<16x16xf32> to vector<16x15xf32>
    %581 = tpu.concatenate %579, %580 in 1 : vector<16x1xf32>, vector<16x15xf32> -> vector<16x16xf32>
    %cst_166 = arith.constant 0.000000e+00 : f32
    %582 = vector.broadcast %cst_166 : f32 to vector<1x16xf32>
    %583 = vector.extract_strided_slice %537 {offsets = [0, 0], sizes = [15, 16], strides = [1, 1]} : vector<16x16xf32> to vector<15x16xf32>
    %584 = tpu.concatenate %582, %583 in 0 : vector<1x16xf32>, vector<15x16xf32> -> vector<16x16xf32>
    %cst_167 = arith.constant 0.000000e+00 : f32
    %585 = vector.broadcast %cst_167 : f32 to vector<1x16xf32>
    %586 = vector.extract_strided_slice %537 {offsets = [0, 0], sizes = [15, 16], strides = [1, 1]} : vector<16x16xf32> to vector<15x16xf32>
    %587 = tpu.concatenate %585, %586 in 0 : vector<1x16xf32>, vector<15x16xf32> -> vector<16x16xf32>
    %588 = vector.extract_strided_slice %587 {offsets = [0, 1], sizes = [16, 15], strides = [1, 1]} : vector<16x16xf32> to vector<16x15xf32>
    %cst_168 = arith.constant 0.000000e+00 : f32
    %589 = vector.broadcast %cst_168 : f32 to vector<16x1xf32>
    %590 = tpu.concatenate %588, %589 in 1 : vector<16x15xf32>, vector<16x1xf32> -> vector<16x16xf32>
    %cst_169 = arith.constant 0.000000e+00 : f32
    %591 = vector.broadcast %cst_169 : f32 to vector<16x1xf32>
    %592 = vector.extract_strided_slice %537 {offsets = [0, 0], sizes = [16, 15], strides = [1, 1]} : vector<16x16xf32> to vector<16x15xf32>
    %593 = tpu.concatenate %591, %592 in 1 : vector<16x1xf32>, vector<16x15xf32> -> vector<16x16xf32>
    %594 = vector.extract_strided_slice %537 {offsets = [0, 1], sizes = [16, 15], strides = [1, 1]} : vector<16x16xf32> to vector<16x15xf32>
    %cst_170 = arith.constant 0.000000e+00 : f32
    %595 = vector.broadcast %cst_170 : f32 to vector<16x1xf32>
    %596 = tpu.concatenate %594, %595 in 1 : vector<16x15xf32>, vector<16x1xf32> -> vector<16x16xf32>
    %597 = vector.extract_strided_slice %537 {offsets = [1, 0], sizes = [15, 16], strides = [1, 1]} : vector<16x16xf32> to vector<15x16xf32>
    %cst_171 = arith.constant 0.000000e+00 : f32
    %598 = vector.broadcast %cst_171 : f32 to vector<1x16xf32>
    %599 = tpu.concatenate %597, %598 in 0 : vector<15x16xf32>, vector<1x16xf32> -> vector<16x16xf32>
    %cst_172 = arith.constant 0.000000e+00 : f32
    %600 = vector.broadcast %cst_172 : f32 to vector<16x1xf32>
    %601 = vector.extract_strided_slice %599 {offsets = [0, 0], sizes = [16, 15], strides = [1, 1]} : vector<16x16xf32> to vector<16x15xf32>
    %602 = tpu.concatenate %600, %601 in 1 : vector<16x1xf32>, vector<16x15xf32> -> vector<16x16xf32>
    %603 = vector.extract_strided_slice %537 {offsets = [1, 0], sizes = [15, 16], strides = [1, 1]} : vector<16x16xf32> to vector<15x16xf32>
    %cst_173 = arith.constant 0.000000e+00 : f32
    %604 = vector.broadcast %cst_173 : f32 to vector<1x16xf32>
    %605 = tpu.concatenate %603, %604 in 0 : vector<15x16xf32>, vector<1x16xf32> -> vector<16x16xf32>
    %606 = vector.extract_strided_slice %537 {offsets = [1, 0], sizes = [15, 16], strides = [1, 1]} : vector<16x16xf32> to vector<15x16xf32>
    %cst_174 = arith.constant 0.000000e+00 : f32
    %607 = vector.broadcast %cst_174 : f32 to vector<1x16xf32>
    %608 = tpu.concatenate %606, %607 in 0 : vector<15x16xf32>, vector<1x16xf32> -> vector<16x16xf32>
    %609 = vector.extract_strided_slice %608 {offsets = [0, 1], sizes = [16, 15], strides = [1, 1]} : vector<16x16xf32> to vector<16x15xf32>
    %cst_175 = arith.constant 0.000000e+00 : f32
    %610 = vector.broadcast %cst_175 : f32 to vector<16x1xf32>
    %611 = tpu.concatenate %609, %610 in 1 : vector<16x15xf32>, vector<16x1xf32> -> vector<16x16xf32>
    %cst_176 = arith.constant 0.000000e+00 : f32
    %612 = vector.broadcast %cst_176 : f32 to vector<1x16xf32>
    %613 = vector.extract_strided_slice %539 {offsets = [0, 0], sizes = [15, 16], strides = [1, 1]} : vector<16x16xf32> to vector<15x16xf32>
    %614 = tpu.concatenate %612, %613 in 0 : vector<1x16xf32>, vector<15x16xf32> -> vector<16x16xf32>
    %cst_177 = arith.constant 0.000000e+00 : f32
    %615 = vector.broadcast %cst_177 : f32 to vector<16x1xf32>
    %616 = vector.extract_strided_slice %614 {offsets = [0, 0], sizes = [16, 15], strides = [1, 1]} : vector<16x16xf32> to vector<16x15xf32>
    %617 = tpu.concatenate %615, %616 in 1 : vector<16x1xf32>, vector<16x15xf32> -> vector<16x16xf32>
    %cst_178 = arith.constant 0.000000e+00 : f32
    %618 = vector.broadcast %cst_178 : f32 to vector<1x16xf32>
    %619 = vector.extract_strided_slice %539 {offsets = [0, 0], sizes = [15, 16], strides = [1, 1]} : vector<16x16xf32> to vector<15x16xf32>
    %620 = tpu.concatenate %618, %619 in 0 : vector<1x16xf32>, vector<15x16xf32> -> vector<16x16xf32>
    %cst_179 = arith.constant 0.000000e+00 : f32
    %621 = vector.broadcast %cst_179 : f32 to vector<1x16xf32>
    %622 = vector.extract_strided_slice %539 {offsets = [0, 0], sizes = [15, 16], strides = [1, 1]} : vector<16x16xf32> to vector<15x16xf32>
    %623 = tpu.concatenate %621, %622 in 0 : vector<1x16xf32>, vector<15x16xf32> -> vector<16x16xf32>
    %624 = vector.extract_strided_slice %623 {offsets = [0, 1], sizes = [16, 15], strides = [1, 1]} : vector<16x16xf32> to vector<16x15xf32>
    %cst_180 = arith.constant 0.000000e+00 : f32
    %625 = vector.broadcast %cst_180 : f32 to vector<16x1xf32>
    %626 = tpu.concatenate %624, %625 in 1 : vector<16x15xf32>, vector<16x1xf32> -> vector<16x16xf32>
    %cst_181 = arith.constant 0.000000e+00 : f32
    %627 = vector.broadcast %cst_181 : f32 to vector<16x1xf32>
    %628 = vector.extract_strided_slice %539 {offsets = [0, 0], sizes = [16, 15], strides = [1, 1]} : vector<16x16xf32> to vector<16x15xf32>
    %629 = tpu.concatenate %627, %628 in 1 : vector<16x1xf32>, vector<16x15xf32> -> vector<16x16xf32>
    %630 = vector.extract_strided_slice %539 {offsets = [0, 1], sizes = [16, 15], strides = [1, 1]} : vector<16x16xf32> to vector<16x15xf32>
    %cst_182 = arith.constant 0.000000e+00 : f32
    %631 = vector.broadcast %cst_182 : f32 to vector<16x1xf32>
    %632 = tpu.concatenate %630, %631 in 1 : vector<16x15xf32>, vector<16x1xf32> -> vector<16x16xf32>
    %633 = vector.extract_strided_slice %539 {offsets = [1, 0], sizes = [15, 16], strides = [1, 1]} : vector<16x16xf32> to vector<15x16xf32>
    %cst_183 = arith.constant 0.000000e+00 : f32
    %634 = vector.broadcast %cst_183 : f32 to vector<1x16xf32>
    %635 = tpu.concatenate %633, %634 in 0 : vector<15x16xf32>, vector<1x16xf32> -> vector<16x16xf32>
    %cst_184 = arith.constant 0.000000e+00 : f32
    %636 = vector.broadcast %cst_184 : f32 to vector<16x1xf32>
    %637 = vector.extract_strided_slice %635 {offsets = [0, 0], sizes = [16, 15], strides = [1, 1]} : vector<16x16xf32> to vector<16x15xf32>
    %638 = tpu.concatenate %636, %637 in 1 : vector<16x1xf32>, vector<16x15xf32> -> vector<16x16xf32>
    %639 = vector.extract_strided_slice %539 {offsets = [1, 0], sizes = [15, 16], strides = [1, 1]} : vector<16x16xf32> to vector<15x16xf32>
    %cst_185 = arith.constant 0.000000e+00 : f32
    %640 = vector.broadcast %cst_185 : f32 to vector<1x16xf32>
    %641 = tpu.concatenate %639, %640 in 0 : vector<15x16xf32>, vector<1x16xf32> -> vector<16x16xf32>
    %642 = vector.extract_strided_slice %539 {offsets = [1, 0], sizes = [15, 16], strides = [1, 1]} : vector<16x16xf32> to vector<15x16xf32>
    %cst_186 = arith.constant 0.000000e+00 : f32
    %643 = vector.broadcast %cst_186 : f32 to vector<1x16xf32>
    %644 = tpu.concatenate %642, %643 in 0 : vector<15x16xf32>, vector<1x16xf32> -> vector<16x16xf32>
    %645 = vector.extract_strided_slice %644 {offsets = [0, 1], sizes = [16, 15], strides = [1, 1]} : vector<16x16xf32> to vector<16x15xf32>
    %cst_187 = arith.constant 0.000000e+00 : f32
    %646 = vector.broadcast %cst_187 : f32 to vector<16x1xf32>
    %647 = tpu.concatenate %645, %646 in 1 : vector<16x15xf32>, vector<16x1xf32> -> vector<16x16xf32>
    %648 = vector.broadcast %165 : f32 to vector<16x16xf32>
    %649 = vector.broadcast %84 : f32 to vector<16x16xf32>
    %650 = arith.mulf %649, %545 : vector<16x16xf32>
    %651 = arith.addf %648, %650 : vector<16x16xf32>
    %652 = vector.broadcast %87 : f32 to vector<16x16xf32>
    %653 = arith.mulf %652, %581 : vector<16x16xf32>
    %654 = arith.addf %651, %653 : vector<16x16xf32>
    %655 = vector.broadcast %90 : f32 to vector<16x16xf32>
    %656 = arith.mulf %655, %617 : vector<16x16xf32>
    %657 = arith.addf %654, %656 : vector<16x16xf32>
    %658 = vector.broadcast %93 : f32 to vector<16x16xf32>
    %659 = arith.mulf %658, %548 : vector<16x16xf32>
    %660 = arith.addf %657, %659 : vector<16x16xf32>
    %661 = vector.broadcast %96 : f32 to vector<16x16xf32>
    %662 = arith.mulf %661, %584 : vector<16x16xf32>
    %663 = arith.addf %660, %662 : vector<16x16xf32>
    %664 = vector.broadcast %99 : f32 to vector<16x16xf32>
    %665 = arith.mulf %664, %620 : vector<16x16xf32>
    %666 = arith.addf %663, %665 : vector<16x16xf32>
    %667 = vector.broadcast %102 : f32 to vector<16x16xf32>
    %668 = arith.mulf %667, %554 : vector<16x16xf32>
    %669 = arith.addf %666, %668 : vector<16x16xf32>
    %670 = vector.broadcast %105 : f32 to vector<16x16xf32>
    %671 = arith.mulf %670, %590 : vector<16x16xf32>
    %672 = arith.addf %669, %671 : vector<16x16xf32>
    %673 = vector.broadcast %108 : f32 to vector<16x16xf32>
    %674 = arith.mulf %673, %626 : vector<16x16xf32>
    %675 = arith.addf %672, %674 : vector<16x16xf32>
    %676 = vector.broadcast %111 : f32 to vector<16x16xf32>
    %677 = arith.mulf %676, %557 : vector<16x16xf32>
    %678 = arith.addf %675, %677 : vector<16x16xf32>
    %679 = vector.broadcast %114 : f32 to vector<16x16xf32>
    %680 = arith.mulf %679, %593 : vector<16x16xf32>
    %681 = arith.addf %678, %680 : vector<16x16xf32>
    %682 = vector.broadcast %117 : f32 to vector<16x16xf32>
    %683 = arith.mulf %682, %629 : vector<16x16xf32>
    %684 = arith.addf %681, %683 : vector<16x16xf32>
    %685 = vector.broadcast %120 : f32 to vector<16x16xf32>
    %686 = arith.mulf %685, %535 : vector<16x16xf32>
    %687 = arith.addf %684, %686 : vector<16x16xf32>
    %688 = vector.broadcast %123 : f32 to vector<16x16xf32>
    %689 = arith.mulf %688, %537 : vector<16x16xf32>
    %690 = arith.addf %687, %689 : vector<16x16xf32>
    %691 = vector.broadcast %126 : f32 to vector<16x16xf32>
    %692 = arith.mulf %691, %539 : vector<16x16xf32>
    %693 = arith.addf %690, %692 : vector<16x16xf32>
    %694 = vector.broadcast %129 : f32 to vector<16x16xf32>
    %695 = arith.mulf %694, %560 : vector<16x16xf32>
    %696 = arith.addf %693, %695 : vector<16x16xf32>
    %697 = vector.broadcast %132 : f32 to vector<16x16xf32>
    %698 = arith.mulf %697, %596 : vector<16x16xf32>
    %699 = arith.addf %696, %698 : vector<16x16xf32>
    %700 = vector.broadcast %135 : f32 to vector<16x16xf32>
    %701 = arith.mulf %700, %632 : vector<16x16xf32>
    %702 = arith.addf %699, %701 : vector<16x16xf32>
    %703 = vector.broadcast %138 : f32 to vector<16x16xf32>
    %704 = arith.mulf %703, %566 : vector<16x16xf32>
    %705 = arith.addf %702, %704 : vector<16x16xf32>
    %706 = vector.broadcast %141 : f32 to vector<16x16xf32>
    %707 = arith.mulf %706, %602 : vector<16x16xf32>
    %708 = arith.addf %705, %707 : vector<16x16xf32>
    %709 = vector.broadcast %144 : f32 to vector<16x16xf32>
    %710 = arith.mulf %709, %638 : vector<16x16xf32>
    %711 = arith.addf %708, %710 : vector<16x16xf32>
    %712 = vector.broadcast %147 : f32 to vector<16x16xf32>
    %713 = arith.mulf %712, %569 : vector<16x16xf32>
    %714 = arith.addf %711, %713 : vector<16x16xf32>
    %715 = vector.broadcast %150 : f32 to vector<16x16xf32>
    %716 = arith.mulf %715, %605 : vector<16x16xf32>
    %717 = arith.addf %714, %716 : vector<16x16xf32>
    %718 = vector.broadcast %153 : f32 to vector<16x16xf32>
    %719 = arith.mulf %718, %641 : vector<16x16xf32>
    %720 = arith.addf %717, %719 : vector<16x16xf32>
    %721 = vector.broadcast %156 : f32 to vector<16x16xf32>
    %722 = arith.mulf %721, %575 : vector<16x16xf32>
    %723 = arith.addf %720, %722 : vector<16x16xf32>
    %724 = vector.broadcast %159 : f32 to vector<16x16xf32>
    %725 = arith.mulf %724, %611 : vector<16x16xf32>
    %726 = arith.addf %723, %725 : vector<16x16xf32>
    %727 = vector.broadcast %162 : f32 to vector<16x16xf32>
    %728 = arith.mulf %727, %647 : vector<16x16xf32>
    %729 = arith.addf %726, %728 : vector<16x16xf32>
    %730 = vector.broadcast %166 : f32 to vector<16x16xf32>
    %731 = vector.broadcast %85 : f32 to vector<16x16xf32>
    %732 = arith.mulf %731, %545 : vector<16x16xf32>
    %733 = arith.addf %730, %732 : vector<16x16xf32>
    %734 = vector.broadcast %88 : f32 to vector<16x16xf32>
    %735 = arith.mulf %734, %581 : vector<16x16xf32>
    %736 = arith.addf %733, %735 : vector<16x16xf32>
    %737 = vector.broadcast %91 : f32 to vector<16x16xf32>
    %738 = arith.mulf %737, %617 : vector<16x16xf32>
    %739 = arith.addf %736, %738 : vector<16x16xf32>
    %740 = vector.broadcast %94 : f32 to vector<16x16xf32>
    %741 = arith.mulf %740, %548 : vector<16x16xf32>
    %742 = arith.addf %739, %741 : vector<16x16xf32>
    %743 = vector.broadcast %97 : f32 to vector<16x16xf32>
    %744 = arith.mulf %743, %584 : vector<16x16xf32>
    %745 = arith.addf %742, %744 : vector<16x16xf32>
    %746 = vector.broadcast %100 : f32 to vector<16x16xf32>
    %747 = arith.mulf %746, %620 : vector<16x16xf32>
    %748 = arith.addf %745, %747 : vector<16x16xf32>
    %749 = vector.broadcast %103 : f32 to vector<16x16xf32>
    %750 = arith.mulf %749, %554 : vector<16x16xf32>
    %751 = arith.addf %748, %750 : vector<16x16xf32>
    %752 = vector.broadcast %106 : f32 to vector<16x16xf32>
    %753 = arith.mulf %752, %590 : vector<16x16xf32>
    %754 = arith.addf %751, %753 : vector<16x16xf32>
    %755 = vector.broadcast %109 : f32 to vector<16x16xf32>
    %756 = arith.mulf %755, %626 : vector<16x16xf32>
    %757 = arith.addf %754, %756 : vector<16x16xf32>
    %758 = vector.broadcast %112 : f32 to vector<16x16xf32>
    %759 = arith.mulf %758, %557 : vector<16x16xf32>
    %760 = arith.addf %757, %759 : vector<16x16xf32>
    %761 = vector.broadcast %115 : f32 to vector<16x16xf32>
    %762 = arith.mulf %761, %593 : vector<16x16xf32>
    %763 = arith.addf %760, %762 : vector<16x16xf32>
    %764 = vector.broadcast %118 : f32 to vector<16x16xf32>
    %765 = arith.mulf %764, %629 : vector<16x16xf32>
    %766 = arith.addf %763, %765 : vector<16x16xf32>
    %767 = vector.broadcast %121 : f32 to vector<16x16xf32>
    %768 = arith.mulf %767, %535 : vector<16x16xf32>
    %769 = arith.addf %766, %768 : vector<16x16xf32>
    %770 = vector.broadcast %124 : f32 to vector<16x16xf32>
    %771 = arith.mulf %770, %537 : vector<16x16xf32>
    %772 = arith.addf %769, %771 : vector<16x16xf32>
    %773 = vector.broadcast %127 : f32 to vector<16x16xf32>
    %774 = arith.mulf %773, %539 : vector<16x16xf32>
    %775 = arith.addf %772, %774 : vector<16x16xf32>
    %776 = vector.broadcast %130 : f32 to vector<16x16xf32>
    %777 = arith.mulf %776, %560 : vector<16x16xf32>
    %778 = arith.addf %775, %777 : vector<16x16xf32>
    %779 = vector.broadcast %133 : f32 to vector<16x16xf32>
    %780 = arith.mulf %779, %596 : vector<16x16xf32>
    %781 = arith.addf %778, %780 : vector<16x16xf32>
    %782 = vector.broadcast %136 : f32 to vector<16x16xf32>
    %783 = arith.mulf %782, %632 : vector<16x16xf32>
    %784 = arith.addf %781, %783 : vector<16x16xf32>
    %785 = vector.broadcast %139 : f32 to vector<16x16xf32>
    %786 = arith.mulf %785, %566 : vector<16x16xf32>
    %787 = arith.addf %784, %786 : vector<16x16xf32>
    %788 = vector.broadcast %142 : f32 to vector<16x16xf32>
    %789 = arith.mulf %788, %602 : vector<16x16xf32>
    %790 = arith.addf %787, %789 : vector<16x16xf32>
    %791 = vector.broadcast %145 : f32 to vector<16x16xf32>
    %792 = arith.mulf %791, %638 : vector<16x16xf32>
    %793 = arith.addf %790, %792 : vector<16x16xf32>
    %794 = vector.broadcast %148 : f32 to vector<16x16xf32>
    %795 = arith.mulf %794, %569 : vector<16x16xf32>
    %796 = arith.addf %793, %795 : vector<16x16xf32>
    %797 = vector.broadcast %151 : f32 to vector<16x16xf32>
    %798 = arith.mulf %797, %605 : vector<16x16xf32>
    %799 = arith.addf %796, %798 : vector<16x16xf32>
    %800 = vector.broadcast %154 : f32 to vector<16x16xf32>
    %801 = arith.mulf %800, %641 : vector<16x16xf32>
    %802 = arith.addf %799, %801 : vector<16x16xf32>
    %803 = vector.broadcast %157 : f32 to vector<16x16xf32>
    %804 = arith.mulf %803, %575 : vector<16x16xf32>
    %805 = arith.addf %802, %804 : vector<16x16xf32>
    %806 = vector.broadcast %160 : f32 to vector<16x16xf32>
    %807 = arith.mulf %806, %611 : vector<16x16xf32>
    %808 = arith.addf %805, %807 : vector<16x16xf32>
    %809 = vector.broadcast %163 : f32 to vector<16x16xf32>
    %810 = arith.mulf %809, %647 : vector<16x16xf32>
    %811 = arith.addf %808, %810 : vector<16x16xf32>
    %812 = vector.broadcast %167 : f32 to vector<16x16xf32>
    %813 = vector.broadcast %86 : f32 to vector<16x16xf32>
    %814 = arith.mulf %813, %545 : vector<16x16xf32>
    %815 = arith.addf %812, %814 : vector<16x16xf32>
    %816 = vector.broadcast %89 : f32 to vector<16x16xf32>
    %817 = arith.mulf %816, %581 : vector<16x16xf32>
    %818 = arith.addf %815, %817 : vector<16x16xf32>
    %819 = vector.broadcast %92 : f32 to vector<16x16xf32>
    %820 = arith.mulf %819, %617 : vector<16x16xf32>
    %821 = arith.addf %818, %820 : vector<16x16xf32>
    %822 = vector.broadcast %95 : f32 to vector<16x16xf32>
    %823 = arith.mulf %822, %548 : vector<16x16xf32>
    %824 = arith.addf %821, %823 : vector<16x16xf32>
    %825 = vector.broadcast %98 : f32 to vector<16x16xf32>
    %826 = arith.mulf %825, %584 : vector<16x16xf32>
    %827 = arith.addf %824, %826 : vector<16x16xf32>
    %828 = vector.broadcast %101 : f32 to vector<16x16xf32>
    %829 = arith.mulf %828, %620 : vector<16x16xf32>
    %830 = arith.addf %827, %829 : vector<16x16xf32>
    %831 = vector.broadcast %104 : f32 to vector<16x16xf32>
    %832 = arith.mulf %831, %554 : vector<16x16xf32>
    %833 = arith.addf %830, %832 : vector<16x16xf32>
    %834 = vector.broadcast %107 : f32 to vector<16x16xf32>
    %835 = arith.mulf %834, %590 : vector<16x16xf32>
    %836 = arith.addf %833, %835 : vector<16x16xf32>
    %837 = vector.broadcast %110 : f32 to vector<16x16xf32>
    %838 = arith.mulf %837, %626 : vector<16x16xf32>
    %839 = arith.addf %836, %838 : vector<16x16xf32>
    %840 = vector.broadcast %113 : f32 to vector<16x16xf32>
    %841 = arith.mulf %840, %557 : vector<16x16xf32>
    %842 = arith.addf %839, %841 : vector<16x16xf32>
    %843 = vector.broadcast %116 : f32 to vector<16x16xf32>
    %844 = arith.mulf %843, %593 : vector<16x16xf32>
    %845 = arith.addf %842, %844 : vector<16x16xf32>
    %846 = vector.broadcast %119 : f32 to vector<16x16xf32>
    %847 = arith.mulf %846, %629 : vector<16x16xf32>
    %848 = arith.addf %845, %847 : vector<16x16xf32>
    %849 = vector.broadcast %122 : f32 to vector<16x16xf32>
    %850 = arith.mulf %849, %535 : vector<16x16xf32>
    %851 = arith.addf %848, %850 : vector<16x16xf32>
    %852 = vector.broadcast %125 : f32 to vector<16x16xf32>
    %853 = arith.mulf %852, %537 : vector<16x16xf32>
    %854 = arith.addf %851, %853 : vector<16x16xf32>
    %855 = vector.broadcast %128 : f32 to vector<16x16xf32>
    %856 = arith.mulf %855, %539 : vector<16x16xf32>
    %857 = arith.addf %854, %856 : vector<16x16xf32>
    %858 = vector.broadcast %131 : f32 to vector<16x16xf32>
    %859 = arith.mulf %858, %560 : vector<16x16xf32>
    %860 = arith.addf %857, %859 : vector<16x16xf32>
    %861 = vector.broadcast %134 : f32 to vector<16x16xf32>
    %862 = arith.mulf %861, %596 : vector<16x16xf32>
    %863 = arith.addf %860, %862 : vector<16x16xf32>
    %864 = vector.broadcast %137 : f32 to vector<16x16xf32>
    %865 = arith.mulf %864, %632 : vector<16x16xf32>
    %866 = arith.addf %863, %865 : vector<16x16xf32>
    %867 = vector.broadcast %140 : f32 to vector<16x16xf32>
    %868 = arith.mulf %867, %566 : vector<16x16xf32>
    %869 = arith.addf %866, %868 : vector<16x16xf32>
    %870 = vector.broadcast %143 : f32 to vector<16x16xf32>
    %871 = arith.mulf %870, %602 : vector<16x16xf32>
    %872 = arith.addf %869, %871 : vector<16x16xf32>
    %873 = vector.broadcast %146 : f32 to vector<16x16xf32>
    %874 = arith.mulf %873, %638 : vector<16x16xf32>
    %875 = arith.addf %872, %874 : vector<16x16xf32>
    %876 = vector.broadcast %149 : f32 to vector<16x16xf32>
    %877 = arith.mulf %876, %569 : vector<16x16xf32>
    %878 = arith.addf %875, %877 : vector<16x16xf32>
    %879 = vector.broadcast %152 : f32 to vector<16x16xf32>
    %880 = arith.mulf %879, %605 : vector<16x16xf32>
    %881 = arith.addf %878, %880 : vector<16x16xf32>
    %882 = vector.broadcast %155 : f32 to vector<16x16xf32>
    %883 = arith.mulf %882, %641 : vector<16x16xf32>
    %884 = arith.addf %881, %883 : vector<16x16xf32>
    %885 = vector.broadcast %158 : f32 to vector<16x16xf32>
    %886 = arith.mulf %885, %575 : vector<16x16xf32>
    %887 = arith.addf %884, %886 : vector<16x16xf32>
    %888 = vector.broadcast %161 : f32 to vector<16x16xf32>
    %889 = arith.mulf %888, %611 : vector<16x16xf32>
    %890 = arith.addf %887, %889 : vector<16x16xf32>
    %891 = vector.broadcast %164 : f32 to vector<16x16xf32>
    %892 = arith.mulf %891, %647 : vector<16x16xf32>
    %893 = arith.addf %890, %892 : vector<16x16xf32>
    %cst_188 = arith.constant dense<0.000000e+00> : vector<16x16xf32>
    %894 = tpu.matmul %729, %363, %cst_188 {dimension_numbers = #tpu.dot_dimension_numbers<[0], [0], [1], [1], [0, 1, 1, 1], [], []>} : vector<16x16xf32>, vector<16x16xf32>, vector<16x16xf32> -> vector<16x16xf32>
    %895 = arith.negf %894 : vector<16x16xf32>
    %896 = math.exp %895 : vector<16x16xf32>
    %cst_189 = arith.constant 1.000000e+00 : f32
    %897 = vector.broadcast %cst_189 : f32 to vector<16x16xf32>
    %898 = arith.addf %897, %896 : vector<16x16xf32>
    %899 = arith.divf %897, %898 : vector<16x16xf32>
    %900 = arith.mulf %899, %535 : vector<16x16xf32>
    %901 = arith.addf %528, %900 : vector<16x16xf32>
    %902 = arith.addf %531, %899 : vector<16x16xf32>
    %cst_190 = arith.constant dense<0.000000e+00> : vector<16x16xf32>
    %903 = tpu.matmul %811, %445, %cst_190 {dimension_numbers = #tpu.dot_dimension_numbers<[0], [0], [1], [1], [0, 1, 1, 1], [], []>} : vector<16x16xf32>, vector<16x16xf32>, vector<16x16xf32> -> vector<16x16xf32>
    %904 = arith.negf %903 : vector<16x16xf32>
    %905 = math.exp %904 : vector<16x16xf32>
    %cst_191 = arith.constant 1.000000e+00 : f32
    %906 = vector.broadcast %cst_191 : f32 to vector<16x16xf32>
    %907 = arith.addf %906, %905 : vector<16x16xf32>
    %908 = arith.divf %906, %907 : vector<16x16xf32>
    %909 = arith.mulf %908, %537 : vector<16x16xf32>
    %910 = arith.addf %529, %909 : vector<16x16xf32>
    %911 = arith.addf %532, %908 : vector<16x16xf32>
    %cst_192 = arith.constant dense<0.000000e+00> : vector<16x16xf32>
    %912 = tpu.matmul %893, %527, %cst_192 {dimension_numbers = #tpu.dot_dimension_numbers<[0], [0], [1], [1], [0, 1, 1, 1], [], []>} : vector<16x16xf32>, vector<16x16xf32>, vector<16x16xf32> -> vector<16x16xf32>
    %913 = arith.negf %912 : vector<16x16xf32>
    %914 = math.exp %913 : vector<16x16xf32>
    %cst_193 = arith.constant 1.000000e+00 : f32
    %915 = vector.broadcast %cst_193 : f32 to vector<16x16xf32>
    %916 = arith.addf %915, %914 : vector<16x16xf32>
    %917 = arith.divf %915, %916 : vector<16x16xf32>
    %918 = arith.mulf %917, %539 : vector<16x16xf32>
    %919 = arith.addf %530, %918 : vector<16x16xf32>
    %920 = arith.addf %533, %917 : vector<16x16xf32>
    %c0_194 = arith.constant 0 : index
    %c3_195 = arith.constant 3 : index
    %c0_196 = arith.constant 0 : index
    %c0_197 = arith.constant 0 : index
    %921 = vector.load %arg2[%c0_194, %c3_195, %c0_196, %c0_197] : memref<1x9x16x16xf32, #tpu.memory_space<vmem>>, vector<1x1x16x16xf32>
    %922 = vector.shape_cast %921 : vector<1x1x16x16xf32> to vector<16x16xf32>
    %c0_198 = arith.constant 0 : index
    %c4_199 = arith.constant 4 : index
    %c0_200 = arith.constant 0 : index
    %c0_201 = arith.constant 0 : index
    %923 = vector.load %arg2[%c0_198, %c4_199, %c0_200, %c0_201] : memref<1x9x16x16xf32, #tpu.memory_space<vmem>>, vector<1x1x16x16xf32>
    %924 = vector.shape_cast %923 : vector<1x1x16x16xf32> to vector<16x16xf32>
    %c0_202 = arith.constant 0 : index
    %c5_203 = arith.constant 5 : index
    %c0_204 = arith.constant 0 : index
    %c0_205 = arith.constant 0 : index
    %925 = vector.load %arg2[%c0_202, %c5_203, %c0_204, %c0_205] : memref<1x9x16x16xf32, #tpu.memory_space<vmem>>, vector<1x1x16x16xf32>
    %926 = vector.shape_cast %925 : vector<1x1x16x16xf32> to vector<16x16xf32>
    %cst_206 = arith.constant 0.000000e+00 : f32
    %927 = vector.broadcast %cst_206 : f32 to vector<1x16xf32>
    %928 = vector.extract_strided_slice %922 {offsets = [0, 0], sizes = [15, 16], strides = [1, 1]} : vector<16x16xf32> to vector<15x16xf32>
    %929 = tpu.concatenate %927, %928 in 0 : vector<1x16xf32>, vector<15x16xf32> -> vector<16x16xf32>
    %cst_207 = arith.constant 0.000000e+00 : f32
    %930 = vector.broadcast %cst_207 : f32 to vector<16x1xf32>
    %931 = vector.extract_strided_slice %929 {offsets = [0, 0], sizes = [16, 15], strides = [1, 1]} : vector<16x16xf32> to vector<16x15xf32>
    %932 = tpu.concatenate %930, %931 in 1 : vector<16x1xf32>, vector<16x15xf32> -> vector<16x16xf32>
    %cst_208 = arith.constant 0.000000e+00 : f32
    %933 = vector.broadcast %cst_208 : f32 to vector<1x16xf32>
    %934 = vector.extract_strided_slice %922 {offsets = [0, 0], sizes = [15, 16], strides = [1, 1]} : vector<16x16xf32> to vector<15x16xf32>
    %935 = tpu.concatenate %933, %934 in 0 : vector<1x16xf32>, vector<15x16xf32> -> vector<16x16xf32>
    %cst_209 = arith.constant 0.000000e+00 : f32
    %936 = vector.broadcast %cst_209 : f32 to vector<1x16xf32>
    %937 = vector.extract_strided_slice %922 {offsets = [0, 0], sizes = [15, 16], strides = [1, 1]} : vector<16x16xf32> to vector<15x16xf32>
    %938 = tpu.concatenate %936, %937 in 0 : vector<1x16xf32>, vector<15x16xf32> -> vector<16x16xf32>
    %939 = vector.extract_strided_slice %938 {offsets = [0, 1], sizes = [16, 15], strides = [1, 1]} : vector<16x16xf32> to vector<16x15xf32>
    %cst_210 = arith.constant 0.000000e+00 : f32
    %940 = vector.broadcast %cst_210 : f32 to vector<16x1xf32>
    %941 = tpu.concatenate %939, %940 in 1 : vector<16x15xf32>, vector<16x1xf32> -> vector<16x16xf32>
    %cst_211 = arith.constant 0.000000e+00 : f32
    %942 = vector.broadcast %cst_211 : f32 to vector<16x1xf32>
    %943 = vector.extract_strided_slice %922 {offsets = [0, 0], sizes = [16, 15], strides = [1, 1]} : vector<16x16xf32> to vector<16x15xf32>
    %944 = tpu.concatenate %942, %943 in 1 : vector<16x1xf32>, vector<16x15xf32> -> vector<16x16xf32>
    %945 = vector.extract_strided_slice %922 {offsets = [0, 1], sizes = [16, 15], strides = [1, 1]} : vector<16x16xf32> to vector<16x15xf32>
    %cst_212 = arith.constant 0.000000e+00 : f32
    %946 = vector.broadcast %cst_212 : f32 to vector<16x1xf32>
    %947 = tpu.concatenate %945, %946 in 1 : vector<16x15xf32>, vector<16x1xf32> -> vector<16x16xf32>
    %948 = vector.extract_strided_slice %922 {offsets = [1, 0], sizes = [15, 16], strides = [1, 1]} : vector<16x16xf32> to vector<15x16xf32>
    %cst_213 = arith.constant 0.000000e+00 : f32
    %949 = vector.broadcast %cst_213 : f32 to vector<1x16xf32>
    %950 = tpu.concatenate %948, %949 in 0 : vector<15x16xf32>, vector<1x16xf32> -> vector<16x16xf32>
    %cst_214 = arith.constant 0.000000e+00 : f32
    %951 = vector.broadcast %cst_214 : f32 to vector<16x1xf32>
    %952 = vector.extract_strided_slice %950 {offsets = [0, 0], sizes = [16, 15], strides = [1, 1]} : vector<16x16xf32> to vector<16x15xf32>
    %953 = tpu.concatenate %951, %952 in 1 : vector<16x1xf32>, vector<16x15xf32> -> vector<16x16xf32>
    %954 = vector.extract_strided_slice %922 {offsets = [1, 0], sizes = [15, 16], strides = [1, 1]} : vector<16x16xf32> to vector<15x16xf32>
    %cst_215 = arith.constant 0.000000e+00 : f32
    %955 = vector.broadcast %cst_215 : f32 to vector<1x16xf32>
    %956 = tpu.concatenate %954, %955 in 0 : vector<15x16xf32>, vector<1x16xf32> -> vector<16x16xf32>
    %957 = vector.extract_strided_slice %922 {offsets = [1, 0], sizes = [15, 16], strides = [1, 1]} : vector<16x16xf32> to vector<15x16xf32>
    %cst_216 = arith.constant 0.000000e+00 : f32
    %958 = vector.broadcast %cst_216 : f32 to vector<1x16xf32>
    %959 = tpu.concatenate %957, %958 in 0 : vector<15x16xf32>, vector<1x16xf32> -> vector<16x16xf32>
    %960 = vector.extract_strided_slice %959 {offsets = [0, 1], sizes = [16, 15], strides = [1, 1]} : vector<16x16xf32> to vector<16x15xf32>
    %cst_217 = arith.constant 0.000000e+00 : f32
    %961 = vector.broadcast %cst_217 : f32 to vector<16x1xf32>
    %962 = tpu.concatenate %960, %961 in 1 : vector<16x15xf32>, vector<16x1xf32> -> vector<16x16xf32>
    %cst_218 = arith.constant 0.000000e+00 : f32
    %963 = vector.broadcast %cst_218 : f32 to vector<1x16xf32>
    %964 = vector.extract_strided_slice %924 {offsets = [0, 0], sizes = [15, 16], strides = [1, 1]} : vector<16x16xf32> to vector<15x16xf32>
    %965 = tpu.concatenate %963, %964 in 0 : vector<1x16xf32>, vector<15x16xf32> -> vector<16x16xf32>
    %cst_219 = arith.constant 0.000000e+00 : f32
    %966 = vector.broadcast %cst_219 : f32 to vector<16x1xf32>
    %967 = vector.extract_strided_slice %965 {offsets = [0, 0], sizes = [16, 15], strides = [1, 1]} : vector<16x16xf32> to vector<16x15xf32>
    %968 = tpu.concatenate %966, %967 in 1 : vector<16x1xf32>, vector<16x15xf32> -> vector<16x16xf32>
    %cst_220 = arith.constant 0.000000e+00 : f32
    %969 = vector.broadcast %cst_220 : f32 to vector<1x16xf32>
    %970 = vector.extract_strided_slice %924 {offsets = [0, 0], sizes = [15, 16], strides = [1, 1]} : vector<16x16xf32> to vector<15x16xf32>
    %971 = tpu.concatenate %969, %970 in 0 : vector<1x16xf32>, vector<15x16xf32> -> vector<16x16xf32>
    %cst_221 = arith.constant 0.000000e+00 : f32
    %972 = vector.broadcast %cst_221 : f32 to vector<1x16xf32>
    %973 = vector.extract_strided_slice %924 {offsets = [0, 0], sizes = [15, 16], strides = [1, 1]} : vector<16x16xf32> to vector<15x16xf32>
    %974 = tpu.concatenate %972, %973 in 0 : vector<1x16xf32>, vector<15x16xf32> -> vector<16x16xf32>
    %975 = vector.extract_strided_slice %974 {offsets = [0, 1], sizes = [16, 15], strides = [1, 1]} : vector<16x16xf32> to vector<16x15xf32>
    %cst_222 = arith.constant 0.000000e+00 : f32
    %976 = vector.broadcast %cst_222 : f32 to vector<16x1xf32>
    %977 = tpu.concatenate %975, %976 in 1 : vector<16x15xf32>, vector<16x1xf32> -> vector<16x16xf32>
    %cst_223 = arith.constant 0.000000e+00 : f32
    %978 = vector.broadcast %cst_223 : f32 to vector<16x1xf32>
    %979 = vector.extract_strided_slice %924 {offsets = [0, 0], sizes = [16, 15], strides = [1, 1]} : vector<16x16xf32> to vector<16x15xf32>
    %980 = tpu.concatenate %978, %979 in 1 : vector<16x1xf32>, vector<16x15xf32> -> vector<16x16xf32>
    %981 = vector.extract_strided_slice %924 {offsets = [0, 1], sizes = [16, 15], strides = [1, 1]} : vector<16x16xf32> to vector<16x15xf32>
    %cst_224 = arith.constant 0.000000e+00 : f32
    %982 = vector.broadcast %cst_224 : f32 to vector<16x1xf32>
    %983 = tpu.concatenate %981, %982 in 1 : vector<16x15xf32>, vector<16x1xf32> -> vector<16x16xf32>
    %984 = vector.extract_strided_slice %924 {offsets = [1, 0], sizes = [15, 16], strides = [1, 1]} : vector<16x16xf32> to vector<15x16xf32>
    %cst_225 = arith.constant 0.000000e+00 : f32
    %985 = vector.broadcast %cst_225 : f32 to vector<1x16xf32>
    %986 = tpu.concatenate %984, %985 in 0 : vector<15x16xf32>, vector<1x16xf32> -> vector<16x16xf32>
    %cst_226 = arith.constant 0.000000e+00 : f32
    %987 = vector.broadcast %cst_226 : f32 to vector<16x1xf32>
    %988 = vector.extract_strided_slice %986 {offsets = [0, 0], sizes = [16, 15], strides = [1, 1]} : vector<16x16xf32> to vector<16x15xf32>
    %989 = tpu.concatenate %987, %988 in 1 : vector<16x1xf32>, vector<16x15xf32> -> vector<16x16xf32>
    %990 = vector.extract_strided_slice %924 {offsets = [1, 0], sizes = [15, 16], strides = [1, 1]} : vector<16x16xf32> to vector<15x16xf32>
    %cst_227 = arith.constant 0.000000e+00 : f32
    %991 = vector.broadcast %cst_227 : f32 to vector<1x16xf32>
    %992 = tpu.concatenate %990, %991 in 0 : vector<15x16xf32>, vector<1x16xf32> -> vector<16x16xf32>
    %993 = vector.extract_strided_slice %924 {offsets = [1, 0], sizes = [15, 16], strides = [1, 1]} : vector<16x16xf32> to vector<15x16xf32>
    %cst_228 = arith.constant 0.000000e+00 : f32
    %994 = vector.broadcast %cst_228 : f32 to vector<1x16xf32>
    %995 = tpu.concatenate %993, %994 in 0 : vector<15x16xf32>, vector<1x16xf32> -> vector<16x16xf32>
    %996 = vector.extract_strided_slice %995 {offsets = [0, 1], sizes = [16, 15], strides = [1, 1]} : vector<16x16xf32> to vector<16x15xf32>
    %cst_229 = arith.constant 0.000000e+00 : f32
    %997 = vector.broadcast %cst_229 : f32 to vector<16x1xf32>
    %998 = tpu.concatenate %996, %997 in 1 : vector<16x15xf32>, vector<16x1xf32> -> vector<16x16xf32>
    %cst_230 = arith.constant 0.000000e+00 : f32
    %999 = vector.broadcast %cst_230 : f32 to vector<1x16xf32>
    %1000 = vector.extract_strided_slice %926 {offsets = [0, 0], sizes = [15, 16], strides = [1, 1]} : vector<16x16xf32> to vector<15x16xf32>
    %1001 = tpu.concatenate %999, %1000 in 0 : vector<1x16xf32>, vector<15x16xf32> -> vector<16x16xf32>
    %cst_231 = arith.constant 0.000000e+00 : f32
    %1002 = vector.broadcast %cst_231 : f32 to vector<16x1xf32>
    %1003 = vector.extract_strided_slice %1001 {offsets = [0, 0], sizes = [16, 15], strides = [1, 1]} : vector<16x16xf32> to vector<16x15xf32>
    %1004 = tpu.concatenate %1002, %1003 in 1 : vector<16x1xf32>, vector<16x15xf32> -> vector<16x16xf32>
    %cst_232 = arith.constant 0.000000e+00 : f32
    %1005 = vector.broadcast %cst_232 : f32 to vector<1x16xf32>
    %1006 = vector.extract_strided_slice %926 {offsets = [0, 0], sizes = [15, 16], strides = [1, 1]} : vector<16x16xf32> to vector<15x16xf32>
    %1007 = tpu.concatenate %1005, %1006 in 0 : vector<1x16xf32>, vector<15x16xf32> -> vector<16x16xf32>
    %cst_233 = arith.constant 0.000000e+00 : f32
    %1008 = vector.broadcast %cst_233 : f32 to vector<1x16xf32>
    %1009 = vector.extract_strided_slice %926 {offsets = [0, 0], sizes = [15, 16], strides = [1, 1]} : vector<16x16xf32> to vector<15x16xf32>
    %1010 = tpu.concatenate %1008, %1009 in 0 : vector<1x16xf32>, vector<15x16xf32> -> vector<16x16xf32>
    %1011 = vector.extract_strided_slice %1010 {offsets = [0, 1], sizes = [16, 15], strides = [1, 1]} : vector<16x16xf32> to vector<16x15xf32>
    %cst_234 = arith.constant 0.000000e+00 : f32
    %1012 = vector.broadcast %cst_234 : f32 to vector<16x1xf32>
    %1013 = tpu.concatenate %1011, %1012 in 1 : vector<16x15xf32>, vector<16x1xf32> -> vector<16x16xf32>
    %cst_235 = arith.constant 0.000000e+00 : f32
    %1014 = vector.broadcast %cst_235 : f32 to vector<16x1xf32>
    %1015 = vector.extract_strided_slice %926 {offsets = [0, 0], sizes = [16, 15], strides = [1, 1]} : vector<16x16xf32> to vector<16x15xf32>
    %1016 = tpu.concatenate %1014, %1015 in 1 : vector<16x1xf32>, vector<16x15xf32> -> vector<16x16xf32>
    %1017 = vector.extract_strided_slice %926 {offsets = [0, 1], sizes = [16, 15], strides = [1, 1]} : vector<16x16xf32> to vector<16x15xf32>
    %cst_236 = arith.constant 0.000000e+00 : f32
    %1018 = vector.broadcast %cst_236 : f32 to vector<16x1xf32>
    %1019 = tpu.concatenate %1017, %1018 in 1 : vector<16x15xf32>, vector<16x1xf32> -> vector<16x16xf32>
    %1020 = vector.extract_strided_slice %926 {offsets = [1, 0], sizes = [15, 16], strides = [1, 1]} : vector<16x16xf32> to vector<15x16xf32>
    %cst_237 = arith.constant 0.000000e+00 : f32
    %1021 = vector.broadcast %cst_237 : f32 to vector<1x16xf32>
    %1022 = tpu.concatenate %1020, %1021 in 0 : vector<15x16xf32>, vector<1x16xf32> -> vector<16x16xf32>
    %cst_238 = arith.constant 0.000000e+00 : f32
    %1023 = vector.broadcast %cst_238 : f32 to vector<16x1xf32>
    %1024 = vector.extract_strided_slice %1022 {offsets = [0, 0], sizes = [16, 15], strides = [1, 1]} : vector<16x16xf32> to vector<16x15xf32>
    %1025 = tpu.concatenate %1023, %1024 in 1 : vector<16x1xf32>, vector<16x15xf32> -> vector<16x16xf32>
    %1026 = vector.extract_strided_slice %926 {offsets = [1, 0], sizes = [15, 16], strides = [1, 1]} : vector<16x16xf32> to vector<15x16xf32>
    %cst_239 = arith.constant 0.000000e+00 : f32
    %1027 = vector.broadcast %cst_239 : f32 to vector<1x16xf32>
    %1028 = tpu.concatenate %1026, %1027 in 0 : vector<15x16xf32>, vector<1x16xf32> -> vector<16x16xf32>
    %1029 = vector.extract_strided_slice %926 {offsets = [1, 0], sizes = [15, 16], strides = [1, 1]} : vector<16x16xf32> to vector<15x16xf32>
    %cst_240 = arith.constant 0.000000e+00 : f32
    %1030 = vector.broadcast %cst_240 : f32 to vector<1x16xf32>
    %1031 = tpu.concatenate %1029, %1030 in 0 : vector<15x16xf32>, vector<1x16xf32> -> vector<16x16xf32>
    %1032 = vector.extract_strided_slice %1031 {offsets = [0, 1], sizes = [16, 15], strides = [1, 1]} : vector<16x16xf32> to vector<16x15xf32>
    %cst_241 = arith.constant 0.000000e+00 : f32
    %1033 = vector.broadcast %cst_241 : f32 to vector<16x1xf32>
    %1034 = tpu.concatenate %1032, %1033 in 1 : vector<16x15xf32>, vector<16x1xf32> -> vector<16x16xf32>
    %1035 = vector.broadcast %165 : f32 to vector<16x16xf32>
    %1036 = vector.broadcast %84 : f32 to vector<16x16xf32>
    %1037 = arith.mulf %1036, %932 : vector<16x16xf32>
    %1038 = arith.addf %1035, %1037 : vector<16x16xf32>
    %1039 = vector.broadcast %87 : f32 to vector<16x16xf32>
    %1040 = arith.mulf %1039, %968 : vector<16x16xf32>
    %1041 = arith.addf %1038, %1040 : vector<16x16xf32>
    %1042 = vector.broadcast %90 : f32 to vector<16x16xf32>
    %1043 = arith.mulf %1042, %1004 : vector<16x16xf32>
    %1044 = arith.addf %1041, %1043 : vector<16x16xf32>
    %1045 = vector.broadcast %93 : f32 to vector<16x16xf32>
    %1046 = arith.mulf %1045, %935 : vector<16x16xf32>
    %1047 = arith.addf %1044, %1046 : vector<16x16xf32>
    %1048 = vector.broadcast %96 : f32 to vector<16x16xf32>
    %1049 = arith.mulf %1048, %971 : vector<16x16xf32>
    %1050 = arith.addf %1047, %1049 : vector<16x16xf32>
    %1051 = vector.broadcast %99 : f32 to vector<16x16xf32>
    %1052 = arith.mulf %1051, %1007 : vector<16x16xf32>
    %1053 = arith.addf %1050, %1052 : vector<16x16xf32>
    %1054 = vector.broadcast %102 : f32 to vector<16x16xf32>
    %1055 = arith.mulf %1054, %941 : vector<16x16xf32>
    %1056 = arith.addf %1053, %1055 : vector<16x16xf32>
    %1057 = vector.broadcast %105 : f32 to vector<16x16xf32>
    %1058 = arith.mulf %1057, %977 : vector<16x16xf32>
    %1059 = arith.addf %1056, %1058 : vector<16x16xf32>
    %1060 = vector.broadcast %108 : f32 to vector<16x16xf32>
    %1061 = arith.mulf %1060, %1013 : vector<16x16xf32>
    %1062 = arith.addf %1059, %1061 : vector<16x16xf32>
    %1063 = vector.broadcast %111 : f32 to vector<16x16xf32>
    %1064 = arith.mulf %1063, %944 : vector<16x16xf32>
    %1065 = arith.addf %1062, %1064 : vector<16x16xf32>
    %1066 = vector.broadcast %114 : f32 to vector<16x16xf32>
    %1067 = arith.mulf %1066, %980 : vector<16x16xf32>
    %1068 = arith.addf %1065, %1067 : vector<16x16xf32>
    %1069 = vector.broadcast %117 : f32 to vector<16x16xf32>
    %1070 = arith.mulf %1069, %1016 : vector<16x16xf32>
    %1071 = arith.addf %1068, %1070 : vector<16x16xf32>
    %1072 = vector.broadcast %120 : f32 to vector<16x16xf32>
    %1073 = arith.mulf %1072, %922 : vector<16x16xf32>
    %1074 = arith.addf %1071, %1073 : vector<16x16xf32>
    %1075 = vector.broadcast %123 : f32 to vector<16x16xf32>
    %1076 = arith.mulf %1075, %924 : vector<16x16xf32>
    %1077 = arith.addf %1074, %1076 : vector<16x16xf32>
    %1078 = vector.broadcast %126 : f32 to vector<16x16xf32>
    %1079 = arith.mulf %1078, %926 : vector<16x16xf32>
    %1080 = arith.addf %1077, %1079 : vector<16x16xf32>
    %1081 = vector.broadcast %129 : f32 to vector<16x16xf32>
    %1082 = arith.mulf %1081, %947 : vector<16x16xf32>
    %1083 = arith.addf %1080, %1082 : vector<16x16xf32>
    %1084 = vector.broadcast %132 : f32 to vector<16x16xf32>
    %1085 = arith.mulf %1084, %983 : vector<16x16xf32>
    %1086 = arith.addf %1083, %1085 : vector<16x16xf32>
    %1087 = vector.broadcast %135 : f32 to vector<16x16xf32>
    %1088 = arith.mulf %1087, %1019 : vector<16x16xf32>
    %1089 = arith.addf %1086, %1088 : vector<16x16xf32>
    %1090 = vector.broadcast %138 : f32 to vector<16x16xf32>
    %1091 = arith.mulf %1090, %953 : vector<16x16xf32>
    %1092 = arith.addf %1089, %1091 : vector<16x16xf32>
    %1093 = vector.broadcast %141 : f32 to vector<16x16xf32>
    %1094 = arith.mulf %1093, %989 : vector<16x16xf32>
    %1095 = arith.addf %1092, %1094 : vector<16x16xf32>
    %1096 = vector.broadcast %144 : f32 to vector<16x16xf32>
    %1097 = arith.mulf %1096, %1025 : vector<16x16xf32>
    %1098 = arith.addf %1095, %1097 : vector<16x16xf32>
    %1099 = vector.broadcast %147 : f32 to vector<16x16xf32>
    %1100 = arith.mulf %1099, %956 : vector<16x16xf32>
    %1101 = arith.addf %1098, %1100 : vector<16x16xf32>
    %1102 = vector.broadcast %150 : f32 to vector<16x16xf32>
    %1103 = arith.mulf %1102, %992 : vector<16x16xf32>
    %1104 = arith.addf %1101, %1103 : vector<16x16xf32>
    %1105 = vector.broadcast %153 : f32 to vector<16x16xf32>
    %1106 = arith.mulf %1105, %1028 : vector<16x16xf32>
    %1107 = arith.addf %1104, %1106 : vector<16x16xf32>
    %1108 = vector.broadcast %156 : f32 to vector<16x16xf32>
    %1109 = arith.mulf %1108, %962 : vector<16x16xf32>
    %1110 = arith.addf %1107, %1109 : vector<16x16xf32>
    %1111 = vector.broadcast %159 : f32 to vector<16x16xf32>
    %1112 = arith.mulf %1111, %998 : vector<16x16xf32>
    %1113 = arith.addf %1110, %1112 : vector<16x16xf32>
    %1114 = vector.broadcast %162 : f32 to vector<16x16xf32>
    %1115 = arith.mulf %1114, %1034 : vector<16x16xf32>
    %1116 = arith.addf %1113, %1115 : vector<16x16xf32>
    %1117 = vector.broadcast %166 : f32 to vector<16x16xf32>
    %1118 = vector.broadcast %85 : f32 to vector<16x16xf32>
    %1119 = arith.mulf %1118, %932 : vector<16x16xf32>
    %1120 = arith.addf %1117, %1119 : vector<16x16xf32>
    %1121 = vector.broadcast %88 : f32 to vector<16x16xf32>
    %1122 = arith.mulf %1121, %968 : vector<16x16xf32>
    %1123 = arith.addf %1120, %1122 : vector<16x16xf32>
    %1124 = vector.broadcast %91 : f32 to vector<16x16xf32>
    %1125 = arith.mulf %1124, %1004 : vector<16x16xf32>
    %1126 = arith.addf %1123, %1125 : vector<16x16xf32>
    %1127 = vector.broadcast %94 : f32 to vector<16x16xf32>
    %1128 = arith.mulf %1127, %935 : vector<16x16xf32>
    %1129 = arith.addf %1126, %1128 : vector<16x16xf32>
    %1130 = vector.broadcast %97 : f32 to vector<16x16xf32>
    %1131 = arith.mulf %1130, %971 : vector<16x16xf32>
    %1132 = arith.addf %1129, %1131 : vector<16x16xf32>
    %1133 = vector.broadcast %100 : f32 to vector<16x16xf32>
    %1134 = arith.mulf %1133, %1007 : vector<16x16xf32>
    %1135 = arith.addf %1132, %1134 : vector<16x16xf32>
    %1136 = vector.broadcast %103 : f32 to vector<16x16xf32>
    %1137 = arith.mulf %1136, %941 : vector<16x16xf32>
    %1138 = arith.addf %1135, %1137 : vector<16x16xf32>
    %1139 = vector.broadcast %106 : f32 to vector<16x16xf32>
    %1140 = arith.mulf %1139, %977 : vector<16x16xf32>
    %1141 = arith.addf %1138, %1140 : vector<16x16xf32>
    %1142 = vector.broadcast %109 : f32 to vector<16x16xf32>
    %1143 = arith.mulf %1142, %1013 : vector<16x16xf32>
    %1144 = arith.addf %1141, %1143 : vector<16x16xf32>
    %1145 = vector.broadcast %112 : f32 to vector<16x16xf32>
    %1146 = arith.mulf %1145, %944 : vector<16x16xf32>
    %1147 = arith.addf %1144, %1146 : vector<16x16xf32>
    %1148 = vector.broadcast %115 : f32 to vector<16x16xf32>
    %1149 = arith.mulf %1148, %980 : vector<16x16xf32>
    %1150 = arith.addf %1147, %1149 : vector<16x16xf32>
    %1151 = vector.broadcast %118 : f32 to vector<16x16xf32>
    %1152 = arith.mulf %1151, %1016 : vector<16x16xf32>
    %1153 = arith.addf %1150, %1152 : vector<16x16xf32>
    %1154 = vector.broadcast %121 : f32 to vector<16x16xf32>
    %1155 = arith.mulf %1154, %922 : vector<16x16xf32>
    %1156 = arith.addf %1153, %1155 : vector<16x16xf32>
    %1157 = vector.broadcast %124 : f32 to vector<16x16xf32>
    %1158 = arith.mulf %1157, %924 : vector<16x16xf32>
    %1159 = arith.addf %1156, %1158 : vector<16x16xf32>
    %1160 = vector.broadcast %127 : f32 to vector<16x16xf32>
    %1161 = arith.mulf %1160, %926 : vector<16x16xf32>
    %1162 = arith.addf %1159, %1161 : vector<16x16xf32>
    %1163 = vector.broadcast %130 : f32 to vector<16x16xf32>
    %1164 = arith.mulf %1163, %947 : vector<16x16xf32>
    %1165 = arith.addf %1162, %1164 : vector<16x16xf32>
    %1166 = vector.broadcast %133 : f32 to vector<16x16xf32>
    %1167 = arith.mulf %1166, %983 : vector<16x16xf32>
    %1168 = arith.addf %1165, %1167 : vector<16x16xf32>
    %1169 = vector.broadcast %136 : f32 to vector<16x16xf32>
    %1170 = arith.mulf %1169, %1019 : vector<16x16xf32>
    %1171 = arith.addf %1168, %1170 : vector<16x16xf32>
    %1172 = vector.broadcast %139 : f32 to vector<16x16xf32>
    %1173 = arith.mulf %1172, %953 : vector<16x16xf32>
    %1174 = arith.addf %1171, %1173 : vector<16x16xf32>
    %1175 = vector.broadcast %142 : f32 to vector<16x16xf32>
    %1176 = arith.mulf %1175, %989 : vector<16x16xf32>
    %1177 = arith.addf %1174, %1176 : vector<16x16xf32>
    %1178 = vector.broadcast %145 : f32 to vector<16x16xf32>
    %1179 = arith.mulf %1178, %1025 : vector<16x16xf32>
    %1180 = arith.addf %1177, %1179 : vector<16x16xf32>
    %1181 = vector.broadcast %148 : f32 to vector<16x16xf32>
    %1182 = arith.mulf %1181, %956 : vector<16x16xf32>
    %1183 = arith.addf %1180, %1182 : vector<16x16xf32>
    %1184 = vector.broadcast %151 : f32 to vector<16x16xf32>
    %1185 = arith.mulf %1184, %992 : vector<16x16xf32>
    %1186 = arith.addf %1183, %1185 : vector<16x16xf32>
    %1187 = vector.broadcast %154 : f32 to vector<16x16xf32>
    %1188 = arith.mulf %1187, %1028 : vector<16x16xf32>
    %1189 = arith.addf %1186, %1188 : vector<16x16xf32>
    %1190 = vector.broadcast %157 : f32 to vector<16x16xf32>
    %1191 = arith.mulf %1190, %962 : vector<16x16xf32>
    %1192 = arith.addf %1189, %1191 : vector<16x16xf32>
    %1193 = vector.broadcast %160 : f32 to vector<16x16xf32>
    %1194 = arith.mulf %1193, %998 : vector<16x16xf32>
    %1195 = arith.addf %1192, %1194 : vector<16x16xf32>
    %1196 = vector.broadcast %163 : f32 to vector<16x16xf32>
    %1197 = arith.mulf %1196, %1034 : vector<16x16xf32>
    %1198 = arith.addf %1195, %1197 : vector<16x16xf32>
    %1199 = vector.broadcast %167 : f32 to vector<16x16xf32>
    %1200 = vector.broadcast %86 : f32 to vector<16x16xf32>
    %1201 = arith.mulf %1200, %932 : vector<16x16xf32>
    %1202 = arith.addf %1199, %1201 : vector<16x16xf32>
    %1203 = vector.broadcast %89 : f32 to vector<16x16xf32>
    %1204 = arith.mulf %1203, %968 : vector<16x16xf32>
    %1205 = arith.addf %1202, %1204 : vector<16x16xf32>
    %1206 = vector.broadcast %92 : f32 to vector<16x16xf32>
    %1207 = arith.mulf %1206, %1004 : vector<16x16xf32>
    %1208 = arith.addf %1205, %1207 : vector<16x16xf32>
    %1209 = vector.broadcast %95 : f32 to vector<16x16xf32>
    %1210 = arith.mulf %1209, %935 : vector<16x16xf32>
    %1211 = arith.addf %1208, %1210 : vector<16x16xf32>
    %1212 = vector.broadcast %98 : f32 to vector<16x16xf32>
    %1213 = arith.mulf %1212, %971 : vector<16x16xf32>
    %1214 = arith.addf %1211, %1213 : vector<16x16xf32>
    %1215 = vector.broadcast %101 : f32 to vector<16x16xf32>
    %1216 = arith.mulf %1215, %1007 : vector<16x16xf32>
    %1217 = arith.addf %1214, %1216 : vector<16x16xf32>
    %1218 = vector.broadcast %104 : f32 to vector<16x16xf32>
    %1219 = arith.mulf %1218, %941 : vector<16x16xf32>
    %1220 = arith.addf %1217, %1219 : vector<16x16xf32>
    %1221 = vector.broadcast %107 : f32 to vector<16x16xf32>
    %1222 = arith.mulf %1221, %977 : vector<16x16xf32>
    %1223 = arith.addf %1220, %1222 : vector<16x16xf32>
    %1224 = vector.broadcast %110 : f32 to vector<16x16xf32>
    %1225 = arith.mulf %1224, %1013 : vector<16x16xf32>
    %1226 = arith.addf %1223, %1225 : vector<16x16xf32>
    %1227 = vector.broadcast %113 : f32 to vector<16x16xf32>
    %1228 = arith.mulf %1227, %944 : vector<16x16xf32>
    %1229 = arith.addf %1226, %1228 : vector<16x16xf32>
    %1230 = vector.broadcast %116 : f32 to vector<16x16xf32>
    %1231 = arith.mulf %1230, %980 : vector<16x16xf32>
    %1232 = arith.addf %1229, %1231 : vector<16x16xf32>
    %1233 = vector.broadcast %119 : f32 to vector<16x16xf32>
    %1234 = arith.mulf %1233, %1016 : vector<16x16xf32>
    %1235 = arith.addf %1232, %1234 : vector<16x16xf32>
    %1236 = vector.broadcast %122 : f32 to vector<16x16xf32>
    %1237 = arith.mulf %1236, %922 : vector<16x16xf32>
    %1238 = arith.addf %1235, %1237 : vector<16x16xf32>
    %1239 = vector.broadcast %125 : f32 to vector<16x16xf32>
    %1240 = arith.mulf %1239, %924 : vector<16x16xf32>
    %1241 = arith.addf %1238, %1240 : vector<16x16xf32>
    %1242 = vector.broadcast %128 : f32 to vector<16x16xf32>
    %1243 = arith.mulf %1242, %926 : vector<16x16xf32>
    %1244 = arith.addf %1241, %1243 : vector<16x16xf32>
    %1245 = vector.broadcast %131 : f32 to vector<16x16xf32>
    %1246 = arith.mulf %1245, %947 : vector<16x16xf32>
    %1247 = arith.addf %1244, %1246 : vector<16x16xf32>
    %1248 = vector.broadcast %134 : f32 to vector<16x16xf32>
    %1249 = arith.mulf %1248, %983 : vector<16x16xf32>
    %1250 = arith.addf %1247, %1249 : vector<16x16xf32>
    %1251 = vector.broadcast %137 : f32 to vector<16x16xf32>
    %1252 = arith.mulf %1251, %1019 : vector<16x16xf32>
    %1253 = arith.addf %1250, %1252 : vector<16x16xf32>
    %1254 = vector.broadcast %140 : f32 to vector<16x16xf32>
    %1255 = arith.mulf %1254, %953 : vector<16x16xf32>
    %1256 = arith.addf %1253, %1255 : vector<16x16xf32>
    %1257 = vector.broadcast %143 : f32 to vector<16x16xf32>
    %1258 = arith.mulf %1257, %989 : vector<16x16xf32>
    %1259 = arith.addf %1256, %1258 : vector<16x16xf32>
    %1260 = vector.broadcast %146 : f32 to vector<16x16xf32>
    %1261 = arith.mulf %1260, %1025 : vector<16x16xf32>
    %1262 = arith.addf %1259, %1261 : vector<16x16xf32>
    %1263 = vector.broadcast %149 : f32 to vector<16x16xf32>
    %1264 = arith.mulf %1263, %956 : vector<16x16xf32>
    %1265 = arith.addf %1262, %1264 : vector<16x16xf32>
    %1266 = vector.broadcast %152 : f32 to vector<16x16xf32>
    %1267 = arith.mulf %1266, %992 : vector<16x16xf32>
    %1268 = arith.addf %1265, %1267 : vector<16x16xf32>
    %1269 = vector.broadcast %155 : f32 to vector<16x16xf32>
    %1270 = arith.mulf %1269, %1028 : vector<16x16xf32>
    %1271 = arith.addf %1268, %1270 : vector<16x16xf32>
    %1272 = vector.broadcast %158 : f32 to vector<16x16xf32>
    %1273 = arith.mulf %1272, %962 : vector<16x16xf32>
    %1274 = arith.addf %1271, %1273 : vector<16x16xf32>
    %1275 = vector.broadcast %161 : f32 to vector<16x16xf32>
    %1276 = arith.mulf %1275, %998 : vector<16x16xf32>
    %1277 = arith.addf %1274, %1276 : vector<16x16xf32>
    %1278 = vector.broadcast %164 : f32 to vector<16x16xf32>
    %1279 = arith.mulf %1278, %1034 : vector<16x16xf32>
    %1280 = arith.addf %1277, %1279 : vector<16x16xf32>
    %cst_242 = arith.constant dense<0.000000e+00> : vector<16x16xf32>
    %1281 = tpu.matmul %1116, %363, %cst_242 {dimension_numbers = #tpu.dot_dimension_numbers<[0], [0], [1], [1], [0, 1, 1, 1], [], []>} : vector<16x16xf32>, vector<16x16xf32>, vector<16x16xf32> -> vector<16x16xf32>
    %1282 = arith.negf %1281 : vector<16x16xf32>
    %1283 = math.exp %1282 : vector<16x16xf32>
    %cst_243 = arith.constant 1.000000e+00 : f32
    %1284 = vector.broadcast %cst_243 : f32 to vector<16x16xf32>
    %1285 = arith.addf %1284, %1283 : vector<16x16xf32>
    %1286 = arith.divf %1284, %1285 : vector<16x16xf32>
    %1287 = arith.mulf %1286, %922 : vector<16x16xf32>
    %1288 = arith.addf %901, %1287 : vector<16x16xf32>
    %1289 = arith.addf %902, %1286 : vector<16x16xf32>
    %cst_244 = arith.constant dense<0.000000e+00> : vector<16x16xf32>
    %1290 = tpu.matmul %1198, %445, %cst_244 {dimension_numbers = #tpu.dot_dimension_numbers<[0], [0], [1], [1], [0, 1, 1, 1], [], []>} : vector<16x16xf32>, vector<16x16xf32>, vector<16x16xf32> -> vector<16x16xf32>
    %1291 = arith.negf %1290 : vector<16x16xf32>
    %1292 = math.exp %1291 : vector<16x16xf32>
    %cst_245 = arith.constant 1.000000e+00 : f32
    %1293 = vector.broadcast %cst_245 : f32 to vector<16x16xf32>
    %1294 = arith.addf %1293, %1292 : vector<16x16xf32>
    %1295 = arith.divf %1293, %1294 : vector<16x16xf32>
    %1296 = arith.mulf %1295, %924 : vector<16x16xf32>
    %1297 = arith.addf %910, %1296 : vector<16x16xf32>
    %1298 = arith.addf %911, %1295 : vector<16x16xf32>
    %cst_246 = arith.constant dense<0.000000e+00> : vector<16x16xf32>
    %1299 = tpu.matmul %1280, %527, %cst_246 {dimension_numbers = #tpu.dot_dimension_numbers<[0], [0], [1], [1], [0, 1, 1, 1], [], []>} : vector<16x16xf32>, vector<16x16xf32>, vector<16x16xf32> -> vector<16x16xf32>
    %1300 = arith.negf %1299 : vector<16x16xf32>
    %1301 = math.exp %1300 : vector<16x16xf32>
    %cst_247 = arith.constant 1.000000e+00 : f32
    %1302 = vector.broadcast %cst_247 : f32 to vector<16x16xf32>
    %1303 = arith.addf %1302, %1301 : vector<16x16xf32>
    %1304 = arith.divf %1302, %1303 : vector<16x16xf32>
    %1305 = arith.mulf %1304, %926 : vector<16x16xf32>
    %1306 = arith.addf %919, %1305 : vector<16x16xf32>
    %1307 = arith.addf %920, %1304 : vector<16x16xf32>
    %c0_248 = arith.constant 0 : index
    %c6_249 = arith.constant 6 : index
    %c0_250 = arith.constant 0 : index
    %c0_251 = arith.constant 0 : index
    %1308 = vector.load %arg2[%c0_248, %c6_249, %c0_250, %c0_251] : memref<1x9x16x16xf32, #tpu.memory_space<vmem>>, vector<1x1x16x16xf32>
    %1309 = vector.shape_cast %1308 : vector<1x1x16x16xf32> to vector<16x16xf32>
    %c0_252 = arith.constant 0 : index
    %c7_253 = arith.constant 7 : index
    %c0_254 = arith.constant 0 : index
    %c0_255 = arith.constant 0 : index
    %1310 = vector.load %arg2[%c0_252, %c7_253, %c0_254, %c0_255] : memref<1x9x16x16xf32, #tpu.memory_space<vmem>>, vector<1x1x16x16xf32>
    %1311 = vector.shape_cast %1310 : vector<1x1x16x16xf32> to vector<16x16xf32>
    %c0_256 = arith.constant 0 : index
    %c8_257 = arith.constant 8 : index
    %c0_258 = arith.constant 0 : index
    %c0_259 = arith.constant 0 : index
    %1312 = vector.load %arg2[%c0_256, %c8_257, %c0_258, %c0_259] : memref<1x9x16x16xf32, #tpu.memory_space<vmem>>, vector<1x1x16x16xf32>
    %1313 = vector.shape_cast %1312 : vector<1x1x16x16xf32> to vector<16x16xf32>
    %cst_260 = arith.constant 0.000000e+00 : f32
    %1314 = vector.broadcast %cst_260 : f32 to vector<1x16xf32>
    %1315 = vector.extract_strided_slice %1309 {offsets = [0, 0], sizes = [15, 16], strides = [1, 1]} : vector<16x16xf32> to vector<15x16xf32>
    %1316 = tpu.concatenate %1314, %1315 in 0 : vector<1x16xf32>, vector<15x16xf32> -> vector<16x16xf32>
    %cst_261 = arith.constant 0.000000e+00 : f32
    %1317 = vector.broadcast %cst_261 : f32 to vector<16x1xf32>
    %1318 = vector.extract_strided_slice %1316 {offsets = [0, 0], sizes = [16, 15], strides = [1, 1]} : vector<16x16xf32> to vector<16x15xf32>
    %1319 = tpu.concatenate %1317, %1318 in 1 : vector<16x1xf32>, vector<16x15xf32> -> vector<16x16xf32>
    %cst_262 = arith.constant 0.000000e+00 : f32
    %1320 = vector.broadcast %cst_262 : f32 to vector<1x16xf32>
    %1321 = vector.extract_strided_slice %1309 {offsets = [0, 0], sizes = [15, 16], strides = [1, 1]} : vector<16x16xf32> to vector<15x16xf32>
    %1322 = tpu.concatenate %1320, %1321 in 0 : vector<1x16xf32>, vector<15x16xf32> -> vector<16x16xf32>
    %cst_263 = arith.constant 0.000000e+00 : f32
    %1323 = vector.broadcast %cst_263 : f32 to vector<1x16xf32>
    %1324 = vector.extract_strided_slice %1309 {offsets = [0, 0], sizes = [15, 16], strides = [1, 1]} : vector<16x16xf32> to vector<15x16xf32>
    %1325 = tpu.concatenate %1323, %1324 in 0 : vector<1x16xf32>, vector<15x16xf32> -> vector<16x16xf32>
    %1326 = vector.extract_strided_slice %1325 {offsets = [0, 1], sizes = [16, 15], strides = [1, 1]} : vector<16x16xf32> to vector<16x15xf32>
    %cst_264 = arith.constant 0.000000e+00 : f32
    %1327 = vector.broadcast %cst_264 : f32 to vector<16x1xf32>
    %1328 = tpu.concatenate %1326, %1327 in 1 : vector<16x15xf32>, vector<16x1xf32> -> vector<16x16xf32>
    %cst_265 = arith.constant 0.000000e+00 : f32
    %1329 = vector.broadcast %cst_265 : f32 to vector<16x1xf32>
    %1330 = vector.extract_strided_slice %1309 {offsets = [0, 0], sizes = [16, 15], strides = [1, 1]} : vector<16x16xf32> to vector<16x15xf32>
    %1331 = tpu.concatenate %1329, %1330 in 1 : vector<16x1xf32>, vector<16x15xf32> -> vector<16x16xf32>
    %1332 = vector.extract_strided_slice %1309 {offsets = [0, 1], sizes = [16, 15], strides = [1, 1]} : vector<16x16xf32> to vector<16x15xf32>
    %cst_266 = arith.constant 0.000000e+00 : f32
    %1333 = vector.broadcast %cst_266 : f32 to vector<16x1xf32>
    %1334 = tpu.concatenate %1332, %1333 in 1 : vector<16x15xf32>, vector<16x1xf32> -> vector<16x16xf32>
    %1335 = vector.extract_strided_slice %1309 {offsets = [1, 0], sizes = [15, 16], strides = [1, 1]} : vector<16x16xf32> to vector<15x16xf32>
    %cst_267 = arith.constant 0.000000e+00 : f32
    %1336 = vector.broadcast %cst_267 : f32 to vector<1x16xf32>
    %1337 = tpu.concatenate %1335, %1336 in 0 : vector<15x16xf32>, vector<1x16xf32> -> vector<16x16xf32>
    %cst_268 = arith.constant 0.000000e+00 : f32
    %1338 = vector.broadcast %cst_268 : f32 to vector<16x1xf32>
    %1339 = vector.extract_strided_slice %1337 {offsets = [0, 0], sizes = [16, 15], strides = [1, 1]} : vector<16x16xf32> to vector<16x15xf32>
    %1340 = tpu.concatenate %1338, %1339 in 1 : vector<16x1xf32>, vector<16x15xf32> -> vector<16x16xf32>
    %1341 = vector.extract_strided_slice %1309 {offsets = [1, 0], sizes = [15, 16], strides = [1, 1]} : vector<16x16xf32> to vector<15x16xf32>
    %cst_269 = arith.constant 0.000000e+00 : f32
    %1342 = vector.broadcast %cst_269 : f32 to vector<1x16xf32>
    %1343 = tpu.concatenate %1341, %1342 in 0 : vector<15x16xf32>, vector<1x16xf32> -> vector<16x16xf32>
    %1344 = vector.extract_strided_slice %1309 {offsets = [1, 0], sizes = [15, 16], strides = [1, 1]} : vector<16x16xf32> to vector<15x16xf32>
    %cst_270 = arith.constant 0.000000e+00 : f32
    %1345 = vector.broadcast %cst_270 : f32 to vector<1x16xf32>
    %1346 = tpu.concatenate %1344, %1345 in 0 : vector<15x16xf32>, vector<1x16xf32> -> vector<16x16xf32>
    %1347 = vector.extract_strided_slice %1346 {offsets = [0, 1], sizes = [16, 15], strides = [1, 1]} : vector<16x16xf32> to vector<16x15xf32>
    %cst_271 = arith.constant 0.000000e+00 : f32
    %1348 = vector.broadcast %cst_271 : f32 to vector<16x1xf32>
    %1349 = tpu.concatenate %1347, %1348 in 1 : vector<16x15xf32>, vector<16x1xf32> -> vector<16x16xf32>
    %cst_272 = arith.constant 0.000000e+00 : f32
    %1350 = vector.broadcast %cst_272 : f32 to vector<1x16xf32>
    %1351 = vector.extract_strided_slice %1311 {offsets = [0, 0], sizes = [15, 16], strides = [1, 1]} : vector<16x16xf32> to vector<15x16xf32>
    %1352 = tpu.concatenate %1350, %1351 in 0 : vector<1x16xf32>, vector<15x16xf32> -> vector<16x16xf32>
    %cst_273 = arith.constant 0.000000e+00 : f32
    %1353 = vector.broadcast %cst_273 : f32 to vector<16x1xf32>
    %1354 = vector.extract_strided_slice %1352 {offsets = [0, 0], sizes = [16, 15], strides = [1, 1]} : vector<16x16xf32> to vector<16x15xf32>
    %1355 = tpu.concatenate %1353, %1354 in 1 : vector<16x1xf32>, vector<16x15xf32> -> vector<16x16xf32>
    %cst_274 = arith.constant 0.000000e+00 : f32
    %1356 = vector.broadcast %cst_274 : f32 to vector<1x16xf32>
    %1357 = vector.extract_strided_slice %1311 {offsets = [0, 0], sizes = [15, 16], strides = [1, 1]} : vector<16x16xf32> to vector<15x16xf32>
    %1358 = tpu.concatenate %1356, %1357 in 0 : vector<1x16xf32>, vector<15x16xf32> -> vector<16x16xf32>
    %cst_275 = arith.constant 0.000000e+00 : f32
    %1359 = vector.broadcast %cst_275 : f32 to vector<1x16xf32>
    %1360 = vector.extract_strided_slice %1311 {offsets = [0, 0], sizes = [15, 16], strides = [1, 1]} : vector<16x16xf32> to vector<15x16xf32>
    %1361 = tpu.concatenate %1359, %1360 in 0 : vector<1x16xf32>, vector<15x16xf32> -> vector<16x16xf32>
    %1362 = vector.extract_strided_slice %1361 {offsets = [0, 1], sizes = [16, 15], strides = [1, 1]} : vector<16x16xf32> to vector<16x15xf32>
    %cst_276 = arith.constant 0.000000e+00 : f32
    %1363 = vector.broadcast %cst_276 : f32 to vector<16x1xf32>
    %1364 = tpu.concatenate %1362, %1363 in 1 : vector<16x15xf32>, vector<16x1xf32> -> vector<16x16xf32>
    %cst_277 = arith.constant 0.000000e+00 : f32
    %1365 = vector.broadcast %cst_277 : f32 to vector<16x1xf32>
    %1366 = vector.extract_strided_slice %1311 {offsets = [0, 0], sizes = [16, 15], strides = [1, 1]} : vector<16x16xf32> to vector<16x15xf32>
    %1367 = tpu.concatenate %1365, %1366 in 1 : vector<16x1xf32>, vector<16x15xf32> -> vector<16x16xf32>
    %1368 = vector.extract_strided_slice %1311 {offsets = [0, 1], sizes = [16, 15], strides = [1, 1]} : vector<16x16xf32> to vector<16x15xf32>
    %cst_278 = arith.constant 0.000000e+00 : f32
    %1369 = vector.broadcast %cst_278 : f32 to vector<16x1xf32>
    %1370 = tpu.concatenate %1368, %1369 in 1 : vector<16x15xf32>, vector<16x1xf32> -> vector<16x16xf32>
    %1371 = vector.extract_strided_slice %1311 {offsets = [1, 0], sizes = [15, 16], strides = [1, 1]} : vector<16x16xf32> to vector<15x16xf32>
    %cst_279 = arith.constant 0.000000e+00 : f32
    %1372 = vector.broadcast %cst_279 : f32 to vector<1x16xf32>
    %1373 = tpu.concatenate %1371, %1372 in 0 : vector<15x16xf32>, vector<1x16xf32> -> vector<16x16xf32>
    %cst_280 = arith.constant 0.000000e+00 : f32
    %1374 = vector.broadcast %cst_280 : f32 to vector<16x1xf32>
    %1375 = vector.extract_strided_slice %1373 {offsets = [0, 0], sizes = [16, 15], strides = [1, 1]} : vector<16x16xf32> to vector<16x15xf32>
    %1376 = tpu.concatenate %1374, %1375 in 1 : vector<16x1xf32>, vector<16x15xf32> -> vector<16x16xf32>
    %1377 = vector.extract_strided_slice %1311 {offsets = [1, 0], sizes = [15, 16], strides = [1, 1]} : vector<16x16xf32> to vector<15x16xf32>
    %cst_281 = arith.constant 0.000000e+00 : f32
    %1378 = vector.broadcast %cst_281 : f32 to vector<1x16xf32>
    %1379 = tpu.concatenate %1377, %1378 in 0 : vector<15x16xf32>, vector<1x16xf32> -> vector<16x16xf32>
    %1380 = vector.extract_strided_slice %1311 {offsets = [1, 0], sizes = [15, 16], strides = [1, 1]} : vector<16x16xf32> to vector<15x16xf32>
    %cst_282 = arith.constant 0.000000e+00 : f32
    %1381 = vector.broadcast %cst_282 : f32 to vector<1x16xf32>
    %1382 = tpu.concatenate %1380, %1381 in 0 : vector<15x16xf32>, vector<1x16xf32> -> vector<16x16xf32>
    %1383 = vector.extract_strided_slice %1382 {offsets = [0, 1], sizes = [16, 15], strides = [1, 1]} : vector<16x16xf32> to vector<16x15xf32>
    %cst_283 = arith.constant 0.000000e+00 : f32
    %1384 = vector.broadcast %cst_283 : f32 to vector<16x1xf32>
    %1385 = tpu.concatenate %1383, %1384 in 1 : vector<16x15xf32>, vector<16x1xf32> -> vector<16x16xf32>
    %cst_284 = arith.constant 0.000000e+00 : f32
    %1386 = vector.broadcast %cst_284 : f32 to vector<1x16xf32>
    %1387 = vector.extract_strided_slice %1313 {offsets = [0, 0], sizes = [15, 16], strides = [1, 1]} : vector<16x16xf32> to vector<15x16xf32>
    %1388 = tpu.concatenate %1386, %1387 in 0 : vector<1x16xf32>, vector<15x16xf32> -> vector<16x16xf32>
    %cst_285 = arith.constant 0.000000e+00 : f32
    %1389 = vector.broadcast %cst_285 : f32 to vector<16x1xf32>
    %1390 = vector.extract_strided_slice %1388 {offsets = [0, 0], sizes = [16, 15], strides = [1, 1]} : vector<16x16xf32> to vector<16x15xf32>
    %1391 = tpu.concatenate %1389, %1390 in 1 : vector<16x1xf32>, vector<16x15xf32> -> vector<16x16xf32>
    %cst_286 = arith.constant 0.000000e+00 : f32
    %1392 = vector.broadcast %cst_286 : f32 to vector<1x16xf32>
    %1393 = vector.extract_strided_slice %1313 {offsets = [0, 0], sizes = [15, 16], strides = [1, 1]} : vector<16x16xf32> to vector<15x16xf32>
    %1394 = tpu.concatenate %1392, %1393 in 0 : vector<1x16xf32>, vector<15x16xf32> -> vector<16x16xf32>
    %cst_287 = arith.constant 0.000000e+00 : f32
    %1395 = vector.broadcast %cst_287 : f32 to vector<1x16xf32>
    %1396 = vector.extract_strided_slice %1313 {offsets = [0, 0], sizes = [15, 16], strides = [1, 1]} : vector<16x16xf32> to vector<15x16xf32>
    %1397 = tpu.concatenate %1395, %1396 in 0 : vector<1x16xf32>, vector<15x16xf32> -> vector<16x16xf32>
    %1398 = vector.extract_strided_slice %1397 {offsets = [0, 1], sizes = [16, 15], strides = [1, 1]} : vector<16x16xf32> to vector<16x15xf32>
    %cst_288 = arith.constant 0.000000e+00 : f32
    %1399 = vector.broadcast %cst_288 : f32 to vector<16x1xf32>
    %1400 = tpu.concatenate %1398, %1399 in 1 : vector<16x15xf32>, vector<16x1xf32> -> vector<16x16xf32>
    %cst_289 = arith.constant 0.000000e+00 : f32
    %1401 = vector.broadcast %cst_289 : f32 to vector<16x1xf32>
    %1402 = vector.extract_strided_slice %1313 {offsets = [0, 0], sizes = [16, 15], strides = [1, 1]} : vector<16x16xf32> to vector<16x15xf32>
    %1403 = tpu.concatenate %1401, %1402 in 1 : vector<16x1xf32>, vector<16x15xf32> -> vector<16x16xf32>
    %1404 = vector.extract_strided_slice %1313 {offsets = [0, 1], sizes = [16, 15], strides = [1, 1]} : vector<16x16xf32> to vector<16x15xf32>
    %cst_290 = arith.constant 0.000000e+00 : f32
    %1405 = vector.broadcast %cst_290 : f32 to vector<16x1xf32>
    %1406 = tpu.concatenate %1404, %1405 in 1 : vector<16x15xf32>, vector<16x1xf32> -> vector<16x16xf32>
    %1407 = vector.extract_strided_slice %1313 {offsets = [1, 0], sizes = [15, 16], strides = [1, 1]} : vector<16x16xf32> to vector<15x16xf32>
    %cst_291 = arith.constant 0.000000e+00 : f32
    %1408 = vector.broadcast %cst_291 : f32 to vector<1x16xf32>
    %1409 = tpu.concatenate %1407, %1408 in 0 : vector<15x16xf32>, vector<1x16xf32> -> vector<16x16xf32>
    %cst_292 = arith.constant 0.000000e+00 : f32
    %1410 = vector.broadcast %cst_292 : f32 to vector<16x1xf32>
    %1411 = vector.extract_strided_slice %1409 {offsets = [0, 0], sizes = [16, 15], strides = [1, 1]} : vector<16x16xf32> to vector<16x15xf32>
    %1412 = tpu.concatenate %1410, %1411 in 1 : vector<16x1xf32>, vector<16x15xf32> -> vector<16x16xf32>
    %1413 = vector.extract_strided_slice %1313 {offsets = [1, 0], sizes = [15, 16], strides = [1, 1]} : vector<16x16xf32> to vector<15x16xf32>
    %cst_293 = arith.constant 0.000000e+00 : f32
    %1414 = vector.broadcast %cst_293 : f32 to vector<1x16xf32>
    %1415 = tpu.concatenate %1413, %1414 in 0 : vector<15x16xf32>, vector<1x16xf32> -> vector<16x16xf32>
    %1416 = vector.extract_strided_slice %1313 {offsets = [1, 0], sizes = [15, 16], strides = [1, 1]} : vector<16x16xf32> to vector<15x16xf32>
    %cst_294 = arith.constant 0.000000e+00 : f32
    %1417 = vector.broadcast %cst_294 : f32 to vector<1x16xf32>
    %1418 = tpu.concatenate %1416, %1417 in 0 : vector<15x16xf32>, vector<1x16xf32> -> vector<16x16xf32>
    %1419 = vector.extract_strided_slice %1418 {offsets = [0, 1], sizes = [16, 15], strides = [1, 1]} : vector<16x16xf32> to vector<16x15xf32>
    %cst_295 = arith.constant 0.000000e+00 : f32
    %1420 = vector.broadcast %cst_295 : f32 to vector<16x1xf32>
    %1421 = tpu.concatenate %1419, %1420 in 1 : vector<16x15xf32>, vector<16x1xf32> -> vector<16x16xf32>
    %1422 = vector.broadcast %165 : f32 to vector<16x16xf32>
    %1423 = vector.broadcast %84 : f32 to vector<16x16xf32>
    %1424 = arith.mulf %1423, %1319 : vector<16x16xf32>
    %1425 = arith.addf %1422, %1424 : vector<16x16xf32>
    %1426 = vector.broadcast %87 : f32 to vector<16x16xf32>
    %1427 = arith.mulf %1426, %1355 : vector<16x16xf32>
    %1428 = arith.addf %1425, %1427 : vector<16x16xf32>
    %1429 = vector.broadcast %90 : f32 to vector<16x16xf32>
    %1430 = arith.mulf %1429, %1391 : vector<16x16xf32>
    %1431 = arith.addf %1428, %1430 : vector<16x16xf32>
    %1432 = vector.broadcast %93 : f32 to vector<16x16xf32>
    %1433 = arith.mulf %1432, %1322 : vector<16x16xf32>
    %1434 = arith.addf %1431, %1433 : vector<16x16xf32>
    %1435 = vector.broadcast %96 : f32 to vector<16x16xf32>
    %1436 = arith.mulf %1435, %1358 : vector<16x16xf32>
    %1437 = arith.addf %1434, %1436 : vector<16x16xf32>
    %1438 = vector.broadcast %99 : f32 to vector<16x16xf32>
    %1439 = arith.mulf %1438, %1394 : vector<16x16xf32>
    %1440 = arith.addf %1437, %1439 : vector<16x16xf32>
    %1441 = vector.broadcast %102 : f32 to vector<16x16xf32>
    %1442 = arith.mulf %1441, %1328 : vector<16x16xf32>
    %1443 = arith.addf %1440, %1442 : vector<16x16xf32>
    %1444 = vector.broadcast %105 : f32 to vector<16x16xf32>
    %1445 = arith.mulf %1444, %1364 : vector<16x16xf32>
    %1446 = arith.addf %1443, %1445 : vector<16x16xf32>
    %1447 = vector.broadcast %108 : f32 to vector<16x16xf32>
    %1448 = arith.mulf %1447, %1400 : vector<16x16xf32>
    %1449 = arith.addf %1446, %1448 : vector<16x16xf32>
    %1450 = vector.broadcast %111 : f32 to vector<16x16xf32>
    %1451 = arith.mulf %1450, %1331 : vector<16x16xf32>
    %1452 = arith.addf %1449, %1451 : vector<16x16xf32>
    %1453 = vector.broadcast %114 : f32 to vector<16x16xf32>
    %1454 = arith.mulf %1453, %1367 : vector<16x16xf32>
    %1455 = arith.addf %1452, %1454 : vector<16x16xf32>
    %1456 = vector.broadcast %117 : f32 to vector<16x16xf32>
    %1457 = arith.mulf %1456, %1403 : vector<16x16xf32>
    %1458 = arith.addf %1455, %1457 : vector<16x16xf32>
    %1459 = vector.broadcast %120 : f32 to vector<16x16xf32>
    %1460 = arith.mulf %1459, %1309 : vector<16x16xf32>
    %1461 = arith.addf %1458, %1460 : vector<16x16xf32>
    %1462 = vector.broadcast %123 : f32 to vector<16x16xf32>
    %1463 = arith.mulf %1462, %1311 : vector<16x16xf32>
    %1464 = arith.addf %1461, %1463 : vector<16x16xf32>
    %1465 = vector.broadcast %126 : f32 to vector<16x16xf32>
    %1466 = arith.mulf %1465, %1313 : vector<16x16xf32>
    %1467 = arith.addf %1464, %1466 : vector<16x16xf32>
    %1468 = vector.broadcast %129 : f32 to vector<16x16xf32>
    %1469 = arith.mulf %1468, %1334 : vector<16x16xf32>
    %1470 = arith.addf %1467, %1469 : vector<16x16xf32>
    %1471 = vector.broadcast %132 : f32 to vector<16x16xf32>
    %1472 = arith.mulf %1471, %1370 : vector<16x16xf32>
    %1473 = arith.addf %1470, %1472 : vector<16x16xf32>
    %1474 = vector.broadcast %135 : f32 to vector<16x16xf32>
    %1475 = arith.mulf %1474, %1406 : vector<16x16xf32>
    %1476 = arith.addf %1473, %1475 : vector<16x16xf32>
    %1477 = vector.broadcast %138 : f32 to vector<16x16xf32>
    %1478 = arith.mulf %1477, %1340 : vector<16x16xf32>
    %1479 = arith.addf %1476, %1478 : vector<16x16xf32>
    %1480 = vector.broadcast %141 : f32 to vector<16x16xf32>
    %1481 = arith.mulf %1480, %1376 : vector<16x16xf32>
    %1482 = arith.addf %1479, %1481 : vector<16x16xf32>
    %1483 = vector.broadcast %144 : f32 to vector<16x16xf32>
    %1484 = arith.mulf %1483, %1412 : vector<16x16xf32>
    %1485 = arith.addf %1482, %1484 : vector<16x16xf32>
    %1486 = vector.broadcast %147 : f32 to vector<16x16xf32>
    %1487 = arith.mulf %1486, %1343 : vector<16x16xf32>
    %1488 = arith.addf %1485, %1487 : vector<16x16xf32>
    %1489 = vector.broadcast %150 : f32 to vector<16x16xf32>
    %1490 = arith.mulf %1489, %1379 : vector<16x16xf32>
    %1491 = arith.addf %1488, %1490 : vector<16x16xf32>
    %1492 = vector.broadcast %153 : f32 to vector<16x16xf32>
    %1493 = arith.mulf %1492, %1415 : vector<16x16xf32>
    %1494 = arith.addf %1491, %1493 : vector<16x16xf32>
    %1495 = vector.broadcast %156 : f32 to vector<16x16xf32>
    %1496 = arith.mulf %1495, %1349 : vector<16x16xf32>
    %1497 = arith.addf %1494, %1496 : vector<16x16xf32>
    %1498 = vector.broadcast %159 : f32 to vector<16x16xf32>
    %1499 = arith.mulf %1498, %1385 : vector<16x16xf32>
    %1500 = arith.addf %1497, %1499 : vector<16x16xf32>
    %1501 = vector.broadcast %162 : f32 to vector<16x16xf32>
    %1502 = arith.mulf %1501, %1421 : vector<16x16xf32>
    %1503 = arith.addf %1500, %1502 : vector<16x16xf32>
    %1504 = vector.broadcast %166 : f32 to vector<16x16xf32>
    %1505 = vector.broadcast %85 : f32 to vector<16x16xf32>
    %1506 = arith.mulf %1505, %1319 : vector<16x16xf32>
    %1507 = arith.addf %1504, %1506 : vector<16x16xf32>
    %1508 = vector.broadcast %88 : f32 to vector<16x16xf32>
    %1509 = arith.mulf %1508, %1355 : vector<16x16xf32>
    %1510 = arith.addf %1507, %1509 : vector<16x16xf32>
    %1511 = vector.broadcast %91 : f32 to vector<16x16xf32>
    %1512 = arith.mulf %1511, %1391 : vector<16x16xf32>
    %1513 = arith.addf %1510, %1512 : vector<16x16xf32>
    %1514 = vector.broadcast %94 : f32 to vector<16x16xf32>
    %1515 = arith.mulf %1514, %1322 : vector<16x16xf32>
    %1516 = arith.addf %1513, %1515 : vector<16x16xf32>
    %1517 = vector.broadcast %97 : f32 to vector<16x16xf32>
    %1518 = arith.mulf %1517, %1358 : vector<16x16xf32>
    %1519 = arith.addf %1516, %1518 : vector<16x16xf32>
    %1520 = vector.broadcast %100 : f32 to vector<16x16xf32>
    %1521 = arith.mulf %1520, %1394 : vector<16x16xf32>
    %1522 = arith.addf %1519, %1521 : vector<16x16xf32>
    %1523 = vector.broadcast %103 : f32 to vector<16x16xf32>
    %1524 = arith.mulf %1523, %1328 : vector<16x16xf32>
    %1525 = arith.addf %1522, %1524 : vector<16x16xf32>
    %1526 = vector.broadcast %106 : f32 to vector<16x16xf32>
    %1527 = arith.mulf %1526, %1364 : vector<16x16xf32>
    %1528 = arith.addf %1525, %1527 : vector<16x16xf32>
    %1529 = vector.broadcast %109 : f32 to vector<16x16xf32>
    %1530 = arith.mulf %1529, %1400 : vector<16x16xf32>
    %1531 = arith.addf %1528, %1530 : vector<16x16xf32>
    %1532 = vector.broadcast %112 : f32 to vector<16x16xf32>
    %1533 = arith.mulf %1532, %1331 : vector<16x16xf32>
    %1534 = arith.addf %1531, %1533 : vector<16x16xf32>
    %1535 = vector.broadcast %115 : f32 to vector<16x16xf32>
    %1536 = arith.mulf %1535, %1367 : vector<16x16xf32>
    %1537 = arith.addf %1534, %1536 : vector<16x16xf32>
    %1538 = vector.broadcast %118 : f32 to vector<16x16xf32>
    %1539 = arith.mulf %1538, %1403 : vector<16x16xf32>
    %1540 = arith.addf %1537, %1539 : vector<16x16xf32>
    %1541 = vector.broadcast %121 : f32 to vector<16x16xf32>
    %1542 = arith.mulf %1541, %1309 : vector<16x16xf32>
    %1543 = arith.addf %1540, %1542 : vector<16x16xf32>
    %1544 = vector.broadcast %124 : f32 to vector<16x16xf32>
    %1545 = arith.mulf %1544, %1311 : vector<16x16xf32>
    %1546 = arith.addf %1543, %1545 : vector<16x16xf32>
    %1547 = vector.broadcast %127 : f32 to vector<16x16xf32>
    %1548 = arith.mulf %1547, %1313 : vector<16x16xf32>
    %1549 = arith.addf %1546, %1548 : vector<16x16xf32>
    %1550 = vector.broadcast %130 : f32 to vector<16x16xf32>
    %1551 = arith.mulf %1550, %1334 : vector<16x16xf32>
    %1552 = arith.addf %1549, %1551 : vector<16x16xf32>
    %1553 = vector.broadcast %133 : f32 to vector<16x16xf32>
    %1554 = arith.mulf %1553, %1370 : vector<16x16xf32>
    %1555 = arith.addf %1552, %1554 : vector<16x16xf32>
    %1556 = vector.broadcast %136 : f32 to vector<16x16xf32>
    %1557 = arith.mulf %1556, %1406 : vector<16x16xf32>
    %1558 = arith.addf %1555, %1557 : vector<16x16xf32>
    %1559 = vector.broadcast %139 : f32 to vector<16x16xf32>
    %1560 = arith.mulf %1559, %1340 : vector<16x16xf32>
    %1561 = arith.addf %1558, %1560 : vector<16x16xf32>
    %1562 = vector.broadcast %142 : f32 to vector<16x16xf32>
    %1563 = arith.mulf %1562, %1376 : vector<16x16xf32>
    %1564 = arith.addf %1561, %1563 : vector<16x16xf32>
    %1565 = vector.broadcast %145 : f32 to vector<16x16xf32>
    %1566 = arith.mulf %1565, %1412 : vector<16x16xf32>
    %1567 = arith.addf %1564, %1566 : vector<16x16xf32>
    %1568 = vector.broadcast %148 : f32 to vector<16x16xf32>
    %1569 = arith.mulf %1568, %1343 : vector<16x16xf32>
    %1570 = arith.addf %1567, %1569 : vector<16x16xf32>
    %1571 = vector.broadcast %151 : f32 to vector<16x16xf32>
    %1572 = arith.mulf %1571, %1379 : vector<16x16xf32>
    %1573 = arith.addf %1570, %1572 : vector<16x16xf32>
    %1574 = vector.broadcast %154 : f32 to vector<16x16xf32>
    %1575 = arith.mulf %1574, %1415 : vector<16x16xf32>
    %1576 = arith.addf %1573, %1575 : vector<16x16xf32>
    %1577 = vector.broadcast %157 : f32 to vector<16x16xf32>
    %1578 = arith.mulf %1577, %1349 : vector<16x16xf32>
    %1579 = arith.addf %1576, %1578 : vector<16x16xf32>
    %1580 = vector.broadcast %160 : f32 to vector<16x16xf32>
    %1581 = arith.mulf %1580, %1385 : vector<16x16xf32>
    %1582 = arith.addf %1579, %1581 : vector<16x16xf32>
    %1583 = vector.broadcast %163 : f32 to vector<16x16xf32>
    %1584 = arith.mulf %1583, %1421 : vector<16x16xf32>
    %1585 = arith.addf %1582, %1584 : vector<16x16xf32>
    %1586 = vector.broadcast %167 : f32 to vector<16x16xf32>
    %1587 = vector.broadcast %86 : f32 to vector<16x16xf32>
    %1588 = arith.mulf %1587, %1319 : vector<16x16xf32>
    %1589 = arith.addf %1586, %1588 : vector<16x16xf32>
    %1590 = vector.broadcast %89 : f32 to vector<16x16xf32>
    %1591 = arith.mulf %1590, %1355 : vector<16x16xf32>
    %1592 = arith.addf %1589, %1591 : vector<16x16xf32>
    %1593 = vector.broadcast %92 : f32 to vector<16x16xf32>
    %1594 = arith.mulf %1593, %1391 : vector<16x16xf32>
    %1595 = arith.addf %1592, %1594 : vector<16x16xf32>
    %1596 = vector.broadcast %95 : f32 to vector<16x16xf32>
    %1597 = arith.mulf %1596, %1322 : vector<16x16xf32>
    %1598 = arith.addf %1595, %1597 : vector<16x16xf32>
    %1599 = vector.broadcast %98 : f32 to vector<16x16xf32>
    %1600 = arith.mulf %1599, %1358 : vector<16x16xf32>
    %1601 = arith.addf %1598, %1600 : vector<16x16xf32>
    %1602 = vector.broadcast %101 : f32 to vector<16x16xf32>
    %1603 = arith.mulf %1602, %1394 : vector<16x16xf32>
    %1604 = arith.addf %1601, %1603 : vector<16x16xf32>
    %1605 = vector.broadcast %104 : f32 to vector<16x16xf32>
    %1606 = arith.mulf %1605, %1328 : vector<16x16xf32>
    %1607 = arith.addf %1604, %1606 : vector<16x16xf32>
    %1608 = vector.broadcast %107 : f32 to vector<16x16xf32>
    %1609 = arith.mulf %1608, %1364 : vector<16x16xf32>
    %1610 = arith.addf %1607, %1609 : vector<16x16xf32>
    %1611 = vector.broadcast %110 : f32 to vector<16x16xf32>
    %1612 = arith.mulf %1611, %1400 : vector<16x16xf32>
    %1613 = arith.addf %1610, %1612 : vector<16x16xf32>
    %1614 = vector.broadcast %113 : f32 to vector<16x16xf32>
    %1615 = arith.mulf %1614, %1331 : vector<16x16xf32>
    %1616 = arith.addf %1613, %1615 : vector<16x16xf32>
    %1617 = vector.broadcast %116 : f32 to vector<16x16xf32>
    %1618 = arith.mulf %1617, %1367 : vector<16x16xf32>
    %1619 = arith.addf %1616, %1618 : vector<16x16xf32>
    %1620 = vector.broadcast %119 : f32 to vector<16x16xf32>
    %1621 = arith.mulf %1620, %1403 : vector<16x16xf32>
    %1622 = arith.addf %1619, %1621 : vector<16x16xf32>
    %1623 = vector.broadcast %122 : f32 to vector<16x16xf32>
    %1624 = arith.mulf %1623, %1309 : vector<16x16xf32>
    %1625 = arith.addf %1622, %1624 : vector<16x16xf32>
    %1626 = vector.broadcast %125 : f32 to vector<16x16xf32>
    %1627 = arith.mulf %1626, %1311 : vector<16x16xf32>
    %1628 = arith.addf %1625, %1627 : vector<16x16xf32>
    %1629 = vector.broadcast %128 : f32 to vector<16x16xf32>
    %1630 = arith.mulf %1629, %1313 : vector<16x16xf32>
    %1631 = arith.addf %1628, %1630 : vector<16x16xf32>
    %1632 = vector.broadcast %131 : f32 to vector<16x16xf32>
    %1633 = arith.mulf %1632, %1334 : vector<16x16xf32>
    %1634 = arith.addf %1631, %1633 : vector<16x16xf32>
    %1635 = vector.broadcast %134 : f32 to vector<16x16xf32>
    %1636 = arith.mulf %1635, %1370 : vector<16x16xf32>
    %1637 = arith.addf %1634, %1636 : vector<16x16xf32>
    %1638 = vector.broadcast %137 : f32 to vector<16x16xf32>
    %1639 = arith.mulf %1638, %1406 : vector<16x16xf32>
    %1640 = arith.addf %1637, %1639 : vector<16x16xf32>
    %1641 = vector.broadcast %140 : f32 to vector<16x16xf32>
    %1642 = arith.mulf %1641, %1340 : vector<16x16xf32>
    %1643 = arith.addf %1640, %1642 : vector<16x16xf32>
    %1644 = vector.broadcast %143 : f32 to vector<16x16xf32>
    %1645 = arith.mulf %1644, %1376 : vector<16x16xf32>
    %1646 = arith.addf %1643, %1645 : vector<16x16xf32>
    %1647 = vector.broadcast %146 : f32 to vector<16x16xf32>
    %1648 = arith.mulf %1647, %1412 : vector<16x16xf32>
    %1649 = arith.addf %1646, %1648 : vector<16x16xf32>
    %1650 = vector.broadcast %149 : f32 to vector<16x16xf32>
    %1651 = arith.mulf %1650, %1343 : vector<16x16xf32>
    %1652 = arith.addf %1649, %1651 : vector<16x16xf32>
    %1653 = vector.broadcast %152 : f32 to vector<16x16xf32>
    %1654 = arith.mulf %1653, %1379 : vector<16x16xf32>
    %1655 = arith.addf %1652, %1654 : vector<16x16xf32>
    %1656 = vector.broadcast %155 : f32 to vector<16x16xf32>
    %1657 = arith.mulf %1656, %1415 : vector<16x16xf32>
    %1658 = arith.addf %1655, %1657 : vector<16x16xf32>
    %1659 = vector.broadcast %158 : f32 to vector<16x16xf32>
    %1660 = arith.mulf %1659, %1349 : vector<16x16xf32>
    %1661 = arith.addf %1658, %1660 : vector<16x16xf32>
    %1662 = vector.broadcast %161 : f32 to vector<16x16xf32>
    %1663 = arith.mulf %1662, %1385 : vector<16x16xf32>
    %1664 = arith.addf %1661, %1663 : vector<16x16xf32>
    %1665 = vector.broadcast %164 : f32 to vector<16x16xf32>
    %1666 = arith.mulf %1665, %1421 : vector<16x16xf32>
    %1667 = arith.addf %1664, %1666 : vector<16x16xf32>
    %cst_296 = arith.constant dense<0.000000e+00> : vector<16x16xf32>
    %1668 = tpu.matmul %1503, %363, %cst_296 {dimension_numbers = #tpu.dot_dimension_numbers<[0], [0], [1], [1], [0, 1, 1, 1], [], []>} : vector<16x16xf32>, vector<16x16xf32>, vector<16x16xf32> -> vector<16x16xf32>
    %1669 = arith.negf %1668 : vector<16x16xf32>
    %1670 = math.exp %1669 : vector<16x16xf32>
    %cst_297 = arith.constant 1.000000e+00 : f32
    %1671 = vector.broadcast %cst_297 : f32 to vector<16x16xf32>
    %1672 = arith.addf %1671, %1670 : vector<16x16xf32>
    %1673 = arith.divf %1671, %1672 : vector<16x16xf32>
    %1674 = arith.mulf %1673, %1309 : vector<16x16xf32>
    %1675 = arith.addf %1288, %1674 : vector<16x16xf32>
    %1676 = arith.addf %1289, %1673 : vector<16x16xf32>
    %cst_298 = arith.constant dense<0.000000e+00> : vector<16x16xf32>
    %1677 = tpu.matmul %1585, %445, %cst_298 {dimension_numbers = #tpu.dot_dimension_numbers<[0], [0], [1], [1], [0, 1, 1, 1], [], []>} : vector<16x16xf32>, vector<16x16xf32>, vector<16x16xf32> -> vector<16x16xf32>
    %1678 = arith.negf %1677 : vector<16x16xf32>
    %1679 = math.exp %1678 : vector<16x16xf32>
    %cst_299 = arith.constant 1.000000e+00 : f32
    %1680 = vector.broadcast %cst_299 : f32 to vector<16x16xf32>
    %1681 = arith.addf %1680, %1679 : vector<16x16xf32>
    %1682 = arith.divf %1680, %1681 : vector<16x16xf32>
    %1683 = arith.mulf %1682, %1311 : vector<16x16xf32>
    %1684 = arith.addf %1297, %1683 : vector<16x16xf32>
    %1685 = arith.addf %1298, %1682 : vector<16x16xf32>
    %cst_300 = arith.constant dense<0.000000e+00> : vector<16x16xf32>
    %1686 = tpu.matmul %1667, %527, %cst_300 {dimension_numbers = #tpu.dot_dimension_numbers<[0], [0], [1], [1], [0, 1, 1, 1], [], []>} : vector<16x16xf32>, vector<16x16xf32>, vector<16x16xf32> -> vector<16x16xf32>
    %1687 = arith.negf %1686 : vector<16x16xf32>
    %1688 = math.exp %1687 : vector<16x16xf32>
    %cst_301 = arith.constant 1.000000e+00 : f32
    %1689 = vector.broadcast %cst_301 : f32 to vector<16x16xf32>
    %1690 = arith.addf %1689, %1688 : vector<16x16xf32>
    %1691 = arith.divf %1689, %1690 : vector<16x16xf32>
    %1692 = arith.mulf %1691, %1313 : vector<16x16xf32>
    %1693 = arith.addf %1306, %1692 : vector<16x16xf32>
    %1694 = arith.addf %1307, %1691 : vector<16x16xf32>
    %1695 = arith.divf %1675, %1676 : vector<16x16xf32>
    %1696 = arith.addf %1695, %169 : vector<16x16xf32>
    %c0_302 = arith.constant 0 : index
    %c0_303 = arith.constant 0 : index
    %c0_304 = arith.constant 0 : index
    %c0_305 = arith.constant 0 : index
    %1697 = vector.load %arg7[%c0_302, %c0_303, %c0_304, %c0_305] : memref<1x3x16x16xf32, #tpu.memory_space<vmem>>, vector<1x1x16x16xf32>
    %1698 = vector.shape_cast %1697 : vector<1x1x16x16xf32> to vector<16x16xf32>
    %1699 = vector.shape_cast %1696 : vector<16x16xf32> to vector<1x1x16x16xf32>
    tpu.vector_store %arg7[%c0_302, %c0_303, %c0_304, %c0_305], %1699 {strides = array<i32>} : memref<1x3x16x16xf32, #tpu.memory_space<vmem>>, vector<1x1x16x16xf32>,
    %1700 = arith.divf %1684, %1685 : vector<16x16xf32>
    %1701 = arith.addf %1700, %171 : vector<16x16xf32>
    %c0_306 = arith.constant 0 : index
    %c1_307 = arith.constant 1 : index
    %c0_308 = arith.constant 0 : index
    %c0_309 = arith.constant 0 : index
    %1702 = vector.load %arg7[%c0_306, %c1_307, %c0_308, %c0_309] : memref<1x3x16x16xf32, #tpu.memory_space<vmem>>, vector<1x1x16x16xf32>
    %1703 = vector.shape_cast %1702 : vector<1x1x16x16xf32> to vector<16x16xf32>
    %1704 = vector.shape_cast %1701 : vector<16x16xf32> to vector<1x1x16x16xf32>
    tpu.vector_store %arg7[%c0_306, %c1_307, %c0_308, %c0_309], %1704 {strides = array<i32>} : memref<1x3x16x16xf32, #tpu.memory_space<vmem>>, vector<1x1x16x16xf32>,
    %1705 = arith.divf %1693, %1694 : vector<16x16xf32>
    %1706 = arith.addf %1705, %173 : vector<16x16xf32>
    %c0_310 = arith.constant 0 : index
    %c2_311 = arith.constant 2 : index
    %c0_312 = arith.constant 0 : index
    %c0_313 = arith.constant 0 : index
    %1707 = vector.load %arg7[%c0_310, %c2_311, %c0_312, %c0_313] : memref<1x3x16x16xf32, #tpu.memory_space<vmem>>, vector<1x1x16x16xf32>
    %1708 = vector.shape_cast %1707 : vector<1x1x16x16xf32> to vector<16x16xf32>
    %1709 = vector.shape_cast %1706 : vector<16x16xf32> to vector<1x1x16x16xf32>
    tpu.vector_store %arg7[%c0_310, %c2_311, %c0_312, %c0_313], %1709 {strides = array<i32>} : memref<1x3x16x16xf32, #tpu.memory_space<vmem>>, vector<1x1x16x16xf32>,
    return
  }
  func.func @transform_0(%arg0: i32) -> (i32, i32, i32, i32) {
    %c0_i32 = arith.constant 0 : i32
    %c0_i32_0 = arith.constant 0 : i32
    %c0_i32_1 = arith.constant 0 : i32
    %c0_i32_2 = arith.constant 0 : i32
    return %arg0, %c0_i32, %c0_i32_0, %c0_i32_1 : i32, i32, i32, i32
  }
  func.func @transform_1(%arg0: i32) -> (i32, i32, i32, i32) {
    %c0_i32 = arith.constant 0 : i32
    %c0_i32_0 = arith.constant 0 : i32
    %c0_i32_1 = arith.constant 0 : i32
    %c0_i32_2 = arith.constant 0 : i32
    return %arg0, %c0_i32, %c0_i32_0, %c0_i32_1 : i32, i32, i32, i32
  }
  func.func @transform_2(%arg0: i32) -> i32 {
    %c0_i32 = arith.constant 0 : i32
    %c0_i32_0 = arith.constant 0 : i32
    return %c0_i32 : i32
  }
  func.func @transform_3(%arg0: i32) -> i32 {
    %c0_i32 = arith.constant 0 : i32
    %c0_i32_0 = arith.constant 0 : i32
    return %c0_i32 : i32
  }
  func.func @transform_4(%arg0: i32) -> i32 {
    %c0_i32 = arith.constant 0 : i32
    %c0_i32_0 = arith.constant 0 : i32
    return %c0_i32 : i32
  }
  func.func @transform_5(%arg0: i32) -> i32 {
    %c0_i32 = arith.constant 0 : i32
    %c0_i32_0 = arith.constant 0 : i32
    return %c0_i32 : i32
  }
  func.func @transform_6(%arg0: i32) -> (i32, i32, i32, i32) {
    %c0_i32 = arith.constant 0 : i32
    %c0_i32_0 = arith.constant 0 : i32
    %c0_i32_1 = arith.constant 0 : i32
    %c0_i32_2 = arith.constant 0 : i32
    return %arg0, %c0_i32, %c0_i32_0, %c0_i32_1 : i32, i32, i32, i32
  }
}

</mosaic_0001>

<llo_original>
// kernel: feature_aggregation.1
$region0: #{feature_aggregation.1}
  #allocation0 [shape = 'u32[]', space=smem, size = 0x4, offset = 0x4, fixed_abs, tag = 'smem constant byte address 0x4 - core index']
  #allocation1 [shape = 'u32[72,128]{1,0:T(1,128)}', space=vmem, size = 0x9000, scoped, tag = 'internal scratch']
  %s0 = inlined_call_operand.hbm [shape: f32[2,3,16,16], index: 0, kind: input, shape index: {}]
  %s1 = inlined_call_operand.hbm [shape: f32[2,9,16,16], index: 1, kind: input, shape index: {}]
  %s2 = inlined_call_operand.vmem [shape: f32[81], index: 2, kind: input, shape index: {}]
  %s3 = inlined_call_operand.vmem [shape: f32[3], index: 3, kind: input, shape index: {}]
  %s4 = inlined_call_operand.vmem [shape: f32[81], index: 4, kind: input, shape index: {}]
  %s5 = inlined_call_operand.vmem [shape: f32[3], index: 5, kind: input, shape index: {}]
  %s6 = inlined_call_operand.hbm [shape: f32[2,3,16,16], index: 6, kind: output, shape index: {}]
  %s7 = sld [smem:[#allocation0]]
  $region81: #{feature_aggregation.1} parent=0
    _
  %s9 = ssub.s32 1, %s7
  %s10 = scalar_select 0, %s9, %s7
  $region1: #{feature_aggregation.1} parent=0
    #allocation2 [shape = 'u8[49152]{0}', space=vmem, size = 0xc000, scoped, tag = 'input window, operand 0']
    #allocation3 [shape = 's32[2]{0}', space=sflag, size = 0x8, scoped, tag = 'scoped memory for feature_aggregation.1']
    #allocation4 [shape = 's32[2]{0}', space=sflag, size = 0x8, scoped, tag = 'scoped memory for feature_aggregation.1']
    #allocation5 [shape = 's32[2]{0}', space=sflag, size = 0x8, scoped, tag = 'scoped memory for feature_aggregation.1']
    #allocation6 [shape = 'u8[147456]{0}', space=vmem, size = 0x24000, scoped, tag = 'input window, operand 1']
    #allocation7 [shape = 's32[2]{0}', space=sflag, size = 0x8, scoped, tag = 'scoped memory for feature_aggregation.1']
    #allocation8 [shape = 'u8[512]{0}', space=smem, size = 0x200, scoped, tag = 'input window, operand 2, single buffered']
    #allocation9 [shape = 'u8[512]{0}', space=smem, size = 0x200, scoped, tag = 'input window, operand 3, single buffered']
    #allocation10 [shape = 's32[1]{0}', space=sflag, size = 0x4, scoped, tag = 'scoped memory for feature_aggregation.1']
    #allocation11 [shape = 'u8[512]{0}', space=smem, size = 0x200, scoped, tag = 'input window, operand 4, single buffered']
    #allocation12 [shape = 'u8[512]{0}', space=smem, size = 0x200, scoped, tag = 'input window, operand 5, single buffered']
    #allocation13 [shape = 's32[1]{0}', space=sflag, size = 0x4, scoped, tag = 'scoped memory for feature_aggregation.1']
    #allocation14 [shape = 'u8[49152]{0}', space=vmem, size = 0xc000, scoped, tag = 'output window, operand 0']
    %11 = vsyncpa [#allocation3], 0
    %s12 = scalar_lea.sflag [#allocation3], 1
    %13 = vsyncpa %s12, 0
    %14 = vsyncpa [#allocation7], 0
    %s15 = scalar_lea.sflag [#allocation7], 1
    %16 = vsyncpa %s15, 0
    %17 = vsyncpa [#allocation5], 0
    %18 = vsyncpa [#allocation10], 0
    %19 = vsyncpa [#allocation13], 0
    %20 = vsyncpa [#allocation4], 0
    %s21 = scalar_lea.sflag [#allocation4], 1
    %22 = vsyncpa %s21, 0
    loop: start=0, step=1, limit=4
    $region2: #{feature_aggregation.1} parent=1 // loop_pre_header
      _
    $region3: #{feature_aggregation.1} parent=1 // loop_header
      %s24 = sphi 0, %s28
      %p25 = scmp.ge.s32.totalorder %s24, 4
      %s34 = sphi 0, %s36
      %s37 = sphi 0, %s34
      %s38 = sphi 0, %s37
      %s54 = sphi 0, %s38
      %s60 = sphi 0, %s62
      %s63 = sphi 0, %s60
      %s64 = sphi 0, %s63
      %s80 = sphi 0, %s64
      %s84 = sphi 0, %s84
      %s86 = sphi 0, %s84
      %s87 = sphi 0, %s86
      %s101 = sphi 0, %s87
      %s105 = sphi 0, %s105
      %s107 = sphi 0, %s105
      %s108 = sphi 0, %s107
      %s122 = sphi 0, %s108
      %s126 = sphi 0, %s126
      %s128 = sphi 0, %s126
      %s129 = sphi 0, %s128
      %s143 = sphi 0, %s129
      %s147 = sphi 0, %s147
      %s149 = sphi 0, %s147
      %s150 = sphi 0, %s149
      %s164 = sphi 0, %s150
      %s170 = sphi 0, %s172
      %s173 = sphi 0, %s170
      %s174 = sphi 0, %s173
      %s190 = sphi 0, %s174
    $region4: #{feature_aggregation.1} parent=1 // loop_header_branch
      %27 = sbr.rel (%p25) target = $region8
    $region5: #{feature_aggregation.1} parent=1 // loop_body
      %s29 = ssub.s32 %s24, 1
      %s30 = ssub.s32 %s24, 2
      %s31 = sadd.s32 %s24, 1
      %s32 = ssub.s32 %s24, %s31
      %p33 = scmp.eq.s32.totalorder %s32, 0
      %s35 = sadd.s32 %s34, 1
      %s36 = scalar_select %p33, %s34, %s35
      %p39 = pneg %p33
      %p40 = scmp.eq.s32.totalorder %s24, 1
      %p41 = por %p39, %p40
      %p42 = scmp.ne.s32.totalorder %s34, %s37
      %p43 = scmp.eq.s32.totalorder %s24, 0
      %p44 = por %p42, %p43
      %p45 = scmp.ne.s32.totalorder %s34, %s37
      %p46 = scmp.eq.s32.totalorder %s29, 1
      %p47 = por %p45, %p46
      %p48 = scmp.ne.s32.totalorder %s37, %s38
      %p49 = scmp.eq.s32.totalorder %s29, 0
      %p50 = por %p48, %p49
      %p51 = scmp.ne.s32.totalorder %s37, %s38
      %p52 = scmp.eq.s32.totalorder %s30, 1
      %p53 = por %p51, %p52
      %p55 = scmp.ne.s32.totalorder %s38, %s54
      %p56 = scmp.eq.s32.totalorder %s30, 0
      %p57 = por %p55, %p56
      %s58 = ssub.s32 %s24, %s31
      %p59 = scmp.eq.s32.totalorder %s58, 0
      %s61 = sadd.s32 %s60, 1
      %s62 = scalar_select %p59, %s60, %s61
      %p65 = pneg %p59
      %p66 = scmp.eq.s32.totalorder %s24, 1
      %p67 = por %p65, %p66
      %p68 = scmp.ne.s32.totalorder %s60, %s63
      %p69 = scmp.eq.s32.totalorder %s24, 0
      %p70 = por %p68, %p69
      %p71 = scmp.ne.s32.totalorder %s60, %s63
      %p72 = scmp.eq.s32.totalorder %s29, 1
      %p73 = por %p71, %p72
      %p74 = scmp.ne.s32.totalorder %s63, %s64
      %p75 = scmp.eq.s32.totalorder %s29, 0
      %p76 = por %p74, %p75
      %p77 = scmp.ne.s32.totalorder %s63, %s64
      %p78 = scmp.eq.s32.totalorder %s30, 1
      %p79 = por %p77, %p78
      %p81 = scmp.ne.s32.totalorder %s64, %s80
      %p82 = scmp.eq.s32.totalorder %s30, 0
      %p83 = por %p81, %p82
      %s85 = sadd.s32 %s84, 1
      %p88 = scmp.eq.s32.totalorder %s24, 1
      %p89 = scmp.ne.s32.totalorder %s84, %s86
      %p90 = scmp.eq.s32.totalorder %s24, 0
      %p91 = por %p89, %p90
      %p92 = scmp.ne.s32.totalorder %s84, %s86
      %p93 = scmp.eq.s32.totalorder %s29, 1
      %p94 = por %p92, %p93
      %p95 = scmp.ne.s32.totalorder %s86, %s87
      %p96 = scmp.eq.s32.totalorder %s29, 0
      %p97 = por %p95, %p96
      %p98 = scmp.ne.s32.totalorder %s86, %s87
      %p99 = scmp.eq.s32.totalorder %s30, 1
      %p100 = por %p98, %p99
      %p102 = scmp.ne.s32.totalorder %s87, %s101
      %p103 = scmp.eq.s32.totalorder %s30, 0
      %p104 = por %p102, %p103
      %s106 = sadd.s32 %s105, 1
      %p109 = scmp.eq.s32.totalorder %s24, 1
      %p110 = scmp.ne.s32.totalorder %s105, %s107
      %p111 = scmp.eq.s32.totalorder %s24, 0
      %p112 = por %p110, %p111
      %p113 = scmp.ne.s32.totalorder %s105, %s107
      %p114 = scmp.eq.s32.totalorder %s29, 1
      %p115 = por %p113, %p114
      %p116 = scmp.ne.s32.totalorder %s107, %s108
      %p117 = scmp.eq.s32.totalorder %s29, 0
      %p118 = por %p116, %p117
      %p119 = scmp.ne.s32.totalorder %s107, %s108
      %p120 = scmp.eq.s32.totalorder %s30, 1
      %p121 = por %p119, %p120
      %p123 = scmp.ne.s32.totalorder %s108, %s122
      %p124 = scmp.eq.s32.totalorder %s30, 0
      %p125 = por %p123, %p124
      %s127 = sadd.s32 %s126, 1
      %p130 = scmp.eq.s32.totalorder %s24, 1
      %p131 = scmp.ne.s32.totalorder %s126, %s128
      %p132 = scmp.eq.s32.totalorder %s24, 0
      %p133 = por %p131, %p132
      %p134 = scmp.ne.s32.totalorder %s126, %s128
      %p135 = scmp.eq.s32.totalorder %s29, 1
      %p136 = por %p134, %p135
      %p137 = scmp.ne.s32.totalorder %s128, %s129
      %p138 = scmp.eq.s32.totalorder %s29, 0
      %p139 = por %p137, %p138
      %p140 = scmp.ne.s32.totalorder %s128, %s129
      %p141 = scmp.eq.s32.totalorder %s30, 1
      %p142 = por %p140, %p141
      %p144 = scmp.ne.s32.totalorder %s129, %s143
      %p145 = scmp.eq.s32.totalorder %s30, 0
      %p146 = por %p144, %p145
      %s148 = sadd.s32 %s147, 1
      %p151 = scmp.eq.s32.totalorder %s24, 1
      %p152 = scmp.ne.s32.totalorder %s147, %s149
      %p153 = scmp.eq.s32.totalorder %s24, 0
      %p154 = por %p152, %p153
      %p155 = scmp.ne.s32.totalorder %s147, %s149
      %p156 = scmp.eq.s32.totalorder %s29, 1
      %p157 = por %p155, %p156
      %p158 = scmp.ne.s32.totalorder %s149, %s150
      %p159 = scmp.eq.s32.totalorder %s29, 0
      %p160 = por %p158, %p159
      %p161 = scmp.ne.s32.totalorder %s149, %s150
      %p162 = scmp.eq.s32.totalorder %s30, 1
      %p163 = por %p161, %p162
      %p165 = scmp.ne.s32.totalorder %s150, %s164
      %p166 = scmp.eq.s32.totalorder %s30, 0
      %p167 = por %p165, %p166
      %s168 = ssub.s32 %s24, %s31
      %p169 = scmp.eq.s32.totalorder %s168, 0
      %s171 = sadd.s32 %s170, 1
      %s172 = scalar_select %p169, %s170, %s171
      %p175 = pneg %p169
      %p176 = scmp.eq.s32.totalorder %s24, 1
      %p177 = por %p175, %p176
      %p178 = scmp.ne.s32.totalorder %s170, %s173
      %p179 = scmp.eq.s32.totalorder %s24, 0
      %p180 = por %p178, %p179
      %p181 = scmp.ne.s32.totalorder %s170, %s173
      %p182 = scmp.eq.s32.totalorder %s29, 1
      %p183 = por %p181, %p182
      %p184 = scmp.ne.s32.totalorder %s173, %s174
      %p185 = scmp.eq.s32.totalorder %s29, 0
      %p186 = por %p184, %p185
      %p187 = scmp.ne.s32.totalorder %s173, %s174
      %p188 = scmp.eq.s32.totalorder %s30, 1
      %p189 = por %p187, %p188
      %p191 = scmp.ne.s32.totalorder %s174, %s190
      %p192 = scmp.eq.s32.totalorder %s30, 0
      %p193 = por %p191, %p192
      %p194 = scmp.le.s32.totalorder 1, %s24
      %p195 = scmp.lt.s32.totalorder %s24, 3
      %p196 = pnand %p194, %p195
      %p197 = pneg %p196
      // Predicated region
      $region9: #{feature_aggregation.1} parent=5 // pred_check
        _
      $region10: #{feature_aggregation.1} parent=5 // pred_check_branch
        %199 = sbr.rel (%p196) target = $region12
      $region11: #{feature_aggregation.1} parent=5 // pred_region
        %s200 = ssub.s32 %s24, 1
        // Predicated region
        $region13: #{feature_aggregation.1} parent=11 // pred_check
          %p201 = pneg %p97
        $region14: #{feature_aggregation.1} parent=11 // pred_check_branch
          %203 = sbr.rel (%p201) target = $region16
        $region15: #{feature_aggregation.1} parent=11 // pred_region
          %205 = vsyncadd [#allocation5], 0
          %s207 = sshll.u32 %s2, 4
          %s208 = int_to_ptr.vmem [resolvable:$true] %s207
          %210 = dma.vmem_to_smem %s208, 16, [#allocation8], [#allocation5]
        $region16: #{feature_aggregation.1} parent=11 // pred_fallthru
          _
        // Predicated region
        $region17: #{feature_aggregation.1} parent=11 // pred_check
          %p211 = pneg %p118
        $region18: #{feature_aggregation.1} parent=11 // pred_check_branch
          %213 = sbr.rel (%p211) target = $region20
        $region19: #{feature_aggregation.1} parent=11 // pred_region
          %215 = vsyncadd [#allocation10], 0
          %s217 = sshll.u32 %s3, 4
          %s218 = int_to_ptr.vmem [resolvable:$true] %s217
          %220 = dma.vmem_to_smem %s218, 16, [#allocation9], [#allocation10]
        $region20: #{feature_aggregation.1} parent=11 // pred_fallthru
          _
        // Predicated region
        $region21: #{feature_aggregation.1} parent=11 // pred_check
          %p221 = pneg %p139
        $region22: #{feature_aggregation.1} parent=11 // pred_check_branch
          %223 = sbr.rel (%p221) target = $region24
        $region23: #{feature_aggregation.1} parent=11 // pred_region
          %225 = vsyncadd [#allocation10], 0
          %s227 = sshll.u32 %s4, 4
          %s228 = int_to_ptr.vmem [resolvable:$true] %s227
          %230 = dma.vmem_to_smem %s228, 16, [#allocation11], [#allocation10]
        $region24: #{feature_aggregation.1} parent=11 // pred_fallthru
          _
        // Predicated region
        $region25: #{feature_aggregation.1} parent=11 // pred_check
          %p231 = pneg %p160
        $region26: #{feature_aggregation.1} parent=11 // pred_check_branch
          %233 = sbr.rel (%p231) target = $region28
        $region27: #{feature_aggregation.1} parent=11 // pred_region
          %235 = vsyncadd [#allocation13], 0
          %s237 = sshll.u32 %s5, 4
          %s238 = int_to_ptr.vmem [resolvable:$true] %s237
          %240 = dma.vmem_to_smem %s238, 16, [#allocation12], [#allocation13]
        $region28: #{feature_aggregation.1} parent=11 // pred_fallthru
          _
      $region12: #{feature_aggregation.1} parent=5 // pred_fallthru
        _
      %p241 = scmp.lt.s32.totalorder %s24, 2
      // Predicated region
      $region29: #{feature_aggregation.1} parent=5 // pred_check
        %p242 = pneg %p241
      $region30: #{feature_aggregation.1} parent=5 // pred_check_branch
        %244 = sbr.rel (%p242) target = $region32
      $region31: #{feature_aggregation.1} parent=5 // pred_region
        // Predicated region
        $region33: #{feature_aggregation.1} parent=31 // pred_check
          %p245 = pneg %p44
        $region34: #{feature_aggregation.1} parent=31 // pred_check_branch
          %247 = sbr.rel (%p245) target = $region36
        $region35: #{feature_aggregation.1} parent=31 // pred_region
          %s248 = sand.u32 %s34, 1
          %s249 = scalar_lea.sflag [#allocation3], %s248
          %s250 = sand.u32 %s34, 1
          %s251 = smul.addr %s250, 48
          %s252 = scalar_lea.vmem [#allocation2], %s251
          %254 = vsyncadd %s249, 0
          %s255 = smul.addr %s24, 6
          %s256 = smul.addr %s255, 8
          %s257 = scalar_lea.hbm %s0, %s256
          %s258 = sshll.u32 %s257, 4
          %s259 = int_to_ptr.hbm [resolvable:$true] %s258
          %s260 = sshll.u32 %s252, 4
          %s261 = int_to_ptr.vmem [resolvable:$true] %s260
          %266 = dma.hbm_to_vmem [thread:$0]  %s259, 768, %s261, %s249, 128, 128, 8
        $region36: #{feature_aggregation.1} parent=31 // pred_fallthru
          _
        // Predicated region
        $region37: #{feature_aggregation.1} parent=31 // pred_check
          %p267 = pneg %p70
        $region38: #{feature_aggregation.1} parent=31 // pred_check_branch
          %269 = sbr.rel (%p267) target = $region40
        $region39: #{feature_aggregation.1} parent=31 // pred_region
          %s270 = sand.u32 %s60, 1
          %s271 = scalar_lea.sflag [#allocation7], %s270
          %s272 = sand.u32 %s60, 1
          %s273 = smul.addr %s272, 144
          %s274 = scalar_lea.vmem [#allocation6], %s273
          %276 = vsyncadd %s271, 0
          %s277 = smul.addr %s24, 18
          %s278 = smul.addr %s277, 8
          %s279 = scalar_lea.hbm %s1, %s278
          %s280 = sshll.u32 %s279, 4
          %s281 = int_to_ptr.hbm [resolvable:$true] %s280
          %s282 = sshll.u32 %s274, 4
          %s283 = int_to_ptr.vmem [resolvable:$true] %s282
          %288 = dma.hbm_to_vmem [thread:$0]  %s281, 2304, %s283, %s271, 128, 128, 8
        $region40: #{feature_aggregation.1} parent=31 // pred_fallthru
          _
      $region32: #{feature_aggregation.1} parent=5 // pred_fallthru
        _
      %p289 = scmp.le.s32.totalorder 1, %s24
      %p290 = scmp.lt.s32.totalorder %s24, 3
      %p291 = pnand %p289, %p290
      %p292 = pneg %p291
      // Predicated region
      $region41: #{feature_aggregation.1} parent=5 // pred_check
        _
      $region42: #{feature_aggregation.1} parent=5 // pred_check_branch
        %294 = sbr.rel (%p291) target = $region44
      $region43: #{feature_aggregation.1} parent=5 // pred_region
        %s295 = ssub.s32 %s24, 1
        %s296 = sand.u32 %s37, 1
        %s297 = scalar_lea.sflag [#allocation3], %s296
        %s298 = sand.u32 %s37, 1
        %s299 = smul.addr %s298, 48
        %s300 = scalar_lea.vmem [#allocation2], %s299
        // Predicated region
        $region45: #{feature_aggregation.1} parent=43 // pred_check
          %p301 = pneg %p50
        $region46: #{feature_aggregation.1} parent=43 // pred_check_branch
          %303 = sbr.rel (%p301) target = $region48
        $region47: #{feature_aggregation.1} parent=43 // pred_region
          %305 = dma.done %s297, 768
        $region48: #{feature_aggregation.1} parent=43 // pred_fallthru
          _
        %s306 = sand.u32 %s63, 1
        %s307 = scalar_lea.sflag [#allocation7], %s306
        %s308 = sand.u32 %s63, 1
        %s309 = smul.addr %s308, 144
        %s310 = scalar_lea.vmem [#allocation6], %s309
        // Predicated region
        $region49: #{feature_aggregation.1} parent=43 // pred_check
          %p311 = pneg %p76
        $region50: #{feature_aggregation.1} parent=43 // pred_check_branch
          %313 = sbr.rel (%p311) target = $region52
        $region51: #{feature_aggregation.1} parent=43 // pred_region
          %315 = dma.done %s307, 2304
        $region52: #{feature_aggregation.1} parent=43 // pred_fallthru
          _
        // Predicated region
        $region53: #{feature_aggregation.1} parent=43 // pred_check
          %p316 = pneg %p97
        $region54: #{feature_aggregation.1} parent=43 // pred_check_branch
          %318 = sbr.rel (%p316) target = $region56
        $region55: #{feature_aggregation.1} parent=43 // pred_region
          %320 = dma.done [#allocation5], 16
        $region56: #{feature_aggregation.1} parent=43 // pred_fallthru
          _
        // Predicated region
        $region57: #{feature_aggregation.1} parent=43 // pred_check
          %p321 = pneg %p118
        $region58: #{feature_aggregation.1} parent=43 // pred_check_branch
          %323 = sbr.rel (%p321) target = $region60
        $region59: #{feature_aggregation.1} parent=43 // pred_region
          %325 = dma.done [#allocation10], 16
        $region60: #{feature_aggregation.1} parent=43 // pred_fallthru
          _
        // Predicated region
        $region61: #{feature_aggregation.1} parent=43 // pred_check
          %p326 = pneg %p139
        $region62: #{feature_aggregation.1} parent=43 // pred_check_branch
          %328 = sbr.rel (%p326) target = $region64
        $region63: #{feature_aggregation.1} parent=43 // pred_region
          %330 = dma.done [#allocation10], 16
        $region64: #{feature_aggregation.1} parent=43 // pred_fallthru
          _
        // Predicated region
        $region65: #{feature_aggregation.1} parent=43 // pred_check
          %p331 = pneg %p160
        $region66: #{feature_aggregation.1} parent=43 // pred_check_branch
          %333 = sbr.rel (%p331) target = $region68
        $region67: #{feature_aggregation.1} parent=43 // pred_region
          %335 = dma.done [#allocation13], 16
        $region68: #{feature_aggregation.1} parent=43 // pred_fallthru
          _
        %336 = sfence
        %s337 = sand.u32 %s37, 1
        %s338 = scalar_lea.sflag [#allocation3], %s337
        %s339 = sand.u32 %s37, 1
        %s340 = smul.addr %s339, 48
        %s341 = scalar_lea.vmem [#allocation2], %s340
        %p342 = pneg %p50
        %p343 = pneg %p47
        %s344 = sand.u32 %s63, 1
        %s345 = scalar_lea.sflag [#allocation7], %s344
        %s346 = sand.u32 %s63, 1
        %s347 = smul.addr %s346, 144
        %s348 = scalar_lea.vmem [#allocation6], %s347
        %p349 = pneg %p76
        %p350 = pneg %p73
        %p351 = pneg %p97
        %p352 = pneg %p94
        %p353 = pneg %p118
        %p354 = pneg %p115
        %p355 = pneg %p139
        %p356 = pneg %p136
        %p357 = pneg %p160
        %p358 = pneg %p157
        %p359 = pneg %p186
        %p360 = pneg %p183
        %s361 = sand.u32 %s173, 1
        %s362 = scalar_lea.sflag [#allocation4], %s361
        %s363 = sand.u32 %s173, 1
        %s364 = smul.addr %s363, 48
        %s365 = scalar_lea.vmem [#allocation14], %s364
        %s366 = sld [smem:[#allocation8]]
        %s367 = sld [smem:[#allocation8 + $0x1]]
        %s368 = sld [smem:[#allocation8 + $0x2]]
        %s369 = sld [smem:[#allocation8 + $0x3]]
        %s370 = sld [smem:[#allocation8 + $0x4]]
        %s371 = sld [smem:[#allocation8 + $0x5]]
        %s372 = sld [smem:[#allocation8 + $0x6]]
        %s373 = sld [smem:[#allocation8 + $0x7]]
        %s374 = sld [smem:[#allocation8 + $0x8]]
        %s375 = sld [smem:[#allocation8 + $0x9]]
        %s376 = sld [smem:[#allocation8 + $0xa]]
        %s377 = sld [smem:[#allocation8 + $0xb]]
        %s378 = sld [smem:[#allocation8 + $0xc]]
        %s379 = sld [smem:[#allocation8 + $0xd]]
        %s380 = sld [smem:[#allocation8 + $0xe]]
        %s381 = sld [smem:[#allocation8 + $0xf]]
        %s382 = sld [smem:[#allocation8 + $0x10]]
        %s383 = sld [smem:[#allocation8 + $0x11]]
        %s384 = sld [smem:[#allocation8 + $0x12]]
        %s385 = sld [smem:[#allocation8 + $0x13]]
        %s386 = sld [smem:[#allocation8 + $0x14]]
        %s387 = sld [smem:[#allocation8 + $0x15]]
        %s388 = sld [smem:[#allocation8 + $0x16]]
        %s389 = sld [smem:[#allocation8 + $0x17]]
        %s390 = sld [smem:[#allocation8 + $0x18]]
        %s391 = sld [smem:[#allocation8 + $0x19]]
        %s392 = sld [smem:[#allocation8 + $0x1a]]
        %s393 = sld [smem:[#allocation8 + $0x1b]]
        %s394 = sld [smem:[#allocation8 + $0x1c]]
        %s395 = sld [smem:[#allocation8 + $0x1d]]
        %s396 = sld [smem:[#allocation8 + $0x1e]]
        %s397 = sld [smem:[#allocation8 + $0x1f]]
        %s398 = sld [smem:[#allocation8 + $0x20]]
        %s399 = sld [smem:[#allocation8 + $0x21]]
        %s400 = sld [smem:[#allocation8 + $0x22]]
        %s401 = sld [smem:[#allocation8 + $0x23]]
        %s402 = sld [smem:[#allocation8 + $0x24]]
        %s403 = sld [smem:[#allocation8 + $0x25]]
        %s404 = sld [smem:[#allocation8 + $0x26]]
        %s405 = sld [smem:[#allocation8 + $0x27]]
        %s406 = sld [smem:[#allocation8 + $0x28]]
        %s407 = sld [smem:[#allocation8 + $0x29]]
        %s408 = sld [smem:[#allocation8 + $0x2a]]
        %s409 = sld [smem:[#allocation8 + $0x2b]]
        %s410 = sld [smem:[#allocation8 + $0x2c]]
        %s411 = sld [smem:[#allocation8 + $0x2d]]
        %s412 = sld [smem:[#allocation8 + $0x2e]]
        %s413 = sld [smem:[#allocation8 + $0x2f]]
        %s414 = sld [smem:[#allocation8 + $0x30]]
        %s415 = sld [smem:[#allocation8 + $0x31]]
        %s416 = sld [smem:[#allocation8 + $0x32]]
        %s417 = sld [smem:[#allocation8 + $0x33]]
        %s418 = sld [smem:[#allocation8 + $0x34]]
        %s419 = sld [smem:[#allocation8 + $0x35]]
        %s420 = sld [smem:[#allocation8 + $0x36]]
        %s421 = sld [smem:[#allocation8 + $0x37]]
        %s422 = sld [smem:[#allocation8 + $0x38]]
        %s423 = sld [smem:[#allocation8 + $0x39]]
        %s424 = sld [smem:[#allocation8 + $0x3a]]
        %s425 = sld [smem:[#allocation8 + $0x3b]]
        %s426 = sld [smem:[#allocation8 + $0x3c]]
        %s427 = sld [smem:[#allocation8 + $0x3d]]
        %s428 = sld [smem:[#allocation8 + $0x3e]]
        %s429 = sld [smem:[#allocation8 + $0x3f]]
        %s430 = sld [smem:[#allocation8 + $0x40]]
        %s431 = sld [smem:[#allocation8 + $0x41]]
        %s432 = sld [smem:[#allocation8 + $0x42]]
        %s433 = sld [smem:[#allocation8 + $0x43]]
        %s434 = sld [smem:[#allocation8 + $0x44]]
        %s435 = sld [smem:[#allocation8 + $0x45]]
        %s436 = sld [smem:[#allocation8 + $0x46]]
        %s437 = sld [smem:[#allocation8 + $0x47]]
        %s438 = sld [smem:[#allocation8 + $0x48]]
        %s439 = sld [smem:[#allocation8 + $0x49]]
        %s440 = sld [smem:[#allocation8 + $0x4a]]
        %s441 = sld [smem:[#allocation8 + $0x4b]]
        %s442 = sld [smem:[#allocation8 + $0x4c]]
        %s443 = sld [smem:[#allocation8 + $0x4d]]
        %s444 = sld [smem:[#allocation8 + $0x4e]]
        %s445 = sld [smem:[#allocation8 + $0x4f]]
        %s446 = sld [smem:[#allocation8 + $0x50]]
        %s447 = sld [smem:[#allocation9]]
        %s448 = sld [smem:[#allocation9 + $0x1]]
        %s449 = sld [smem:[#allocation9 + $0x2]]
        %s450 = sld [smem:[#allocation11]]
        %s451 = sld [smem:[#allocation11 + $0x1]]
        %s452 = sld [smem:[#allocation11 + $0x2]]
        %s453 = sld [smem:[#allocation11 + $0x3]]
        %s454 = sld [smem:[#allocation11 + $0x4]]
        %s455 = sld [smem:[#allocation11 + $0x5]]
        %s456 = sld [smem:[#allocation11 + $0x6]]
        %s457 = sld [smem:[#allocation11 + $0x7]]
        %s458 = sld [smem:[#allocation11 + $0x8]]
        %s459 = sld [smem:[#allocation11 + $0x9]]
        %s460 = sld [smem:[#allocation11 + $0xa]]
        %s461 = sld [smem:[#allocation11 + $0xb]]
        %s462 = sld [smem:[#allocation11 + $0xc]]
        %s463 = sld [smem:[#allocation11 + $0xd]]
        %s464 = sld [smem:[#allocation11 + $0xe]]
        %s465 = sld [smem:[#allocation11 + $0xf]]
        %s466 = sld [smem:[#allocation11 + $0x10]]
        %s467 = sld [smem:[#allocation11 + $0x11]]
        %s468 = sld [smem:[#allocation11 + $0x12]]
        %s469 = sld [smem:[#allocation11 + $0x13]]
        %s470 = sld [smem:[#allocation11 + $0x14]]
        %s471 = sld [smem:[#allocation11 + $0x15]]
        %s472 = sld [smem:[#allocation11 + $0x16]]
        %s473 = sld [smem:[#allocation11 + $0x17]]
        %s474 = sld [smem:[#allocation11 + $0x18]]
        %s475 = sld [smem:[#allocation11 + $0x19]]
        %s476 = sld [smem:[#allocation11 + $0x1a]]
        %s477 = sld [smem:[#allocation11 + $0x1b]]
        %s478 = sld [smem:[#allocation11 + $0x1c]]
        %s479 = sld [smem:[#allocation11 + $0x1d]]
        %s480 = sld [smem:[#allocation11 + $0x1e]]
        %s481 = sld [smem:[#allocation11 + $0x1f]]
        %s482 = sld [smem:[#allocation11 + $0x20]]
        %s483 = sld [smem:[#allocation11 + $0x21]]
        %s484 = sld [smem:[#allocation11 + $0x22]]
        %s485 = sld [smem:[#allocation11 + $0x23]]
        %s486 = sld [smem:[#allocation11 + $0x24]]
        %s487 = sld [smem:[#allocation11 + $0x25]]
        %s488 = sld [smem:[#allocation11 + $0x26]]
        %s489 = sld [smem:[#allocation11 + $0x27]]
        %s490 = sld [smem:[#allocation11 + $0x28]]
        %s491 = sld [smem:[#allocation11 + $0x29]]
        %s492 = sld [smem:[#allocation11 + $0x2a]]
        %s493 = sld [smem:[#allocation11 + $0x2b]]
        %s494 = sld [smem:[#allocation11 + $0x2c]]
        %s495 = sld [smem:[#allocation11 + $0x2d]]
        %s496 = sld [smem:[#allocation11 + $0x2e]]
        %s497 = sld [smem:[#allocation11 + $0x2f]]
        %s498 = sld [smem:[#allocation11 + $0x30]]
        %s499 = sld [smem:[#allocation11 + $0x31]]
        %s500 = sld [smem:[#allocation11 + $0x32]]
        %s501 = sld [smem:[#allocation11 + $0x33]]
        %s502 = sld [smem:[#allocation11 + $0x34]]
        %s503 = sld [smem:[#allocation11 + $0x35]]
        %s504 = sld [smem:[#allocation11 + $0x36]]
        %s505 = sld [smem:[#allocation11 + $0x37]]
        %s506 = sld [smem:[#allocation11 + $0x38]]
        %s507 = sld [smem:[#allocation11 + $0x39]]
        %s508 = sld [smem:[#allocation11 + $0x3a]]
        %s509 = sld [smem:[#allocation11 + $0x3b]]
        %s510 = sld [smem:[#allocation11 + $0x3c]]
        %s511 = sld [smem:[#allocation11 + $0x3d]]
        %s512 = sld [smem:[#allocation11 + $0x3e]]
        %s513 = sld [smem:[#allocation11 + $0x3f]]
        %s514 = sld [smem:[#allocation11 + $0x40]]
        %s515 = sld [smem:[#allocation11 + $0x41]]
        %s516 = sld [smem:[#allocation11 + $0x42]]
        %s517 = sld [smem:[#allocation11 + $0x43]]
        %s518 = sld [smem:[#allocation11 + $0x44]]
        %s519 = sld [smem:[#allocation11 + $0x45]]
        %s520 = sld [smem:[#allocation11 + $0x46]]
        %s521 = sld [smem:[#allocation11 + $0x47]]
        %s522 = sld [smem:[#allocation11 + $0x48]]
        %s523 = sld [smem:[#allocation11 + $0x49]]
        %s524 = sld [smem:[#allocation11 + $0x4a]]
        %s525 = sld [smem:[#allocation11 + $0x4b]]
        %s526 = sld [smem:[#allocation11 + $0x4c]]
        %s527 = sld [smem:[#allocation11 + $0x4d]]
        %s528 = sld [smem:[#allocation11 + $0x4e]]
        %s529 = sld [smem:[#allocation11 + $0x4f]]
        %s530 = sld [smem:[#allocation11 + $0x50]]
        %s531 = sld [smem:[#allocation12]]
        %s532 = sld [smem:[#allocation12 + $0x1]]
        %s533 = sld [smem:[#allocation12 + $0x2]]
        %v534 = vld [vmem:[%s300] sm:$0xff]
        %v535 = vld [vmem:[%s300 + $0x8] sm:$0xff]
        %s536 = scalar_lea.vmem %s300, 16 [#allocation2]
        %v537 = vld [vmem:[%s536] sm:$0xff]
        %v538 = vld [vmem:[%s536 + $0x8] sm:$0xff]
        %s539 = scalar_lea.vmem %s300, 32 [#allocation2]
        %v540 = vld [vmem:[%s539] sm:$0xff]
        %v541 = vld [vmem:[%s539 + $0x8] sm:$0xff]
        %vm544 = vcmask 1040384
        %v545 = vrot.slane %v534, 7
        %v546 = vrot.slane %v535, 7
        %v547 = vsel %vm544, %v545, %v546
        %v550 = vsel %vm544, 0.0, %v545
        %552 = vrot.lane.b32.xlu0 %v550, 1
        %v553 = vpop.permute.xlu0 %552
        %554 = vrot.lane.b32.xlu0 %v547, 1
        %v555 = vpop.permute.xlu0 %554
        %vm558 = vcmask 7168
        %v559 = vsel %vm558, 0.0, %v553
        %v560 = vsel %vm558, 0.0, %v555
        %561 = vrot.lane.b32.xlu0 %v550, 127
        %v562 = vpop.permute.xlu0 %561
        %563 = vrot.lane.b32.xlu0 %v547, 127
        %v564 = vpop.permute.xlu0 %563
        %vm567 = vcmask 121856
        %v568 = vsel %vm567, %v562, 0.0
        %v569 = vsel %vm567, %v564, 0.0
        %570 = vrot.lane.b32.xlu0 %v534, 1
        %v571 = vpop.permute.xlu0 %570
        %572 = vrot.lane.b32.xlu0 %v535, 1
        %v573 = vpop.permute.xlu0 %572
        %v576 = vsel %vm558, 0.0, %v571
        %v577 = vsel %vm558, 0.0, %v573
        %578 = vrot.lane.b32.xlu0 %v534, 127
        %v579 = vpop.permute.xlu0 %578
        %580 = vrot.lane.b32.xlu0 %v535, 127
        %v581 = vpop.permute.xlu0 %580
        %v584 = vsel %vm567, %v579, 0.0
        %v585 = vsel %vm567, %v581, 0.0
        %vm586 = vcmask 1046528
        %v587 = vrot.slane %v534, 1
        %v588 = vrot.slane %v535, 1
        %v589 = vsel %vm586, %v587, %v588
        %v592 = vsel %vm586, %v588, 0.0
        %594 = vrot.lane.b32.xlu0 %v589, 1
        %v595 = vpop.permute.xlu0 %594
        %596 = vrot.lane.b32.xlu0 %v592, 1
        %v597 = vpop.permute.xlu0 %596
        %v600 = vsel %vm558, 0.0, %v595
        %v601 = vsel %vm558, 0.0, %v597
        %602 = vrot.lane.b32.xlu0 %v589, 127
        %v603 = vpop.permute.xlu0 %602
        %604 = vrot.lane.b32.xlu0 %v592, 127
        %v605 = vpop.permute.xlu0 %604
        %v608 = vsel %vm567, %v603, 0.0
        %v609 = vsel %vm567, %v605, 0.0
        %v612 = vrot.slane %v537, 7
        %v613 = vrot.slane %v538, 7
        %v614 = vsel %vm544, %v612, %v613
        %v617 = vsel %vm544, 0.0, %v612
        %619 = vrot.lane.b32.xlu0 %v617, 1
        %v620 = vpop.permute.xlu0 %619
        %621 = vrot.lane.b32.xlu0 %v614, 1
        %v622 = vpop.permute.xlu0 %621
        %v625 = vsel %vm558, 0.0, %v620
        %v626 = vsel %vm558, 0.0, %v622
        %627 = vrot.lane.b32.xlu0 %v617, 127
        %v628 = vpop.permute.xlu0 %627
        %629 = vrot.lane.b32.xlu0 %v614, 127
        %v630 = vpop.permute.xlu0 %629
        %v633 = vsel %vm567, %v628, 0.0
        %v634 = vsel %vm567, %v630, 0.0
        %635 = vrot.lane.b32.xlu0 %v537, 1
        %v636 = vpop.permute.xlu0 %635
        %637 = vrot.lane.b32.xlu0 %v538, 1
        %v638 = vpop.permute.xlu0 %637
        %v641 = vsel %vm558, 0.0, %v636
        %v642 = vsel %vm558, 0.0, %v638
        %643 = vrot.lane.b32.xlu0 %v537, 127
        %v644 = vpop.permute.xlu0 %643
        %645 = vrot.lane.b32.xlu0 %v538, 127
        %v646 = vpop.permute.xlu0 %645
        %v649 = vsel %vm567, %v644, 0.0
        %v650 = vsel %vm567, %v646, 0.0
        %v651 = vrot.slane %v537, 1
        %v652 = vrot.slane %v538, 1
        %v653 = vsel %vm586, %v651, %v652
        %v656 = vsel %vm586, %v652, 0.0
        %658 = vrot.lane.b32.xlu0 %v653, 1
        %v659 = vpop.permute.xlu0 %658
        %660 = vrot.lane.b32.xlu0 %v656, 1
        %v661 = vpop.permute.xlu0 %660
        %v664 = vsel %vm558, 0.0, %v659
        %v665 = vsel %vm558, 0.0, %v661
        %666 = vrot.lane.b32.xlu0 %v653, 127
        %v667 = vpop.permute.xlu0 %666
        %668 = vrot.lane.b32.xlu0 %v656, 127
        %v669 = vpop.permute.xlu0 %668
        %v672 = vsel %vm567, %v667, 0.0
        %v673 = vsel %vm567, %v669, 0.0
        %v676 = vrot.slane %v540, 7
        %v677 = vrot.slane %v541, 7
        %v678 = vsel %vm544, %v676, %v677
        %v681 = vsel %vm544, 0.0, %v676
        %683 = vrot.lane.b32.xlu0 %v681, 1
        %v684 = vpop.permute.xlu0 %683
        %685 = vrot.lane.b32.xlu0 %v678, 1
        %v686 = vpop.permute.xlu0 %685
        %v689 = vsel %vm558, 0.0, %v684
        %v690 = vsel %vm558, 0.0, %v686
        %691 = vrot.lane.b32.xlu0 %v681, 127
        %v692 = vpop.permute.xlu0 %691
        %693 = vrot.lane.b32.xlu0 %v678, 127
        %v694 = vpop.permute.xlu0 %693
        %v697 = vsel %vm567, %v692, 0.0
        %v698 = vsel %vm567, %v694, 0.0
        %699 = vrot.lane.b32.xlu0 %v540, 1
        %v700 = vpop.permute.xlu0 %699
        %701 = vrot.lane.b32.xlu0 %v541, 1
        %v702 = vpop.permute.xlu0 %701
        %v705 = vsel %vm558, 0.0, %v700
        %v706 = vsel %vm558, 0.0, %v702
        %707 = vrot.lane.b32.xlu0 %v540, 127
        %v708 = vpop.permute.xlu0 %707
        %709 = vrot.lane.b32.xlu0 %v541, 127
        %v710 = vpop.permute.xlu0 %709
        %v713 = vsel %vm567, %v708, 0.0
        %v714 = vsel %vm567, %v710, 0.0
        %v715 = vrot.slane %v540, 1
        %v716 = vrot.slane %v541, 1
        %v717 = vsel %vm586, %v715, %v716
        %v720 = vsel %vm586, %v716, 0.0
        %722 = vrot.lane.b32.xlu0 %v717, 1
        %v723 = vpop.permute.xlu0 %722
        %724 = vrot.lane.b32.xlu0 %v720, 1
        %v725 = vpop.permute.xlu0 %724
        %v728 = vsel %vm558, 0.0, %v723
        %v729 = vsel %vm558, 0.0, %v725
        %730 = vrot.lane.b32.xlu0 %v717, 127
        %v731 = vpop.permute.xlu0 %730
        %732 = vrot.lane.b32.xlu0 %v720, 127
        %v733 = vpop.permute.xlu0 %732
        %v736 = vsel %vm567, %v731, 0.0
        %v737 = vsel %vm567, %v733, 0.0
        %v738 = vstv %s447
        %v739 = vstv %s366
        %v740 = vmul.f32 %v739, %v559
        %v741 = vmul.f32 %v739, %v560
        %v742 = vadd.f32 %v738, %v740
        %v743 = vadd.f32 %v738, %v741
        %v744 = vstv %s369
        %v745 = vmul.f32 %v744, %v625
        %v746 = vmul.f32 %v744, %v626
        %v747 = vadd.f32 %v742, %v745
        %v748 = vadd.f32 %v743, %v746
        %v749 = vstv %s372
        %v750 = vmul.f32 %v749, %v689
        %v751 = vmul.f32 %v749, %v690
        %v752 = vadd.f32 %v747, %v750
        %v753 = vadd.f32 %v748, %v751
        %v754 = vstv %s375
        %v755 = vmul.f32 %v754, %v550
        %v756 = vmul.f32 %v754, %v547
        %v757 = vadd.f32 %v752, %v755
        %v758 = vadd.f32 %v753, %v756
        %v759 = vstv %s378
        %v760 = vmul.f32 %v759, %v617
        %v761 = vmul.f32 %v759, %v614
        %v762 = vadd.f32 %v757, %v760
        %v763 = vadd.f32 %v758, %v761
        %v764 = vstv %s381
        %v765 = vmul.f32 %v764, %v681
        %v766 = vmul.f32 %v764, %v678
        %v767 = vadd.f32 %v762, %v765
        %v768 = vadd.f32 %v763, %v766
        %v769 = vstv %s384
        %v770 = vmul.f32 %v769, %v568
        %v771 = vmul.f32 %v769, %v569
        %v772 = vadd.f32 %v767, %v770
        %v773 = vadd.f32 %v768, %v771
        %v774 = vstv %s387
        %v775 = vmul.f32 %v774, %v633
        %v776 = vmul.f32 %v774, %v634
        %v777 = vadd.f32 %v772, %v775
        %v778 = vadd.f32 %v773, %v776
        %v779 = vstv %s390
        %v780 = vmul.f32 %v779, %v697
        %v781 = vmul.f32 %v779, %v698
        %v782 = vadd.f32 %v777, %v780
        %v783 = vadd.f32 %v778, %v781
        %v784 = vstv %s393
        %v785 = vmul.f32 %v784, %v576
        %v786 = vmul.f32 %v784, %v577
        %v787 = vadd.f32 %v782, %v785
        %v788 = vadd.f32 %v783, %v786
        %v789 = vstv %s396
        %v790 = vmul.f32 %v789, %v641
        %v791 = vmul.f32 %v789, %v642
        %v792 = vadd.f32 %v787, %v790
        %v793 = vadd.f32 %v788, %v791
        %v794 = vstv %s399
        %v795 = vmul.f32 %v794, %v705
        %v796 = vmul.f32 %v794, %v706
        %v797 = vadd.f32 %v792, %v795
        %v798 = vadd.f32 %v793, %v796
        %v799 = vstv %s402
        %v800 = vmul.f32 %v799, %v534
        %v801 = vmul.f32 %v799, %v535
        %v802 = vadd.f32 %v797, %v800
        %v803 = vadd.f32 %v798, %v801
        %v804 = vstv %s405
        %v805 = vmul.f32 %v804, %v537
        %v806 = vmul.f32 %v804, %v538
        %v807 = vadd.f32 %v802, %v805
        %v808 = vadd.f32 %v803, %v806
        %v809 = vstv %s408
        %v810 = vmul.f32 %v809, %v540
        %v811 = vmul.f32 %v809, %v541
        %v812 = vadd.f32 %v807, %v810
        %v813 = vadd.f32 %v808, %v811
        %v814 = vstv %s411
        %v815 = vmul.f32 %v814, %v584
        %v816 = vmul.f32 %v814, %v585
        %v817 = vadd.f32 %v812, %v815
        %v818 = vadd.f32 %v813, %v816
        %v819 = vstv %s414
        %v820 = vmul.f32 %v819, %v649
        %v821 = vmul.f32 %v819, %v650
        %v822 = vadd.f32 %v817, %v820
        %v823 = vadd.f32 %v818, %v821
        %v824 = vstv %s417
        %v825 = vmul.f32 %v824, %v713
        %v826 = vmul.f32 %v824, %v714
        %v827 = vadd.f32 %v822, %v825
        %v828 = vadd.f32 %v823, %v826
        %v829 = vstv %s420
        %v830 = vmul.f32 %v829, %v600
        %v831 = vmul.f32 %v829, %v601
        %v832 = vadd.f32 %v827, %v830
        %v833 = vadd.f32 %v828, %v831
        %v834 = vstv %s423
        %v835 = vmul.f32 %v834, %v664
        %v836 = vmul.f32 %v834, %v665
        %v837 = vadd.f32 %v832, %v835
        %v838 = vadd.f32 %v833, %v836
        %v839 = vstv %s426
        %v840 = vmul.f32 %v839, %v728
        %v841 = vmul.f32 %v839, %v729
        %v842 = vadd.f32 %v837, %v840
        %v843 = vadd.f32 %v838, %v841
        %v844 = vstv %s429
        %v845 = vmul.f32 %v844, %v589
        %v846 = vmul.f32 %v844, %v592
        %v847 = vadd.f32 %v842, %v845
        %v848 = vadd.f32 %v843, %v846
        %v849 = vstv %s432
        %v850 = vmul.f32 %v849, %v653
        %v851 = vmul.f32 %v849, %v656
        %v852 = vadd.f32 %v847, %v850
        %v853 = vadd.f32 %v848, %v851
        %v854 = vstv %s435
        %v855 = vmul.f32 %v854, %v717
        %v856 = vmul.f32 %v854, %v720
        %v857 = vadd.f32 %v852, %v855
        %v858 = vadd.f32 %v853, %v856
        %v859 = vstv %s438
        %v860 = vmul.f32 %v859, %v608
        %v861 = vmul.f32 %v859, %v609
        %v862 = vadd.f32 %v857, %v860
        %v863 = vadd.f32 %v858, %v861
        %v864 = vstv %s441
        %v865 = vmul.f32 %v864, %v672
        %v866 = vmul.f32 %v864, %v673
        %v867 = vadd.f32 %v862, %v865
        %v868 = vadd.f32 %v863, %v866
        %v869 = vstv %s444
        %v870 = vmul.f32 %v869, %v736
        %v871 = vmul.f32 %v869, %v737
        %v872 = vadd.f32 %v867, %v870
        %v873 = vadd.f32 %v868, %v871
        %v874 = vstv %s448
        %v875 = vstv %s367
        %v876 = vmul.f32 %v875, %v559
        %v877 = vmul.f32 %v875, %v560
        %v878 = vadd.f32 %v874, %v876
        %v879 = vadd.f32 %v874, %v877
        %v880 = vstv %s370
        %v881 = vmul.f32 %v880, %v625
        %v882 = vmul.f32 %v880, %v626
        %v883 = vadd.f32 %v878, %v881
        %v884 = vadd.f32 %v879, %v882
        %v885 = vstv %s373
        %v886 = vmul.f32 %v885, %v689
        %v887 = vmul.f32 %v885, %v690
        %v888 = vadd.f32 %v883, %v886
        %v889 = vadd.f32 %v884, %v887
        %v890 = vstv %s376
        %v891 = vmul.f32 %v890, %v550
        %v892 = vmul.f32 %v890, %v547
        %v893 = vadd.f32 %v888, %v891
        %v894 = vadd.f32 %v889, %v892
        %v895 = vstv %s379
        %v896 = vmul.f32 %v895, %v617
        %v897 = vmul.f32 %v895, %v614
        %v898 = vadd.f32 %v893, %v896
        %v899 = vadd.f32 %v894, %v897
        %v900 = vstv %s382
        %v901 = vmul.f32 %v900, %v681
        %v902 = vmul.f32 %v900, %v678
        %v903 = vadd.f32 %v898, %v901
        %v904 = vadd.f32 %v899, %v902
        %v905 = vstv %s385
        %v906 = vmul.f32 %v905, %v568
        %v907 = vmul.f32 %v905, %v569
        %v908 = vadd.f32 %v903, %v906
        %v909 = vadd.f32 %v904, %v907
        %v910 = vstv %s388
        %v911 = vmul.f32 %v910, %v633
        %v912 = vmul.f32 %v910, %v634
        %v913 = vadd.f32 %v908, %v911
        %v914 = vadd.f32 %v909, %v912
        %v915 = vstv %s391
        %v916 = vmul.f32 %v915, %v697
        %v917 = vmul.f32 %v915, %v698
        %v918 = vadd.f32 %v913, %v916
        %v919 = vadd.f32 %v914, %v917
        %v920 = vstv %s394
        %v921 = vmul.f32 %v920, %v576
        %v922 = vmul.f32 %v920, %v577
        %v923 = vadd.f32 %v918, %v921
        %v924 = vadd.f32 %v919, %v922
        %v925 = vstv %s397
        %v926 = vmul.f32 %v925, %v641
        %v927 = vmul.f32 %v925, %v642
        %v928 = vadd.f32 %v923, %v926
        %v929 = vadd.f32 %v924, %v927
        %v930 = vstv %s400
        %v931 = vmul.f32 %v930, %v705
        %v932 = vmul.f32 %v930, %v706
        %v933 = vadd.f32 %v928, %v931
        %v934 = vadd.f32 %v929, %v932
        %v935 = vstv %s403
        %v936 = vmul.f32 %v935, %v534
        %v937 = vmul.f32 %v935, %v535
        %v938 = vadd.f32 %v933, %v936
        %v939 = vadd.f32 %v934, %v937
        %v940 = vstv %s406
        %v941 = vmul.f32 %v940, %v537
        %v942 = vmul.f32 %v940, %v538
        %v943 = vadd.f32 %v938, %v941
        %v944 = vadd.f32 %v939, %v942
        %v945 = vstv %s409
        %v946 = vmul.f32 %v945, %v540
        %v947 = vmul.f32 %v945, %v541
        %v948 = vadd.f32 %v943, %v946
        %v949 = vadd.f32 %v944, %v947
        %v950 = vstv %s412
        %v951 = vmul.f32 %v950, %v584
        %v952 = vmul.f32 %v950, %v585
        %v953 = vadd.f32 %v948, %v951
        %v954 = vadd.f32 %v949, %v952
        %v955 = vstv %s415
        %v956 = vmul.f32 %v955, %v649
        %v957 = vmul.f32 %v955, %v650
        %v958 = vadd.f32 %v953, %v956
        %v959 = vadd.f32 %v954, %v957
        %v960 = vstv %s418
        %v961 = vmul.f32 %v960, %v713
        %v962 = vmul.f32 %v960, %v714
        %v963 = vadd.f32 %v958, %v961
        %v964 = vadd.f32 %v959, %v962
        %v965 = vstv %s421
        %v966 = vmul.f32 %v965, %v600
        %v967 = vmul.f32 %v965, %v601
        %v968 = vadd.f32 %v963, %v966
        %v969 = vadd.f32 %v964, %v967
        %v970 = vstv %s424
        %v971 = vmul.f32 %v970, %v664
        %v972 = vmul.f32 %v970, %v665
        %v973 = vadd.f32 %v968, %v971
        %v974 = vadd.f32 %v969, %v972
        %v975 = vstv %s427
        %v976 = vmul.f32 %v975, %v728
        %v977 = vmul.f32 %v975, %v729
        %v978 = vadd.f32 %v973, %v976
        %v979 = vadd.f32 %v974, %v977
        %v980 = vstv %s430
        %v981 = vmul.f32 %v980, %v589
        %v982 = vmul.f32 %v980, %v592
        %v983 = vadd.f32 %v978, %v981
        %v984 = vadd.f32 %v979, %v982
        %v985 = vstv %s433
        %v986 = vmul.f32 %v985, %v653
        %v987 = vmul.f32 %v985, %v656
        %v988 = vadd.f32 %v983, %v986
        %v989 = vadd.f32 %v984, %v987
        %v990 = vstv %s436
        %v991 = vmul.f32 %v990, %v717
        %v992 = vmul.f32 %v990, %v720
        %v993 = vadd.f32 %v988, %v991
        %v994 = vadd.f32 %v989, %v992
        %v995 = vstv %s439
        %v996 = vmul.f32 %v995, %v608
        %v997 = vmul.f32 %v995, %v609
        %v998 = vadd.f32 %v993, %v996
        %v999 = vadd.f32 %v994, %v997
        %v1000 = vstv %s442
        %v1001 = vmul.f32 %v1000, %v672
        %v1002 = vmul.f32 %v1000, %v673
        %v1003 = vadd.f32 %v998, %v1001
        %v1004 = vadd.f32 %v999, %v1002
        %v1005 = vstv %s445
        %v1006 = vmul.f32 %v1005, %v736
        %v1007 = vmul.f32 %v1005, %v737
        %v1008 = vadd.f32 %v1003, %v1006
        %v1009 = vadd.f32 %v1004, %v1007
        %v1010 = vstv %s449
        %v1011 = vstv %s368
        %v1012 = vmul.f32 %v1011, %v559
        %v1013 = vmul.f32 %v1011, %v560
        %v1014 = vadd.f32 %v1010, %v1012
        %v1015 = vadd.f32 %v1010, %v1013
        %v1016 = vstv %s371
        %v1017 = vmul.f32 %v1016, %v625
        %v1018 = vmul.f32 %v1016, %v626
        %v1019 = vadd.f32 %v1014, %v1017
        %v1020 = vadd.f32 %v1015, %v1018
        %v1021 = vstv %s374
        %v1022 = vmul.f32 %v1021, %v689
        %v1023 = vmul.f32 %v1021, %v690
        %v1024 = vadd.f32 %v1019, %v1022
        %v1025 = vadd.f32 %v1020, %v1023
        %v1026 = vstv %s377
        %v1027 = vmul.f32 %v1026, %v550
        %v1028 = vmul.f32 %v1026, %v547
        %v1029 = vadd.f32 %v1024, %v1027
        %v1030 = vadd.f32 %v1025, %v1028
        %v1031 = vstv %s380
        %v1032 = vmul.f32 %v1031, %v617
        %v1033 = vmul.f32 %v1031, %v614
        %v1034 = vadd.f32 %v1029, %v1032
        %v1035 = vadd.f32 %v1030, %v1033
        %v1036 = vstv %s383
        %v1037 = vmul.f32 %v1036, %v681
        %v1038 = vmul.f32 %v1036, %v678
        %v1039 = vadd.f32 %v1034, %v1037
        %v1040 = vadd.f32 %v1035, %v1038
        %v1041 = vstv %s386
        %v1042 = vmul.f32 %v1041, %v568
        %v1043 = vmul.f32 %v1041, %v569
        %v1044 = vadd.f32 %v1039, %v1042
        %v1045 = vadd.f32 %v1040, %v1043
        %v1046 = vstv %s389
        %v1047 = vmul.f32 %v1046, %v633
        %v1048 = vmul.f32 %v1046, %v634
        %v1049 = vadd.f32 %v1044, %v1047
        %v1050 = vadd.f32 %v1045, %v1048
        %v1051 = vstv %s392
        %v1052 = vmul.f32 %v1051, %v697
        %v1053 = vmul.f32 %v1051, %v698
        %v1054 = vadd.f32 %v1049, %v1052
        %v1055 = vadd.f32 %v1050, %v1053
        %v1056 = vstv %s395
        %v1057 = vmul.f32 %v1056, %v576
        %v1058 = vmul.f32 %v1056, %v577
        %v1059 = vadd.f32 %v1054, %v1057
        %v1060 = vadd.f32 %v1055, %v1058
        %v1061 = vstv %s398
        %v1062 = vmul.f32 %v1061, %v641
        %v1063 = vmul.f32 %v1061, %v642
        %v1064 = vadd.f32 %v1059, %v1062
        %v1065 = vadd.f32 %v1060, %v1063
        %v1066 = vstv %s401
        %v1067 = vmul.f32 %v1066, %v705
        %v1068 = vmul.f32 %v1066, %v706
        %v1069 = vadd.f32 %v1064, %v1067
        %v1070 = vadd.f32 %v1065, %v1068
        %v1071 = vstv %s404
        %v1072 = vmul.f32 %v1071, %v534
        %v1073 = vmul.f32 %v1071, %v535
        %v1074 = vadd.f32 %v1069, %v1072
        %v1075 = vadd.f32 %v1070, %v1073
        %v1076 = vstv %s407
        %v1077 = vmul.f32 %v1076, %v537
        %v1078 = vmul.f32 %v1076, %v538
        %v1079 = vadd.f32 %v1074, %v1077
        %v1080 = vadd.f32 %v1075, %v1078
        %v1081 = vstv %s410
        %v1082 = vmul.f32 %v1081, %v540
        %v1083 = vmul.f32 %v1081, %v541
        %v1084 = vadd.f32 %v1079, %v1082
        %v1085 = vadd.f32 %v1080, %v1083
        %v1086 = vstv %s413
        %v1087 = vmul.f32 %v1086, %v584
        %v1088 = vmul.f32 %v1086, %v585
        %v1089 = vadd.f32 %v1084, %v1087
        %v1090 = vadd.f32 %v1085, %v1088
        %v1091 = vstv %s416
        %v1092 = vmul.f32 %v1091, %v649
        %v1093 = vmul.f32 %v1091, %v650
        %v1094 = vadd.f32 %v1089, %v1092
        %v1095 = vadd.f32 %v1090, %v1093
        %v1096 = vstv %s419
        %v1097 = vmul.f32 %v1096, %v713
        %v1098 = vmul.f32 %v1096, %v714
        %v1099 = vadd.f32 %v1094, %v1097
        %v1100 = vadd.f32 %v1095, %v1098
        %v1101 = vstv %s422
        %v1102 = vmul.f32 %v1101, %v600
        %v1103 = vmul.f32 %v1101, %v601
        %v1104 = vadd.f32 %v1099, %v1102
        %v1105 = vadd.f32 %v1100, %v1103
        %v1106 = vstv %s425
        %v1107 = vmul.f32 %v1106, %v664
        %v1108 = vmul.f32 %v1106, %v665
        %v1109 = vadd.f32 %v1104, %v1107
        %v1110 = vadd.f32 %v1105, %v1108
        %v1111 = vstv %s428
        %v1112 = vmul.f32 %v1111, %v728
        %v1113 = vmul.f32 %v1111, %v729
        %v1114 = vadd.f32 %v1109, %v1112
        %v1115 = vadd.f32 %v1110, %v1113
        %v1116 = vstv %s431
        %v1117 = vmul.f32 %v1116, %v589
        %v1118 = vmul.f32 %v1116, %v592
        %v1119 = vadd.f32 %v1114, %v1117
        %v1120 = vadd.f32 %v1115, %v1118
        %v1121 = vstv %s434
        %v1122 = vmul.f32 %v1121, %v653
        %v1123 = vmul.f32 %v1121, %v656
        %v1124 = vadd.f32 %v1119, %v1122
        %v1125 = vadd.f32 %v1120, %v1123
        %v1126 = vstv %s437
        %v1127 = vmul.f32 %v1126, %v717
        %v1128 = vmul.f32 %v1126, %v720
        %v1129 = vadd.f32 %v1124, %v1127
        %v1130 = vadd.f32 %v1125, %v1128
        %v1131 = vstv %s440
        %v1132 = vmul.f32 %v1131, %v608
        %v1133 = vmul.f32 %v1131, %v609
        %v1134 = vadd.f32 %v1129, %v1132
        %v1135 = vadd.f32 %v1130, %v1133
        %v1136 = vstv %s443
        %v1137 = vmul.f32 %v1136, %v672
        %v1138 = vmul.f32 %v1136, %v673
        %v1139 = vadd.f32 %v1134, %v1137
        %v1140 = vadd.f32 %v1135, %v1138
        %v1141 = vstv %s446
        %v1142 = vmul.f32 %v1141, %v736
        %v1143 = vmul.f32 %v1141, %v737
        %v1144 = vadd.f32 %v1139, %v1142
        %v1145 = vadd.f32 %v1140, %v1143
        %v1146 = vld [vmem:[%s310] sm:$0xff]
        %v1147 = vld [vmem:[%s310 + $0x8] sm:$0xff]
        %s1148 = scalar_lea.vmem %s310, 16 [#allocation6]
        %v1149 = vld [vmem:[%s1148] sm:$0xff]
        %v1150 = vld [vmem:[%s1148 + $0x8] sm:$0xff]
        %s1151 = scalar_lea.vmem %s310, 32 [#allocation6]
        %v1152 = vld [vmem:[%s1151] sm:$0xff]
        %v1153 = vld [vmem:[%s1151 + $0x8] sm:$0xff]
        %v1156 = vrot.slane %v1146, 7
        %v1157 = vrot.slane %v1147, 7
        %v1158 = vsel %vm544, %v1156, %v1157
        %v1161 = vsel %vm544, 0.0, %v1156
        %1163 = vrot.lane.b32.xlu0 %v1161, 1
        %v1164 = vpop.permute.xlu0 %1163
        %1165 = vrot.lane.b32.xlu0 %v1158, 1
        %v1166 = vpop.permute.xlu0 %1165
        %v1169 = vsel %vm558, 0.0, %v1164
        %v1170 = vsel %vm558, 0.0, %v1166
        %1171 = vrot.lane.b32.xlu0 %v1161, 127
        %v1172 = vpop.permute.xlu0 %1171
        %1173 = vrot.lane.b32.xlu0 %v1158, 127
        %v1174 = vpop.permute.xlu0 %1173
        %v1177 = vsel %vm567, %v1172, 0.0
        %v1178 = vsel %vm567, %v1174, 0.0
        %1179 = vrot.lane.b32.xlu0 %v1146, 1
        %v1180 = vpop.permute.xlu0 %1179
        %1181 = vrot.lane.b32.xlu0 %v1147, 1
        %v1182 = vpop.permute.xlu0 %1181
        %v1185 = vsel %vm558, 0.0, %v1180
        %v1186 = vsel %vm558, 0.0, %v1182
        %1187 = vrot.lane.b32.xlu0 %v1146, 127
        %v1188 = vpop.permute.xlu0 %1187
        %1189 = vrot.lane.b32.xlu0 %v1147, 127
        %v1190 = vpop.permute.xlu0 %1189
        %v1193 = vsel %vm567, %v1188, 0.0
        %v1194 = vsel %vm567, %v1190, 0.0
        %v1195 = vrot.slane %v1146, 1
        %v1196 = vrot.slane %v1147, 1
        %v1197 = vsel %vm586, %v1195, %v1196
        %v1200 = vsel %vm586, %v1196, 0.0
        %1202 = vrot.lane.b32.xlu0 %v1197, 1
        %v1203 = vpop.permute.xlu0 %1202
        %1204 = vrot.lane.b32.xlu0 %v1200, 1
        %v1205 = vpop.permute.xlu0 %1204
        %v1208 = vsel %vm558, 0.0, %v1203
        %v1209 = vsel %vm558, 0.0, %v1205
        %1210 = vrot.lane.b32.xlu0 %v1197, 127
        %v1211 = vpop.permute.xlu0 %1210
        %1212 = vrot.lane.b32.xlu0 %v1200, 127
        %v1213 = vpop.permute.xlu0 %1212
        %v1216 = vsel %vm567, %v1211, 0.0
        %v1217 = vsel %vm567, %v1213, 0.0
        %v1220 = vrot.slane %v1149, 7
        %v1221 = vrot.slane %v1150, 7
        %v1222 = vsel %vm544, %v1220, %v1221
        %v1225 = vsel %vm544, 0.0, %v1220
        %1227 = vrot.lane.b32.xlu0 %v1225, 1
        %v1228 = vpop.permute.xlu0 %1227
        %1229 = vrot.lane.b32.xlu0 %v1222, 1
        %v1230 = vpop.permute.xlu0 %1229
        %v1233 = vsel %vm558, 0.0, %v1228
        %v1234 = vsel %vm558, 0.0, %v1230
        %1235 = vrot.lane.b32.xlu0 %v1225, 127
        %v1236 = vpop.permute.xlu0 %1235
        %1237 = vrot.lane.b32.xlu0 %v1222, 127
        %v1238 = vpop.permute.xlu0 %1237
        %v1241 = vsel %vm567, %v1236, 0.0
        %v1242 = vsel %vm567, %v1238, 0.0
        %1243 = vrot.lane.b32.xlu0 %v1149, 1
        %v1244 = vpop.permute.xlu0 %1243
        %1245 = vrot.lane.b32.xlu0 %v1150, 1
        %v1246 = vpop.permute.xlu0 %1245
        %v1249 = vsel %vm558, 0.0, %v1244
        %v1250 = vsel %vm558, 0.0, %v1246
        %1251 = vrot.lane.b32.xlu0 %v1149, 127
        %v1252 = vpop.permute.xlu0 %1251
        %1253 = vrot.lane.b32.xlu0 %v1150, 127
        %v1254 = vpop.permute.xlu0 %1253
        %v1257 = vsel %vm567, %v1252, 0.0
        %v1258 = vsel %vm567, %v1254, 0.0
        %v1259 = vrot.slane %v1149, 1
        %v1260 = vrot.slane %v1150, 1
        %v1261 = vsel %vm586, %v1259, %v1260
        %v1264 = vsel %vm586, %v1260, 0.0
        %1266 = vrot.lane.b32.xlu0 %v1261, 1
        %v1267 = vpop.permute.xlu0 %1266
        %1268 = vrot.lane.b32.xlu0 %v1264, 1
        %v1269 = vpop.permute.xlu0 %1268
        %v1272 = vsel %vm558, 0.0, %v1267
        %v1273 = vsel %vm558, 0.0, %v1269
        %1274 = vrot.lane.b32.xlu0 %v1261, 127
        %v1275 = vpop.permute.xlu0 %1274
        %1276 = vrot.lane.b32.xlu0 %v1264, 127
        %v1277 = vpop.permute.xlu0 %1276
        %v1280 = vsel %vm567, %v1275, 0.0
        %v1281 = vsel %vm567, %v1277, 0.0
        %v1284 = vrot.slane %v1152, 7
        %v1285 = vrot.slane %v1153, 7
        %v1286 = vsel %vm544, %v1284, %v1285
        %v1289 = vsel %vm544, 0.0, %v1284
        %1291 = vrot.lane.b32.xlu0 %v1289, 1
        %v1292 = vpop.permute.xlu0 %1291
        %1293 = vrot.lane.b32.xlu0 %v1286, 1
        %v1294 = vpop.permute.xlu0 %1293
        %v1297 = vsel %vm558, 0.0, %v1292
        %v1298 = vsel %vm558, 0.0, %v1294
        %1299 = vrot.lane.b32.xlu0 %v1289, 127
        %v1300 = vpop.permute.xlu0 %1299
        %1301 = vrot.lane.b32.xlu0 %v1286, 127
        %v1302 = vpop.permute.xlu0 %1301
        %v1305 = vsel %vm567, %v1300, 0.0
        %v1306 = vsel %vm567, %v1302, 0.0
        %1307 = vrot.lane.b32.xlu0 %v1152, 1
        %v1308 = vpop.permute.xlu0 %1307
        %1309 = vrot.lane.b32.xlu0 %v1153, 1
        %v1310 = vpop.permute.xlu0 %1309
        %v1313 = vsel %vm558, 0.0, %v1308
        %v1314 = vsel %vm558, 0.0, %v1310
        %1315 = vrot.lane.b32.xlu0 %v1152, 127
        %v1316 = vpop.permute.xlu0 %1315
        %1317 = vrot.lane.b32.xlu0 %v1153, 127
        %v1318 = vpop.permute.xlu0 %1317
        %v1321 = vsel %vm567, %v1316, 0.0
        %v1322 = vsel %vm567, %v1318, 0.0
        %v1323 = vrot.slane %v1152, 1
        %v1324 = vrot.slane %v1153, 1
        %v1325 = vsel %vm586, %v1323, %v1324
        %v1328 = vsel %vm586, %v1324, 0.0
        %1330 = vrot.lane.b32.xlu0 %v1325, 1
        %v1331 = vpop.permute.xlu0 %1330
        %1332 = vrot.lane.b32.xlu0 %v1328, 1
        %v1333 = vpop.permute.xlu0 %1332
        %v1336 = vsel %vm558, 0.0, %v1331
        %v1337 = vsel %vm558, 0.0, %v1333
        %1338 = vrot.lane.b32.xlu0 %v1325, 127
        %v1339 = vpop.permute.xlu0 %1338
        %1340 = vrot.lane.b32.xlu0 %v1328, 127
        %v1341 = vpop.permute.xlu0 %1340
        %v1344 = vsel %vm567, %v1339, 0.0
        %v1345 = vsel %vm567, %v1341, 0.0
        %v1346 = vstv %s531
        %v1347 = vstv %s450
        %v1348 = vmul.f32 %v1347, %v1169
        %v1349 = vmul.f32 %v1347, %v1170
        %v1350 = vadd.f32 %v1346, %v1348
        %v1351 = vadd.f32 %v1346, %v1349
        %v1352 = vstv %s453
        %v1353 = vmul.f32 %v1352, %v1233
        %v1354 = vmul.f32 %v1352, %v1234
        %v1355 = vadd.f32 %v1350, %v1353
        %v1356 = vadd.f32 %v1351, %v1354
        %v1357 = vstv %s456
        %v1358 = vmul.f32 %v1357, %v1297
        %v1359 = vmul.f32 %v1357, %v1298
        %v1360 = vadd.f32 %v1355, %v1358
        %v1361 = vadd.f32 %v1356, %v1359
        %v1362 = vstv %s459
        %v1363 = vmul.f32 %v1362, %v1161
        %v1364 = vmul.f32 %v1362, %v1158
        %v1365 = vadd.f32 %v1360, %v1363
        %v1366 = vadd.f32 %v1361, %v1364
        %v1367 = vstv %s462
        %v1368 = vmul.f32 %v1367, %v1225
        %v1369 = vmul.f32 %v1367, %v1222
        %v1370 = vadd.f32 %v1365, %v1368
        %v1371 = vadd.f32 %v1366, %v1369
        %v1372 = vstv %s465
        %v1373 = vmul.f32 %v1372, %v1289
        %v1374 = vmul.f32 %v1372, %v1286
        %v1375 = vadd.f32 %v1370, %v1373
        %v1376 = vadd.f32 %v1371, %v1374
        %v1377 = vstv %s468
        %v1378 = vmul.f32 %v1377, %v1177
        %v1379 = vmul.f32 %v1377, %v1178
        %v1380 = vadd.f32 %v1375, %v1378
        %v1381 = vadd.f32 %v1376, %v1379
        %v1382 = vstv %s471
        %v1383 = vmul.f32 %v1382, %v1241
        %v1384 = vmul.f32 %v1382, %v1242
        %v1385 = vadd.f32 %v1380, %v1383
        %v1386 = vadd.f32 %v1381, %v1384
        %v1387 = vstv %s474
        %v1388 = vmul.f32 %v1387, %v1305
        %v1389 = vmul.f32 %v1387, %v1306
        %v1390 = vadd.f32 %v1385, %v1388
        %v1391 = vadd.f32 %v1386, %v1389
        %v1392 = vstv %s477
        %v1393 = vmul.f32 %v1392, %v1185
        %v1394 = vmul.f32 %v1392, %v1186
        %v1395 = vadd.f32 %v1390, %v1393
        %v1396 = vadd.f32 %v1391, %v1394
        %v1397 = vstv %s480
        %v1398 = vmul.f32 %v1397, %v1249
        %v1399 = vmul.f32 %v1397, %v1250
        %v1400 = vadd.f32 %v1395, %v1398
        %v1401 = vadd.f32 %v1396, %v1399
        %v1402 = vstv %s483
        %v1403 = vmul.f32 %v1402, %v1313
        %v1404 = vmul.f32 %v1402, %v1314
        %v1405 = vadd.f32 %v1400, %v1403
        %v1406 = vadd.f32 %v1401, %v1404
        %v1407 = vstv %s486
        %v1408 = vmul.f32 %v1407, %v1146
        %v1409 = vmul.f32 %v1407, %v1147
        %v1410 = vadd.f32 %v1405, %v1408
        %v1411 = vadd.f32 %v1406, %v1409
        %v1412 = vstv %s489
        %v1413 = vmul.f32 %v1412, %v1149
        %v1414 = vmul.f32 %v1412, %v1150
        %v1415 = vadd.f32 %v1410, %v1413
        %v1416 = vadd.f32 %v1411, %v1414
        %v1417 = vstv %s492
        %v1418 = vmul.f32 %v1417, %v1152
        %v1419 = vmul.f32 %v1417, %v1153
        %v1420 = vadd.f32 %v1415, %v1418
        %v1421 = vadd.f32 %v1416, %v1419
        %v1422 = vstv %s495
        %v1423 = vmul.f32 %v1422, %v1193
        %v1424 = vmul.f32 %v1422, %v1194
        %v1425 = vadd.f32 %v1420, %v1423
        %v1426 = vadd.f32 %v1421, %v1424
        %v1427 = vstv %s498
        %v1428 = vmul.f32 %v1427, %v1257
        %v1429 = vmul.f32 %v1427, %v1258
        %v1430 = vadd.f32 %v1425, %v1428
        %v1431 = vadd.f32 %v1426, %v1429
        %v1432 = vstv %s501
        %v1433 = vmul.f32 %v1432, %v1321
        %v1434 = vmul.f32 %v1432, %v1322
        %v1435 = vadd.f32 %v1430, %v1433
        %v1436 = vadd.f32 %v1431, %v1434
        %v1437 = vstv %s504
        %v1438 = vmul.f32 %v1437, %v1208
        %v1439 = vmul.f32 %v1437, %v1209
        %v1440 = vadd.f32 %v1435, %v1438
        %v1441 = vadd.f32 %v1436, %v1439
        %v1442 = vstv %s507
        %v1443 = vmul.f32 %v1442, %v1272
        %v1444 = vmul.f32 %v1442, %v1273
        %v1445 = vadd.f32 %v1440, %v1443
        %v1446 = vadd.f32 %v1441, %v1444
        %v1447 = vstv %s510
        %v1448 = vmul.f32 %v1447, %v1336
        %v1449 = vmul.f32 %v1447, %v1337
        %v1450 = vadd.f32 %v1445, %v1448
        %v1451 = vadd.f32 %v1446, %v1449
        %v1452 = vstv %s513
        %v1453 = vmul.f32 %v1452, %v1197
        %v1454 = vmul.f32 %v1452, %v1200
        %v1455 = vadd.f32 %v1450, %v1453
        %v1456 = vadd.f32 %v1451, %v1454
        %v1457 = vstv %s516
        %v1458 = vmul.f32 %v1457, %v1261
        %v1459 = vmul.f32 %v1457, %v1264
        %v1460 = vadd.f32 %v1455, %v1458
        %v1461 = vadd.f32 %v1456, %v1459
        %v1462 = vstv %s519
        %v1463 = vmul.f32 %v1462, %v1325
        %v1464 = vmul.f32 %v1462, %v1328
        %v1465 = vadd.f32 %v1460, %v1463
        %v1466 = vadd.f32 %v1461, %v1464
        %v1467 = vstv %s522
        %v1468 = vmul.f32 %v1467, %v1216
        %v1469 = vmul.f32 %v1467, %v1217
        %v1470 = vadd.f32 %v1465, %v1468
        %v1471 = vadd.f32 %v1466, %v1469
        %v1472 = vstv %s525
        %v1473 = vmul.f32 %v1472, %v1280
        %v1474 = vmul.f32 %v1472, %v1281
        %v1475 = vadd.f32 %v1470, %v1473
        %v1476 = vadd.f32 %v1471, %v1474
        %v1477 = vstv %s528
        %v1478 = vmul.f32 %v1477, %v1344
        %v1479 = vmul.f32 %v1477, %v1345
        %v1480 = vadd.f32 %v1475, %v1478
        %v1481 = vadd.f32 %v1476, %v1479
        %v1482 = vstv %s532
        %v1483 = vstv %s451
        %v1484 = vmul.f32 %v1483, %v1169
        %v1485 = vmul.f32 %v1483, %v1170
        %v1486 = vadd.f32 %v1482, %v1484
        %v1487 = vadd.f32 %v1482, %v1485
        %v1488 = vstv %s454
        %v1489 = vmul.f32 %v1488, %v1233
        %v1490 = vmul.f32 %v1488, %v1234
        %v1491 = vadd.f32 %v1486, %v1489
        %v1492 = vadd.f32 %v1487, %v1490
        %v1493 = vstv %s457
        %v1494 = vmul.f32 %v1493, %v1297
        %v1495 = vmul.f32 %v1493, %v1298
        %v1496 = vadd.f32 %v1491, %v1494
        %v1497 = vadd.f32 %v1492, %v1495
        %v1498 = vstv %s460
        %v1499 = vmul.f32 %v1498, %v1161
        %v1500 = vmul.f32 %v1498, %v1158
        %v1501 = vadd.f32 %v1496, %v1499
        %v1502 = vadd.f32 %v1497, %v1500
        %v1503 = vstv %s463
        %v1504 = vmul.f32 %v1503, %v1225
        %v1505 = vmul.f32 %v1503, %v1222
        %v1506 = vadd.f32 %v1501, %v1504
        %v1507 = vadd.f32 %v1502, %v1505
        %v1508 = vstv %s466
        %v1509 = vmul.f32 %v1508, %v1289
        %v1510 = vmul.f32 %v1508, %v1286
        %v1511 = vadd.f32 %v1506, %v1509
        %v1512 = vadd.f32 %v1507, %v1510
        %v1513 = vstv %s469
        %v1514 = vmul.f32 %v1513, %v1177
        %v1515 = vmul.f32 %v1513, %v1178
        %v1516 = vadd.f32 %v1511, %v1514
        %v1517 = vadd.f32 %v1512, %v1515
        %v1518 = vstv %s472
        %v1519 = vmul.f32 %v1518, %v1241
        %v1520 = vmul.f32 %v1518, %v1242
        %v1521 = vadd.f32 %v1516, %v1519
        %v1522 = vadd.f32 %v1517, %v1520
        %v1523 = vstv %s475
        %v1524 = vmul.f32 %v1523, %v1305
        %v1525 = vmul.f32 %v1523, %v1306
        %v1526 = vadd.f32 %v1521, %v1524
        %v1527 = vadd.f32 %v1522, %v1525
        %v1528 = vstv %s478
        %v1529 = vmul.f32 %v1528, %v1185
        %v1530 = vmul.f32 %v1528, %v1186
        %v1531 = vadd.f32 %v1526, %v1529
        %v1532 = vadd.f32 %v1527, %v1530
        %v1533 = vstv %s481
        %v1534 = vmul.f32 %v1533, %v1249
        %v1535 = vmul.f32 %v1533, %v1250
        %v1536 = vadd.f32 %v1531, %v1534
        %v1537 = vadd.f32 %v1532, %v1535
        %v1538 = vstv %s484
        %v1539 = vmul.f32 %v1538, %v1313
        %v1540 = vmul.f32 %v1538, %v1314
        %v1541 = vadd.f32 %v1536, %v1539
        %v1542 = vadd.f32 %v1537, %v1540
        %v1543 = vstv %s487
        %v1544 = vmul.f32 %v1543, %v1146
        %v1545 = vmul.f32 %v1543, %v1147
        %v1546 = vadd.f32 %v1541, %v1544
        %v1547 = vadd.f32 %v1542, %v1545
        %v1548 = vstv %s490
        %v1549 = vmul.f32 %v1548, %v1149
        %v1550 = vmul.f32 %v1548, %v1150
        %v1551 = vadd.f32 %v1546, %v1549
        %v1552 = vadd.f32 %v1547, %v1550
        %v1553 = vstv %s493
        %v1554 = vmul.f32 %v1553, %v1152
        %v1555 = vmul.f32 %v1553, %v1153
        %v1556 = vadd.f32 %v1551, %v1554
        %v1557 = vadd.f32 %v1552, %v1555
        %v1558 = vstv %s496
        %v1559 = vmul.f32 %v1558, %v1193
        %v1560 = vmul.f32 %v1558, %v1194
        %v1561 = vadd.f32 %v1556, %v1559
        %v1562 = vadd.f32 %v1557, %v1560
        %v1563 = vstv %s499
        %v1564 = vmul.f32 %v1563, %v1257
        %v1565 = vmul.f32 %v1563, %v1258
        %v1566 = vadd.f32 %v1561, %v1564
        %v1567 = vadd.f32 %v1562, %v1565
        %v1568 = vstv %s502
        %v1569 = vmul.f32 %v1568, %v1321
        %v1570 = vmul.f32 %v1568, %v1322
        %v1571 = vadd.f32 %v1566, %v1569
        %v1572 = vadd.f32 %v1567, %v1570
        %v1573 = vstv %s505
        %v1574 = vmul.f32 %v1573, %v1208
        %v1575 = vmul.f32 %v1573, %v1209
        %v1576 = vadd.f32 %v1571, %v1574
        %v1577 = vadd.f32 %v1572, %v1575
        %v1578 = vstv %s508
        %v1579 = vmul.f32 %v1578, %v1272
        %v1580 = vmul.f32 %v1578, %v1273
        %v1581 = vadd.f32 %v1576, %v1579
        %v1582 = vadd.f32 %v1577, %v1580
        %v1583 = vstv %s511
        %v1584 = vmul.f32 %v1583, %v1336
        %v1585 = vmul.f32 %v1583, %v1337
        %v1586 = vadd.f32 %v1581, %v1584
        %v1587 = vadd.f32 %v1582, %v1585
        %v1588 = vstv %s514
        %v1589 = vmul.f32 %v1588, %v1197
        %v1590 = vmul.f32 %v1588, %v1200
        %v1591 = vadd.f32 %v1586, %v1589
        %v1592 = vadd.f32 %v1587, %v1590
        %v1593 = vstv %s517
        %v1594 = vmul.f32 %v1593, %v1261
        %v1595 = vmul.f32 %v1593, %v1264
        %v1596 = vadd.f32 %v1591, %v1594
        %v1597 = vadd.f32 %v1592, %v1595
        %v1598 = vstv %s520
        %v1599 = vmul.f32 %v1598, %v1325
        %v1600 = vmul.f32 %v1598, %v1328
        %v1601 = vadd.f32 %v1596, %v1599
        %v1602 = vadd.f32 %v1597, %v1600
        %v1603 = vstv %s523
        %v1604 = vmul.f32 %v1603, %v1216
        %v1605 = vmul.f32 %v1603, %v1217
        %v1606 = vadd.f32 %v1601, %v1604
        %v1607 = vadd.f32 %v1602, %v1605
        %v1608 = vstv %s526
        %v1609 = vmul.f32 %v1608, %v1280
        %v1610 = vmul.f32 %v1608, %v1281
        %v1611 = vadd.f32 %v1606, %v1609
        %v1612 = vadd.f32 %v1607, %v1610
        %v1613 = vstv %s529
        %v1614 = vmul.f32 %v1613, %v1344
        %v1615 = vmul.f32 %v1613, %v1345
        %v1616 = vadd.f32 %v1611, %v1614
        %v1617 = vadd.f32 %v1612, %v1615
        %v1618 = vstv %s533
        %v1619 = vstv %s452
        %v1620 = vmul.f32 %v1619, %v1169
        %v1621 = vmul.f32 %v1619, %v1170
        %v1622 = vadd.f32 %v1618, %v1620
        %v1623 = vadd.f32 %v1618, %v1621
        %v1624 = vstv %s455
        %v1625 = vmul.f32 %v1624, %v1233
        %v1626 = vmul.f32 %v1624, %v1234
        %v1627 = vadd.f32 %v1622, %v1625
        %v1628 = vadd.f32 %v1623, %v1626
        %v1629 = vstv %s458
        %v1630 = vmul.f32 %v1629, %v1297
        %v1631 = vmul.f32 %v1629, %v1298
        %v1632 = vadd.f32 %v1627, %v1630
        %v1633 = vadd.f32 %v1628, %v1631
        %v1634 = vstv %s461
        %v1635 = vmul.f32 %v1634, %v1161
        %v1636 = vmul.f32 %v1634, %v1158
        %v1637 = vadd.f32 %v1632, %v1635
        %v1638 = vadd.f32 %v1633, %v1636
        %v1639 = vstv %s464
        %v1640 = vmul.f32 %v1639, %v1225
        %v1641 = vmul.f32 %v1639, %v1222
        %v1642 = vadd.f32 %v1637, %v1640
        %v1643 = vadd.f32 %v1638, %v1641
        %v1644 = vstv %s467
        %v1645 = vmul.f32 %v1644, %v1289
        %v1646 = vmul.f32 %v1644, %v1286
        %v1647 = vadd.f32 %v1642, %v1645
        %v1648 = vadd.f32 %v1643, %v1646
        %v1649 = vstv %s470
        %v1650 = vmul.f32 %v1649, %v1177
        %v1651 = vmul.f32 %v1649, %v1178
        %v1652 = vadd.f32 %v1647, %v1650
        %v1653 = vadd.f32 %v1648, %v1651
        %v1654 = vstv %s473
        %v1655 = vmul.f32 %v1654, %v1241
        %v1656 = vmul.f32 %v1654, %v1242
        %v1657 = vadd.f32 %v1652, %v1655
        %v1658 = vadd.f32 %v1653, %v1656
        %v1659 = vstv %s476
        %v1660 = vmul.f32 %v1659, %v1305
        %v1661 = vmul.f32 %v1659, %v1306
        %v1662 = vadd.f32 %v1657, %v1660
        %v1663 = vadd.f32 %v1658, %v1661
        %v1664 = vstv %s479
        %v1665 = vmul.f32 %v1664, %v1185
        %v1666 = vmul.f32 %v1664, %v1186
        %v1667 = vadd.f32 %v1662, %v1665
        %v1668 = vadd.f32 %v1663, %v1666
        %v1669 = vstv %s482
        %v1670 = vmul.f32 %v1669, %v1249
        %v1671 = vmul.f32 %v1669, %v1250
        %v1672 = vadd.f32 %v1667, %v1670
        %v1673 = vadd.f32 %v1668, %v1671
        %v1674 = vstv %s485
        %v1675 = vmul.f32 %v1674, %v1313
        %v1676 = vmul.f32 %v1674, %v1314
        %v1677 = vadd.f32 %v1672, %v1675
        %v1678 = vadd.f32 %v1673, %v1676
        %v1679 = vstv %s488
        %v1680 = vmul.f32 %v1679, %v1146
        %v1681 = vmul.f32 %v1679, %v1147
        %v1682 = vadd.f32 %v1677, %v1680
        %v1683 = vadd.f32 %v1678, %v1681
        %v1684 = vstv %s491
        %v1685 = vmul.f32 %v1684, %v1149
        %v1686 = vmul.f32 %v1684, %v1150
        %v1687 = vadd.f32 %v1682, %v1685
        %v1688 = vadd.f32 %v1683, %v1686
        %v1689 = vstv %s494
        %v1690 = vmul.f32 %v1689, %v1152
        %v1691 = vmul.f32 %v1689, %v1153
        %v1692 = vadd.f32 %v1687, %v1690
        %v1693 = vadd.f32 %v1688, %v1691
        %v1694 = vstv %s497
        %v1695 = vmul.f32 %v1694, %v1193
        %v1696 = vmul.f32 %v1694, %v1194
        %v1697 = vadd.f32 %v1692, %v1695
        %v1698 = vadd.f32 %v1693, %v1696
        %v1699 = vstv %s500
        %v1700 = vmul.f32 %v1699, %v1257
        %v1701 = vmul.f32 %v1699, %v1258
        %v1702 = vadd.f32 %v1697, %v1700
        %v1703 = vadd.f32 %v1698, %v1701
        %v1704 = vstv %s503
        %v1705 = vmul.f32 %v1704, %v1321
        %v1706 = vmul.f32 %v1704, %v1322
        %v1707 = vadd.f32 %v1702, %v1705
        %v1708 = vadd.f32 %v1703, %v1706
        %v1709 = vstv %s506
        %v1710 = vmul.f32 %v1709, %v1208
        %v1711 = vmul.f32 %v1709, %v1209
        %v1712 = vadd.f32 %v1707, %v1710
        %v1713 = vadd.f32 %v1708, %v1711
        %v1714 = vstv %s509
        %v1715 = vmul.f32 %v1714, %v1272
        %v1716 = vmul.f32 %v1714, %v1273
        %v1717 = vadd.f32 %v1712, %v1715
        %v1718 = vadd.f32 %v1713, %v1716
        %v1719 = vstv %s512
        %v1720 = vmul.f32 %v1719, %v1336
        %v1721 = vmul.f32 %v1719, %v1337
        %v1722 = vadd.f32 %v1717, %v1720
        %v1723 = vadd.f32 %v1718, %v1721
        %v1724 = vstv %s515
        %v1725 = vmul.f32 %v1724, %v1197
        %v1726 = vmul.f32 %v1724, %v1200
        %v1727 = vadd.f32 %v1722, %v1725
        %v1728 = vadd.f32 %v1723, %v1726
        %v1729 = vstv %s518
        %v1730 = vmul.f32 %v1729, %v1261
        %v1731 = vmul.f32 %v1729, %v1264
        %v1732 = vadd.f32 %v1727, %v1730
        %v1733 = vadd.f32 %v1728, %v1731
        %v1734 = vstv %s521
        %v1735 = vmul.f32 %v1734, %v1325
        %v1736 = vmul.f32 %v1734, %v1328
        %v1737 = vadd.f32 %v1732, %v1735
        %v1738 = vadd.f32 %v1733, %v1736
        %v1739 = vstv %s524
        %v1740 = vmul.f32 %v1739, %v1216
        %v1741 = vmul.f32 %v1739, %v1217
        %v1742 = vadd.f32 %v1737, %v1740
        %v1743 = vadd.f32 %v1738, %v1741
        %v1744 = vstv %s527
        %v1745 = vmul.f32 %v1744, %v1280
        %v1746 = vmul.f32 %v1744, %v1281
        %v1747 = vadd.f32 %v1742, %v1745
        %v1748 = vadd.f32 %v1743, %v1746
        %v1749 = vstv %s530
        %v1750 = vmul.f32 %v1749, %v1344
        %v1751 = vmul.f32 %v1749, %v1345
        %v1752 = vadd.f32 %v1747, %v1750
        %v1753 = vadd.f32 %v1748, %v1751
        %1754 = vxpose.xlu0.b32.start [1/16] %v1480, 128
        %1755 = vxpose.xlu0.b32.cont [2/16] %v1481, 128
        %1756 = vxpose.xlu0.b32.cont [3/16] 0.0, 128
        %1757 = vxpose.xlu0.b32.cont [4/16] 0.0, 128
        %1758 = vxpose.xlu0.b32.cont [5/16] 0.0, 128
        %1759 = vxpose.xlu0.b32.cont [6/16] 0.0, 128
        %1760 = vxpose.xlu0.b32.cont [7/16] 0.0, 128
        %1761 = vxpose.xlu0.b32.cont [8/16] 0.0, 128
        %1762 = vxpose.xlu0.b32.cont [9/16] 0.0, 128
        %1763 = vxpose.xlu0.b32.cont [10/16] 0.0, 128
        %1764 = vxpose.xlu0.b32.cont [11/16] 0.0, 128
        %1765 = vxpose.xlu0.b32.cont [12/16] 0.0, 128
        %1766 = vxpose.xlu0.b32.cont [13/16] 0.0, 128
        %1767 = vxpose.xlu0.b32.cont [14/16] 0.0, 128
        %1768 = vxpose.xlu0.b32.cont [15/16] 0.0, 128
        %1769 = vxpose.xlu0.b32.end [16/16] 0.0, 128
        %v1770 = vpop.trf.xlu0
        %v1771 = vpop.trf.xlu0
        %v1772 = vpop.trf.xlu0
        %v1773 = vpop.trf.xlu0
        %v1774 = vpop.trf.xlu0
        %v1775 = vpop.trf.xlu0
        %v1776 = vpop.trf.xlu0
        %v1777 = vpop.trf.xlu0
        %v1778 = vpop.trf.xlu0
        %v1779 = vpop.trf.xlu0
        %v1780 = vpop.trf.xlu0
        %v1781 = vpop.trf.xlu0
        %v1782 = vpop.trf.xlu0
        %v1783 = vpop.trf.xlu0
        %v1784 = vpop.trf.xlu0
        %v1785 = vpop.trf.xlu0
        %vm1786 = vcmask 130048
        %v1788 = vsel %vm1786, %v1770, 0
        %v1791 = vsel %vm1786, %v1771, 0
        %1793 = vmatpush.msra.mxu0 0.0
        %1794 = vmatpush.msra.mxu0 0.0
        %1795 = vmatpush.msra.mxu0 0.0
        %1796 = vmatpush.msra.mxu0 0.0
        %1797 = vmatpush.msra.mxu0 0.0
        %1798 = vmatpush.msra.mxu0 0.0
        %1799 = vmatpush.msra.mxu0 0.0
        %1800 = vmatpush.msra.mxu0 0.0
        %1801 = vmatpush.msra.mxu0 0.0
        %1802 = vmatpush.msra.mxu0 0.0
        %1803 = vmatpush.msra.mxu0 0.0
        %1804 = vmatpush.msra.mxu0 0.0
        %1805 = vmatpush.msra.mxu0 0.0
        %1806 = vmatpush.msra.mxu0 0.0
        %1807 = vmatpush.msra.mxu0 %v873
        %1808 = vmatpush.msra.mxu0 %v872
        %1809 = vmatmul.f32.gmra.mxu0 %v1788
        %v1810 = vpop.f32.mrf.mxu0
        %v1811 = vadd.f32 0.0, %v1810
        %1812 = vmatmul.f32.gmra.mxu0 %v1791
        %v1813 = vpop.f32.mrf.mxu0
        %v1814 = vadd.f32 0.0, %v1813
        %1815 = vdwg.mxu0
        %v1816 = vxor.u32 %v1811, 2147483648
        %v1817 = vxor.u32 %v1814, 2147483648
        %v1818 = vmul.f32 %v1816, 1.442695
        %v1819 = vpow.pop %v1818
        %v1820 = vmul.f32 %v1817, 1.442695
        %v1821 = vpow.pop %v1820
        %v1822 = vadd.f32 %v1819, 1.0
        %v1823 = vadd.f32 %v1821, 1.0
        %v1824 = vrcp.pop %v1822
        %v1825 = vmul.f32 %v1822, %v1824
        %v1826 = vsub.f32 1.0, %v1825
        %v1827 = vmul.f32 %v1824, %v1826
        %v1828 = vadd.f32 %v1824, %v1827
        %vm1829 = vweird.f32 %v1822
        %vm1830 = vweird.f32 %v1824
        %vm1831 = vmor %vm1829, %vm1830
        %v1832 = vsel %vm1831, %v1824, %v1828
        %v1833 = vand.u32 2147483647, %v1822
        %vm1834 = vcmp.eq.f32.partialorder %v1833, 8.507059e+37
        %v1835 = vand.u32 %v1822, 2147483648
        %v1836 = vor.u32 1.1754944e-38, %v1835
        %v1837 = vsel %vm1834, %v1836, %v1832
        %v1838 = vmul.f32 1.0, %v1837
        %v1839 = vrcp.pop %v1823
        %v1840 = vmul.f32 %v1823, %v1839
        %v1841 = vsub.f32 1.0, %v1840
        %v1842 = vmul.f32 %v1839, %v1841
        %v1843 = vadd.f32 %v1839, %v1842
        %vm1844 = vweird.f32 %v1823
        %vm1845 = vweird.f32 %v1839
        %vm1846 = vmor %vm1844, %vm1845
        %v1847 = vsel %vm1846, %v1839, %v1843
        %v1848 = vand.u32 2147483647, %v1823
        %vm1849 = vcmp.eq.f32.partialorder %v1848, 8.507059e+37
        %v1850 = vand.u32 %v1823, 2147483648
        %v1851 = vor.u32 1.1754944e-38, %v1850
        %v1852 = vsel %vm1849, %v1851, %v1847
        %v1853 = vmul.f32 1.0, %v1852
        %v1854 = vmul.f32 %v1838, %v1146
        %v1855 = vmul.f32 %v1853, %v1147
        %v1856 = vadd.f32 %v1854, 0.0
        %v1857 = vadd.f32 %v1855, 0.0
        %v1858 = vadd.f32 %v1838, 0.0
        %v1859 = vadd.f32 %v1853, 0.0
        %1860 = vxpose.xlu0.b32.start [1/16] %v1616, 128
        %1861 = vxpose.xlu0.b32.cont [2/16] %v1617, 128
        %1862 = vxpose.xlu0.b32.cont [3/16] 0.0, 128
        %1863 = vxpose.xlu0.b32.cont [4/16] 0.0, 128
        %1864 = vxpose.xlu0.b32.cont [5/16] 0.0, 128
        %1865 = vxpose.xlu0.b32.cont [6/16] 0.0, 128
        %1866 = vxpose.xlu0.b32.cont [7/16] 0.0, 128
        %1867 = vxpose.xlu0.b32.cont [8/16] 0.0, 128
        %1868 = vxpose.xlu0.b32.cont [9/16] 0.0, 128
        %1869 = vxpose.xlu0.b32.cont [10/16] 0.0, 128
        %1870 = vxpose.xlu0.b32.cont [11/16] 0.0, 128
        %1871 = vxpose.xlu0.b32.cont [12/16] 0.0, 128
        %1872 = vxpose.xlu0.b32.cont [13/16] 0.0, 128
        %1873 = vxpose.xlu0.b32.cont [14/16] 0.0, 128
        %1874 = vxpose.xlu0.b32.cont [15/16] 0.0, 128
        %1875 = vxpose.xlu0.b32.end [16/16] 0.0, 128
        %v1876 = vpop.trf.xlu0
        %v1877 = vpop.trf.xlu0
        %v1878 = vpop.trf.xlu0
        %v1879 = vpop.trf.xlu0
        %v1880 = vpop.trf.xlu0
        %v1881 = vpop.trf.xlu0
        %v1882 = vpop.trf.xlu0
        %v1883 = vpop.trf.xlu0
        %v1884 = vpop.trf.xlu0
        %v1885 = vpop.trf.xlu0
        %v1886 = vpop.trf.xlu0
        %v1887 = vpop.trf.xlu0
        %v1888 = vpop.trf.xlu0
        %v1889 = vpop.trf.xlu0
        %v1890 = vpop.trf.xlu0
        %v1891 = vpop.trf.xlu0
        %v1893 = vsel %vm1786, %v1876, 0
        %v1896 = vsel %vm1786, %v1877, 0
        %1898 = vmatpush.msra.mxu0 0.0
        %1899 = vmatpush.msra.mxu0 0.0
        %1900 = vmatpush.msra.mxu0 0.0
        %1901 = vmatpush.msra.mxu0 0.0
        %1902 = vmatpush.msra.mxu0 0.0
        %1903 = vmatpush.msra.mxu0 0.0
        %1904 = vmatpush.msra.mxu0 0.0
        %1905 = vmatpush.msra.mxu0 0.0
        %1906 = vmatpush.msra.mxu0 0.0
        %1907 = vmatpush.msra.mxu0 0.0
        %1908 = vmatpush.msra.mxu0 0.0
        %1909 = vmatpush.msra.mxu0 0.0
        %1910 = vmatpush.msra.mxu0 0.0
        %1911 = vmatpush.msra.mxu0 0.0
        %1912 = vmatpush.msra.mxu0 %v1009
        %1913 = vmatpush.msra.mxu0 %v1008
        %1914 = vmatmul.f32.gmra.mxu0 %v1893
        %v1915 = vpop.f32.mrf.mxu0
        %v1916 = vadd.f32 0.0, %v1915
        %1917 = vmatmul.f32.gmra.mxu0 %v1896
        %v1918 = vpop.f32.mrf.mxu0
        %v1919 = vadd.f32 0.0, %v1918
        %1920 = vdwg.mxu0
        %v1921 = vxor.u32 %v1916, 2147483648
        %v1922 = vxor.u32 %v1919, 2147483648
        %v1923 = vmul.f32 %v1921, 1.442695
        %v1924 = vpow.pop %v1923
        %v1925 = vmul.f32 %v1922, 1.442695
        %v1926 = vpow.pop %v1925
        %v1927 = vadd.f32 %v1924, 1.0
        %v1928 = vadd.f32 %v1926, 1.0
        %v1929 = vrcp.pop %v1927
        %v1930 = vmul.f32 %v1927, %v1929
        %v1931 = vsub.f32 1.0, %v1930
        %v1932 = vmul.f32 %v1929, %v1931
        %v1933 = vadd.f32 %v1929, %v1932
        %vm1934 = vweird.f32 %v1927
        %vm1935 = vweird.f32 %v1929
        %vm1936 = vmor %vm1934, %vm1935
        %v1937 = vsel %vm1936, %v1929, %v1933
        %v1938 = vand.u32 2147483647, %v1927
        %vm1939 = vcmp.eq.f32.partialorder %v1938, 8.507059e+37
        %v1940 = vand.u32 %v1927, 2147483648
        %v1941 = vor.u32 1.1754944e-38, %v1940
        %v1942 = vsel %vm1939, %v1941, %v1937
        %v1943 = vmul.f32 1.0, %v1942
        %v1944 = vrcp.pop %v1928
        %v1945 = vmul.f32 %v1928, %v1944
        %v1946 = vsub.f32 1.0, %v1945
        %v1947 = vmul.f32 %v1944, %v1946
        %v1948 = vadd.f32 %v1944, %v1947
        %vm1949 = vweird.f32 %v1928
        %vm1950 = vweird.f32 %v1944
        %vm1951 = vmor %vm1949, %vm1950
        %v1952 = vsel %vm1951, %v1944, %v1948
        %v1953 = vand.u32 2147483647, %v1928
        %vm1954 = vcmp.eq.f32.partialorder %v1953, 8.507059e+37
        %v1955 = vand.u32 %v1928, 2147483648
        %v1956 = vor.u32 1.1754944e-38, %v1955
        %v1957 = vsel %vm1954, %v1956, %v1952
        %v1958 = vmul.f32 1.0, %v1957
        %v1959 = vmul.f32 %v1943, %v1149
        %v1960 = vmul.f32 %v1958, %v1150
        %v1961 = vadd.f32 %v1959, 0.0
        %v1962 = vadd.f32 %v1960, 0.0
        %v1963 = vadd.f32 %v1943, 0.0
        %v1964 = vadd.f32 %v1958, 0.0
        %1965 = vxpose.xlu0.b32.start [1/16] %v1752, 128
        %1966 = vxpose.xlu0.b32.cont [2/16] %v1753, 128
        %1967 = vxpose.xlu0.b32.cont [3/16] 0.0, 128
        %1968 = vxpose.xlu0.b32.cont [4/16] 0.0, 128
        %1969 = vxpose.xlu0.b32.cont [5/16] 0.0, 128
        %1970 = vxpose.xlu0.b32.cont [6/16] 0.0, 128
        %1971 = vxpose.xlu0.b32.cont [7/16] 0.0, 128
        %1972 = vxpose.xlu0.b32.cont [8/16] 0.0, 128
        %1973 = vxpose.xlu0.b32.cont [9/16] 0.0, 128
        %1974 = vxpose.xlu0.b32.cont [10/16] 0.0, 128
        %1975 = vxpose.xlu0.b32.cont [11/16] 0.0, 128
        %1976 = vxpose.xlu0.b32.cont [12/16] 0.0, 128
        %1977 = vxpose.xlu0.b32.cont [13/16] 0.0, 128
        %1978 = vxpose.xlu0.b32.cont [14/16] 0.0, 128
        %1979 = vxpose.xlu0.b32.cont [15/16] 0.0, 128
        %1980 = vxpose.xlu0.b32.end [16/16] 0.0, 128
        %v1981 = vpop.trf.xlu0
        %v1982 = vpop.trf.xlu0
        %v1983 = vpop.trf.xlu0
        %v1984 = vpop.trf.xlu0
        %v1985 = vpop.trf.xlu0
        %v1986 = vpop.trf.xlu0
        %v1987 = vpop.trf.xlu0
        %v1988 = vpop.trf.xlu0
        %v1989 = vpop.trf.xlu0
        %v1990 = vpop.trf.xlu0
        %v1991 = vpop.trf.xlu0
        %v1992 = vpop.trf.xlu0
        %v1993 = vpop.trf.xlu0
        %v1994 = vpop.trf.xlu0
        %v1995 = vpop.trf.xlu0
        %v1996 = vpop.trf.xlu0
        %v1998 = vsel %vm1786, %v1981, 0
        %v2001 = vsel %vm1786, %v1982, 0
        %2003 = vmatpush.msra.mxu0 0.0
        %2004 = vmatpush.msra.mxu0 0.0
        %2005 = vmatpush.msra.mxu0 0.0
        %2006 = vmatpush.msra.mxu0 0.0
        %2007 = vmatpush.msra.mxu0 0.0
        %2008 = vmatpush.msra.mxu0 0.0
        %2009 = vmatpush.msra.mxu0 0.0
        %2010 = vmatpush.msra.mxu0 0.0
        %2011 = vmatpush.msra.mxu0 0.0
        %2012 = vmatpush.msra.mxu0 0.0
        %2013 = vmatpush.msra.mxu0 0.0
        %2014 = vmatpush.msra.mxu0 0.0
        %2015 = vmatpush.msra.mxu0 0.0
        %2016 = vmatpush.msra.mxu0 0.0
        %2017 = vmatpush.msra.mxu0 %v1145
        %2018 = vmatpush.msra.mxu0 %v1144
        %2019 = vmatmul.f32.gmra.mxu0 %v1998
        %v2020 = vpop.f32.mrf.mxu0
        %v2021 = vadd.f32 0.0, %v2020
        %2022 = vmatmul.f32.gmra.mxu0 %v2001
        %v2023 = vpop.f32.mrf.mxu0
        %v2024 = vadd.f32 0.0, %v2023
        %2025 = vdwg.mxu0
        %v2026 = vxor.u32 %v2021, 2147483648
        %v2027 = vxor.u32 %v2024, 2147483648
        %v2028 = vmul.f32 %v2026, 1.442695
        %v2029 = vpow.pop %v2028
        %v2030 = vmul.f32 %v2027, 1.442695
        %v2031 = vpow.pop %v2030
        %v2032 = vadd.f32 %v2029, 1.0
        %v2033 = vadd.f32 %v2031, 1.0
        %v2034 = vrcp.pop %v2032
        %v2035 = vmul.f32 %v2032, %v2034
        %v2036 = vsub.f32 1.0, %v2035
        %v2037 = vmul.f32 %v2034, %v2036
        %v2038 = vadd.f32 %v2034, %v2037
        %vm2039 = vweird.f32 %v2032
        %vm2040 = vweird.f32 %v2034
        %vm2041 = vmor %vm2039, %vm2040
        %v2042 = vsel %vm2041, %v2034, %v2038
        %v2043 = vand.u32 2147483647, %v2032
        %vm2044 = vcmp.eq.f32.partialorder %v2043, 8.507059e+37
        %v2045 = vand.u32 %v2032, 2147483648
        %v2046 = vor.u32 1.1754944e-38, %v2045
        %v2047 = vsel %vm2044, %v2046, %v2042
        %v2048 = vmul.f32 1.0, %v2047
        %v2049 = vrcp.pop %v2033
        %v2050 = vmul.f32 %v2033, %v2049
        %v2051 = vsub.f32 1.0, %v2050
        %v2052 = vmul.f32 %v2049, %v2051
        %v2053 = vadd.f32 %v2049, %v2052
        %vm2054 = vweird.f32 %v2033
        %vm2055 = vweird.f32 %v2049
        %vm2056 = vmor %vm2054, %vm2055
        %v2057 = vsel %vm2056, %v2049, %v2053
        %v2058 = vand.u32 2147483647, %v2033
        %vm2059 = vcmp.eq.f32.partialorder %v2058, 8.507059e+37
        %v2060 = vand.u32 %v2033, 2147483648
        %v2061 = vor.u32 1.1754944e-38, %v2060
        %v2062 = vsel %vm2059, %v2061, %v2057
        %v2063 = vmul.f32 1.0, %v2062
        %v2064 = vmul.f32 %v2048, %v1152
        %v2065 = vmul.f32 %v2063, %v1153
        %v2066 = vadd.f32 %v2064, 0.0
        %v2067 = vadd.f32 %v2065, 0.0
        %v2068 = vadd.f32 %v2048, 0.0
        %v2069 = vadd.f32 %v2063, 0.0
        %s2070 = scalar_lea.vmem %s310, 48 [#allocation6]
        %v2071 = vld [vmem:[%s2070] sm:$0xff]
        %v2072 = vld [vmem:[%s2070 + $0x8] sm:$0xff]
        %s2073 = scalar_lea.vmem %s310, 64 [#allocation6]
        %v2074 = vld [vmem:[%s2073] sm:$0xff]
        %v2075 = vld [vmem:[%s2073 + $0x8] sm:$0xff]
        %s2076 = scalar_lea.vmem %s310, 80 [#allocation6]
        %v2077 = vld [vmem:[%s2076] sm:$0xff]
        %v2078 = vld [vmem:[%s2076 + $0x8] sm:$0xff]
        %v2081 = vrot.slane %v2071, 7
        %v2082 = vrot.slane %v2072, 7
        %v2083 = vsel %vm544, %v2081, %v2082
        %v2086 = vsel %vm544, 0.0, %v2081
        %2088 = vrot.lane.b32.xlu0 %v2086, 1
        %v2089 = vpop.permute.xlu0 %2088
        %2090 = vrot.lane.b32.xlu0 %v2083, 1
        %v2091 = vpop.permute.xlu0 %2090
        %v2094 = vsel %vm558, 0.0, %v2089
        %v2095 = vsel %vm558, 0.0, %v2091
        %2096 = vrot.lane.b32.xlu0 %v2086, 127
        %v2097 = vpop.permute.xlu0 %2096
        %2098 = vrot.lane.b32.xlu0 %v2083, 127
        %v2099 = vpop.permute.xlu0 %2098
        %v2102 = vsel %vm567, %v2097, 0.0
        %v2103 = vsel %vm567, %v2099, 0.0
        %2104 = vrot.lane.b32.xlu0 %v2071, 1
        %v2105 = vpop.permute.xlu0 %2104
        %2106 = vrot.lane.b32.xlu0 %v2072, 1
        %v2107 = vpop.permute.xlu0 %2106
        %v2110 = vsel %vm558, 0.0, %v2105
        %v2111 = vsel %vm558, 0.0, %v2107
        %2112 = vrot.lane.b32.xlu0 %v2071, 127
        %v2113 = vpop.permute.xlu0 %2112
        %2114 = vrot.lane.b32.xlu0 %v2072, 127
        %v2115 = vpop.permute.xlu0 %2114
        %v2118 = vsel %vm567, %v2113, 0.0
        %v2119 = vsel %vm567, %v2115, 0.0
        %v2120 = vrot.slane %v2071, 1
        %v2121 = vrot.slane %v2072, 1
        %v2122 = vsel %vm586, %v2120, %v2121
        %v2125 = vsel %vm586, %v2121, 0.0
        %2127 = vrot.lane.b32.xlu0 %v2122, 1
        %v2128 = vpop.permute.xlu0 %2127
        %2129 = vrot.lane.b32.xlu0 %v2125, 1
        %v2130 = vpop.permute.xlu0 %2129
        %v2133 = vsel %vm558, 0.0, %v2128
        %v2134 = vsel %vm558, 0.0, %v2130
        %2135 = vrot.lane.b32.xlu0 %v2122, 127
        %v2136 = vpop.permute.xlu0 %2135
        %2137 = vrot.lane.b32.xlu0 %v2125, 127
        %v2138 = vpop.permute.xlu0 %2137
        %v2141 = vsel %vm567, %v2136, 0.0
        %v2142 = vsel %vm567, %v2138, 0.0
        %v2145 = vrot.slane %v2074, 7
        %v2146 = vrot.slane %v2075, 7
        %v2147 = vsel %vm544, %v2145, %v2146
        %v2150 = vsel %vm544, 0.0, %v2145
        %2152 = vrot.lane.b32.xlu0 %v2150, 1
        %v2153 = vpop.permute.xlu0 %2152
        %2154 = vrot.lane.b32.xlu0 %v2147, 1
        %v2155 = vpop.permute.xlu0 %2154
        %v2158 = vsel %vm558, 0.0, %v2153
        %v2159 = vsel %vm558, 0.0, %v2155
        %2160 = vrot.lane.b32.xlu0 %v2150, 127
        %v2161 = vpop.permute.xlu0 %2160
        %2162 = vrot.lane.b32.xlu0 %v2147, 127
        %v2163 = vpop.permute.xlu0 %2162
        %v2166 = vsel %vm567, %v2161, 0.0
        %v2167 = vsel %vm567, %v2163, 0.0
        %2168 = vrot.lane.b32.xlu0 %v2074, 1
        %v2169 = vpop.permute.xlu0 %2168
        %2170 = vrot.lane.b32.xlu0 %v2075, 1
        %v2171 = vpop.permute.xlu0 %2170
        %v2174 = vsel %vm558, 0.0, %v2169
        %v2175 = vsel %vm558, 0.0, %v2171
        %2176 = vrot.lane.b32.xlu0 %v2074, 127
        %v2177 = vpop.permute.xlu0 %2176
        %2178 = vrot.lane.b32.xlu0 %v2075, 127
        %v2179 = vpop.permute.xlu0 %2178
        %v2182 = vsel %vm567, %v2177, 0.0
        %v2183 = vsel %vm567, %v2179, 0.0
        %v2184 = vrot.slane %v2074, 1
        %v2185 = vrot.slane %v2075, 1
        %v2186 = vsel %vm586, %v2184, %v2185
        %v2189 = vsel %vm586, %v2185, 0.0
        %2191 = vrot.lane.b32.xlu0 %v2186, 1
        %v2192 = vpop.permute.xlu0 %2191
        %2193 = vrot.lane.b32.xlu0 %v2189, 1
        %v2194 = vpop.permute.xlu0 %2193
        %v2197 = vsel %vm558, 0.0, %v2192
        %v2198 = vsel %vm558, 0.0, %v2194
        %2199 = vrot.lane.b32.xlu0 %v2186, 127
        %v2200 = vpop.permute.xlu0 %2199
        %2201 = vrot.lane.b32.xlu0 %v2189, 127
        %v2202 = vpop.permute.xlu0 %2201
        %v2205 = vsel %vm567, %v2200, 0.0
        %v2206 = vsel %vm567, %v2202, 0.0
        %v2209 = vrot.slane %v2077, 7
        %v2210 = vrot.slane %v2078, 7
        %v2211 = vsel %vm544, %v2209, %v2210
        %v2214 = vsel %vm544, 0.0, %v2209
        %2216 = vrot.lane.b32.xlu0 %v2214, 1
        %v2217 = vpop.permute.xlu0 %2216
        %2218 = vrot.lane.b32.xlu0 %v2211, 1
        %v2219 = vpop.permute.xlu0 %2218
        %v2222 = vsel %vm558, 0.0, %v2217
        %v2223 = vsel %vm558, 0.0, %v2219
        %2224 = vrot.lane.b32.xlu0 %v2214, 127
        %v2225 = vpop.permute.xlu0 %2224
        %2226 = vrot.lane.b32.xlu0 %v2211, 127
        %v2227 = vpop.permute.xlu0 %2226
        %v2230 = vsel %vm567, %v2225, 0.0
        %v2231 = vsel %vm567, %v2227, 0.0
        %2232 = vrot.lane.b32.xlu0 %v2077, 1
        %v2233 = vpop.permute.xlu0 %2232
        %2234 = vrot.lane.b32.xlu0 %v2078, 1
        %v2235 = vpop.permute.xlu0 %2234
        %v2238 = vsel %vm558, 0.0, %v2233
        %v2239 = vsel %vm558, 0.0, %v2235
        %2240 = vrot.lane.b32.xlu0 %v2077, 127
        %v2241 = vpop.permute.xlu0 %2240
        %2242 = vrot.lane.b32.xlu0 %v2078, 127
        %v2243 = vpop.permute.xlu0 %2242
        %v2246 = vsel %vm567, %v2241, 0.0
        %v2247 = vsel %vm567, %v2243, 0.0
        %v2248 = vrot.slane %v2077, 1
        %v2249 = vrot.slane %v2078, 1
        %v2250 = vsel %vm586, %v2248, %v2249
        %v2253 = vsel %vm586, %v2249, 0.0
        %2255 = vrot.lane.b32.xlu0 %v2250, 1
        %v2256 = vpop.permute.xlu0 %2255
        %2257 = vrot.lane.b32.xlu0 %v2253, 1
        %v2258 = vpop.permute.xlu0 %2257
        %v2261 = vsel %vm558, 0.0, %v2256
        %v2262 = vsel %vm558, 0.0, %v2258
        %2263 = vrot.lane.b32.xlu0 %v2250, 127
        %v2264 = vpop.permute.xlu0 %2263
        %2265 = vrot.lane.b32.xlu0 %v2253, 127
        %v2266 = vpop.permute.xlu0 %2265
        %v2269 = vsel %vm567, %v2264, 0.0
        %v2270 = vsel %vm567, %v2266, 0.0
        %v2271 = vmul.f32 %v1347, %v2094
        %v2272 = vmul.f32 %v1347, %v2095
        %v2273 = vadd.f32 %v1346, %v2271
        %v2274 = vadd.f32 %v1346, %v2272
        %v2275 = vmul.f32 %v1352, %v2158
        %v2276 = vmul.f32 %v1352, %v2159
        %v2277 = vadd.f32 %v2273, %v2275
        %v2278 = vadd.f32 %v2274, %v2276
        %v2279 = vmul.f32 %v1357, %v2222
        %v2280 = vmul.f32 %v1357, %v2223
        %v2281 = vadd.f32 %v2277, %v2279
        %v2282 = vadd.f32 %v2278, %v2280
        %v2283 = vmul.f32 %v1362, %v2086
        %v2284 = vmul.f32 %v1362, %v2083
        %v2285 = vadd.f32 %v2281, %v2283
        %v2286 = vadd.f32 %v2282, %v2284
        %v2287 = vmul.f32 %v1367, %v2150
        %v2288 = vmul.f32 %v1367, %v2147
        %v2289 = vadd.f32 %v2285, %v2287
        %v2290 = vadd.f32 %v2286, %v2288
        %v2291 = vmul.f32 %v1372, %v2214
        %v2292 = vmul.f32 %v1372, %v2211
        %v2293 = vadd.f32 %v2289, %v2291
        %v2294 = vadd.f32 %v2290, %v2292
        %v2295 = vmul.f32 %v1377, %v2102
        %v2296 = vmul.f32 %v1377, %v2103
        %v2297 = vadd.f32 %v2293, %v2295
        %v2298 = vadd.f32 %v2294, %v2296
        %v2299 = vmul.f32 %v1382, %v2166
        %v2300 = vmul.f32 %v1382, %v2167
        %v2301 = vadd.f32 %v2297, %v2299
        %v2302 = vadd.f32 %v2298, %v2300
        %v2303 = vmul.f32 %v1387, %v2230
        %v2304 = vmul.f32 %v1387, %v2231
        %v2305 = vadd.f32 %v2301, %v2303
        %v2306 = vadd.f32 %v2302, %v2304
        %v2307 = vmul.f32 %v1392, %v2110
        %v2308 = vmul.f32 %v1392, %v2111
        %v2309 = vadd.f32 %v2305, %v2307
        %v2310 = vadd.f32 %v2306, %v2308
        %v2311 = vmul.f32 %v1397, %v2174
        %v2312 = vmul.f32 %v1397, %v2175
        %v2313 = vadd.f32 %v2309, %v2311
        %v2314 = vadd.f32 %v2310, %v2312
        %v2315 = vmul.f32 %v1402, %v2238
        %v2316 = vmul.f32 %v1402, %v2239
        %v2317 = vadd.f32 %v2313, %v2315
        %v2318 = vadd.f32 %v2314, %v2316
        %v2319 = vmul.f32 %v1407, %v2071
        %v2320 = vmul.f32 %v1407, %v2072
        %v2321 = vadd.f32 %v2317, %v2319
        %v2322 = vadd.f32 %v2318, %v2320
        %v2323 = vmul.f32 %v1412, %v2074
        %v2324 = vmul.f32 %v1412, %v2075
        %v2325 = vadd.f32 %v2321, %v2323
        %v2326 = vadd.f32 %v2322, %v2324
        %v2327 = vmul.f32 %v1417, %v2077
        %v2328 = vmul.f32 %v1417, %v2078
        %v2329 = vadd.f32 %v2325, %v2327
        %v2330 = vadd.f32 %v2326, %v2328
        %v2331 = vmul.f32 %v1422, %v2118
        %v2332 = vmul.f32 %v1422, %v2119
        %v2333 = vadd.f32 %v2329, %v2331
        %v2334 = vadd.f32 %v2330, %v2332
        %v2335 = vmul.f32 %v1427, %v2182
        %v2336 = vmul.f32 %v1427, %v2183
        %v2337 = vadd.f32 %v2333, %v2335
        %v2338 = vadd.f32 %v2334, %v2336
        %v2339 = vmul.f32 %v1432, %v2246
        %v2340 = vmul.f32 %v1432, %v2247
        %v2341 = vadd.f32 %v2337, %v2339
        %v2342 = vadd.f32 %v2338, %v2340
        %v2343 = vmul.f32 %v1437, %v2133
        %v2344 = vmul.f32 %v1437, %v2134
        %v2345 = vadd.f32 %v2341, %v2343
        %v2346 = vadd.f32 %v2342, %v2344
        %v2347 = vmul.f32 %v1442, %v2197
        %v2348 = vmul.f32 %v1442, %v2198
        %v2349 = vadd.f32 %v2345, %v2347
        %v2350 = vadd.f32 %v2346, %v2348
        %v2351 = vmul.f32 %v1447, %v2261
        %v2352 = vmul.f32 %v1447, %v2262
        %v2353 = vadd.f32 %v2349, %v2351
        %v2354 = vadd.f32 %v2350, %v2352
        %v2355 = vmul.f32 %v1452, %v2122
        %v2356 = vmul.f32 %v1452, %v2125
        %v2357 = vadd.f32 %v2353, %v2355
        %v2358 = vadd.f32 %v2354, %v2356
        %v2359 = vmul.f32 %v1457, %v2186
        %v2360 = vmul.f32 %v1457, %v2189
        %v2361 = vadd.f32 %v2357, %v2359
        %v2362 = vadd.f32 %v2358, %v2360
        %v2363 = vmul.f32 %v1462, %v2250
        %v2364 = vmul.f32 %v1462, %v2253
        %v2365 = vadd.f32 %v2361, %v2363
        %v2366 = vadd.f32 %v2362, %v2364
        %v2367 = vmul.f32 %v1467, %v2141
        %v2368 = vmul.f32 %v1467, %v2142
        %v2369 = vadd.f32 %v2365, %v2367
        %v2370 = vadd.f32 %v2366, %v2368
        %v2371 = vmul.f32 %v1472, %v2205
        %v2372 = vmul.f32 %v1472, %v2206
        %v2373 = vadd.f32 %v2369, %v2371
        %v2374 = vadd.f32 %v2370, %v2372
        %v2375 = vmul.f32 %v1477, %v2269
        %v2376 = vmul.f32 %v1477, %v2270
        %v2377 = vadd.f32 %v2373, %v2375
        %v2378 = vadd.f32 %v2374, %v2376
        %v2379 = vmul.f32 %v1483, %v2094
        %v2380 = vmul.f32 %v1483, %v2095
        %v2381 = vadd.f32 %v1482, %v2379
        %v2382 = vadd.f32 %v1482, %v2380
        %v2383 = vmul.f32 %v1488, %v2158
        %v2384 = vmul.f32 %v1488, %v2159
        %v2385 = vadd.f32 %v2381, %v2383
        %v2386 = vadd.f32 %v2382, %v2384
        %v2387 = vmul.f32 %v1493, %v2222
        %v2388 = vmul.f32 %v1493, %v2223
        %v2389 = vadd.f32 %v2385, %v2387
        %v2390 = vadd.f32 %v2386, %v2388
        %v2391 = vmul.f32 %v1498, %v2086
        %v2392 = vmul.f32 %v1498, %v2083
        %v2393 = vadd.f32 %v2389, %v2391
        %v2394 = vadd.f32 %v2390, %v2392
        %v2395 = vmul.f32 %v1503, %v2150
        %v2396 = vmul.f32 %v1503, %v2147
        %v2397 = vadd.f32 %v2393, %v2395
        %v2398 = vadd.f32 %v2394, %v2396
        %v2399 = vmul.f32 %v1508, %v2214
        %v2400 = vmul.f32 %v1508, %v2211
        %v2401 = vadd.f32 %v2397, %v2399
        %v2402 = vadd.f32 %v2398, %v2400
        %v2403 = vmul.f32 %v1513, %v2102
        %v2404 = vmul.f32 %v1513, %v2103
        %v2405 = vadd.f32 %v2401, %v2403
        %v2406 = vadd.f32 %v2402, %v2404
        %v2407 = vmul.f32 %v1518, %v2166
        %v2408 = vmul.f32 %v1518, %v2167
        %v2409 = vadd.f32 %v2405, %v2407
        %v2410 = vadd.f32 %v2406, %v2408
        %v2411 = vmul.f32 %v1523, %v2230
        %v2412 = vmul.f32 %v1523, %v2231
        %v2413 = vadd.f32 %v2409, %v2411
        %v2414 = vadd.f32 %v2410, %v2412
        %v2415 = vmul.f32 %v1528, %v2110
        %v2416 = vmul.f32 %v1528, %v2111
        %v2417 = vadd.f32 %v2413, %v2415
        %v2418 = vadd.f32 %v2414, %v2416
        %v2419 = vmul.f32 %v1533, %v2174
        %v2420 = vmul.f32 %v1533, %v2175
        %v2421 = vadd.f32 %v2417, %v2419
        %v2422 = vadd.f32 %v2418, %v2420
        %v2423 = vmul.f32 %v1538, %v2238
        %v2424 = vmul.f32 %v1538, %v2239
        %v2425 = vadd.f32 %v2421, %v2423
        %v2426 = vadd.f32 %v2422, %v2424
        %v2427 = vmul.f32 %v1543, %v2071
        %v2428 = vmul.f32 %v1543, %v2072
        %v2429 = vadd.f32 %v2425, %v2427
        %v2430 = vadd.f32 %v2426, %v2428
        %v2431 = vmul.f32 %v1548, %v2074
        %v2432 = vmul.f32 %v1548, %v2075
        %v2433 = vadd.f32 %v2429, %v2431
        %v2434 = vadd.f32 %v2430, %v2432
        %v2435 = vmul.f32 %v1553, %v2077
        %v2436 = vmul.f32 %v1553, %v2078
        %v2437 = vadd.f32 %v2433, %v2435
        %v2438 = vadd.f32 %v2434, %v2436
        %v2439 = vmul.f32 %v1558, %v2118
        %v2440 = vmul.f32 %v1558, %v2119
        %v2441 = vadd.f32 %v2437, %v2439
        %v2442 = vadd.f32 %v2438, %v2440
        %v2443 = vmul.f32 %v1563, %v2182
        %v2444 = vmul.f32 %v1563, %v2183
        %v2445 = vadd.f32 %v2441, %v2443
        %v2446 = vadd.f32 %v2442, %v2444
        %v2447 = vmul.f32 %v1568, %v2246
        %v2448 = vmul.f32 %v1568, %v2247
        %v2449 = vadd.f32 %v2445, %v2447
        %v2450 = vadd.f32 %v2446, %v2448
        %v2451 = vmul.f32 %v1573, %v2133
        %v2452 = vmul.f32 %v1573, %v2134
        %v2453 = vadd.f32 %v2449, %v2451
        %v2454 = vadd.f32 %v2450, %v2452
        %v2455 = vmul.f32 %v1578, %v2197
        %v2456 = vmul.f32 %v1578, %v2198
        %v2457 = vadd.f32 %v2453, %v2455
        %v2458 = vadd.f32 %v2454, %v2456
        %v2459 = vmul.f32 %v1583, %v2261
        %v2460 = vmul.f32 %v1583, %v2262
        %v2461 = vadd.f32 %v2457, %v2459
        %v2462 = vadd.f32 %v2458, %v2460
        %v2463 = vmul.f32 %v1588, %v2122
        %v2464 = vmul.f32 %v1588, %v2125
        %v2465 = vadd.f32 %v2461, %v2463
        %v2466 = vadd.f32 %v2462, %v2464
        %v2467 = vmul.f32 %v1593, %v2186
        %v2468 = vmul.f32 %v1593, %v2189
        %v2469 = vadd.f32 %v2465, %v2467
        %v2470 = vadd.f32 %v2466, %v2468
        %v2471 = vmul.f32 %v1598, %v2250
        %v2472 = vmul.f32 %v1598, %v2253
        %v2473 = vadd.f32 %v2469, %v2471
        %v2474 = vadd.f32 %v2470, %v2472
        %v2475 = vmul.f32 %v1603, %v2141
        %v2476 = vmul.f32 %v1603, %v2142
        %v2477 = vadd.f32 %v2473, %v2475
        %v2478 = vadd.f32 %v2474, %v2476
        %v2479 = vmul.f32 %v1608, %v2205
        %v2480 = vmul.f32 %v1608, %v2206
        %v2481 = vadd.f32 %v2477, %v2479
        %v2482 = vadd.f32 %v2478, %v2480
        %v2483 = vmul.f32 %v1613, %v2269
        %v2484 = vmul.f32 %v1613, %v2270
        %v2485 = vadd.f32 %v2481, %v2483
        %v2486 = vadd.f32 %v2482, %v2484
        %v2487 = vmul.f32 %v1619, %v2094
        %v2488 = vmul.f32 %v1619, %v2095
        %v2489 = vadd.f32 %v1618, %v2487
        %v2490 = vadd.f32 %v1618, %v2488
        %v2491 = vmul.f32 %v1624, %v2158
        %v2492 = vmul.f32 %v1624, %v2159
        %v2493 = vadd.f32 %v2489, %v2491
        %v2494 = vadd.f32 %v2490, %v2492
        %v2495 = vmul.f32 %v1629, %v2222
        %v2496 = vmul.f32 %v1629, %v2223
        %v2497 = vadd.f32 %v2493, %v2495
        %v2498 = vadd.f32 %v2494, %v2496
        %v2499 = vmul.f32 %v1634, %v2086
        %v2500 = vmul.f32 %v1634, %v2083
        %v2501 = vadd.f32 %v2497, %v2499
        %v2502 = vadd.f32 %v2498, %v2500
        %v2503 = vmul.f32 %v1639, %v2150
        %v2504 = vmul.f32 %v1639, %v2147
        %v2505 = vadd.f32 %v2501, %v2503
        %v2506 = vadd.f32 %v2502, %v2504
        %v2507 = vmul.f32 %v1644, %v2214
        %v2508 = vmul.f32 %v1644, %v2211
        %v2509 = vadd.f32 %v2505, %v2507
        %v2510 = vadd.f32 %v2506, %v2508
        %v2511 = vmul.f32 %v1649, %v2102
        %v2512 = vmul.f32 %v1649, %v2103
        %v2513 = vadd.f32 %v2509, %v2511
        %v2514 = vadd.f32 %v2510, %v2512
        %v2515 = vmul.f32 %v1654, %v2166
        %v2516 = vmul.f32 %v1654, %v2167
        %v2517 = vadd.f32 %v2513, %v2515
        %v2518 = vadd.f32 %v2514, %v2516
        %v2519 = vmul.f32 %v1659, %v2230
        %v2520 = vmul.f32 %v1659, %v2231
        %v2521 = vadd.f32 %v2517, %v2519
        %v2522 = vadd.f32 %v2518, %v2520
        %v2523 = vmul.f32 %v1664, %v2110
        %v2524 = vmul.f32 %v1664, %v2111
        %v2525 = vadd.f32 %v2521, %v2523
        %v2526 = vadd.f32 %v2522, %v2524
        %v2527 = vmul.f32 %v1669, %v2174
        %v2528 = vmul.f32 %v1669, %v2175
        %v2529 = vadd.f32 %v2525, %v2527
        %v2530 = vadd.f32 %v2526, %v2528
        %v2531 = vmul.f32 %v1674, %v2238
        %v2532 = vmul.f32 %v1674, %v2239
        %v2533 = vadd.f32 %v2529, %v2531
        %v2534 = vadd.f32 %v2530, %v2532
        %v2535 = vmul.f32 %v1679, %v2071
        %v2536 = vmul.f32 %v1679, %v2072
        %v2537 = vadd.f32 %v2533, %v2535
        %v2538 = vadd.f32 %v2534, %v2536
        %v2539 = vmul.f32 %v1684, %v2074
        %v2540 = vmul.f32 %v1684, %v2075
        %v2541 = vadd.f32 %v2537, %v2539
        %v2542 = vadd.f32 %v2538, %v2540
        %v2543 = vmul.f32 %v1689, %v2077
        %v2544 = vmul.f32 %v1689, %v2078
        %v2545 = vadd.f32 %v2541, %v2543
        %v2546 = vadd.f32 %v2542, %v2544
        %v2547 = vmul.f32 %v1694, %v2118
        %v2548 = vmul.f32 %v1694, %v2119
        %v2549 = vadd.f32 %v2545, %v2547
        %v2550 = vadd.f32 %v2546, %v2548
        %v2551 = vmul.f32 %v1699, %v2182
        %v2552 = vmul.f32 %v1699, %v2183
        %v2553 = vadd.f32 %v2549, %v2551
        %v2554 = vadd.f32 %v2550, %v2552
        %v2555 = vmul.f32 %v1704, %v2246
        %v2556 = vmul.f32 %v1704, %v2247
        %v2557 = vadd.f32 %v2553, %v2555
        %v2558 = vadd.f32 %v2554, %v2556
        %v2559 = vmul.f32 %v1709, %v2133
        %v2560 = vmul.f32 %v1709, %v2134
        %v2561 = vadd.f32 %v2557, %v2559
        %v2562 = vadd.f32 %v2558, %v2560
        %v2563 = vmul.f32 %v1714, %v2197
        %v2564 = vmul.f32 %v1714, %v2198
        %v2565 = vadd.f32 %v2561, %v2563
        %v2566 = vadd.f32 %v2562, %v2564
        %v2567 = vmul.f32 %v1719, %v2261
        %v2568 = vmul.f32 %v1719, %v2262
        %v2569 = vadd.f32 %v2565, %v2567
        %v2570 = vadd.f32 %v2566, %v2568
        %v2571 = vmul.f32 %v1724, %v2122
        %v2572 = vmul.f32 %v1724, %v2125
        %v2573 = vadd.f32 %v2569, %v2571
        %v2574 = vadd.f32 %v2570, %v2572
        %v2575 = vmul.f32 %v1729, %v2186
        %v2576 = vmul.f32 %v1729, %v2189
        %v2577 = vadd.f32 %v2573, %v2575
        %v2578 = vadd.f32 %v2574, %v2576
        %v2579 = vmul.f32 %v1734, %v2250
        %v2580 = vmul.f32 %v1734, %v2253
        %v2581 = vadd.f32 %v2577, %v2579
        %v2582 = vadd.f32 %v2578, %v2580
        %v2583 = vmul.f32 %v1739, %v2141
        %v2584 = vmul.f32 %v1739, %v2142
        %v2585 = vadd.f32 %v2581, %v2583
        %v2586 = vadd.f32 %v2582, %v2584
        %v2587 = vmul.f32 %v1744, %v2205
        %v2588 = vmul.f32 %v1744, %v2206
        %v2589 = vadd.f32 %v2585, %v2587
        %v2590 = vadd.f32 %v2586, %v2588
        %v2591 = vmul.f32 %v1749, %v2269
        %v2592 = vmul.f32 %v1749, %v2270
        %v2593 = vadd.f32 %v2589, %v2591
        %v2594 = vadd.f32 %v2590, %v2592
        %2595 = vxpose.xlu0.b32.start [1/16] %v2377, 128
        %2596 = vxpose.xlu0.b32.cont [2/16] %v2378, 128
        %2597 = vxpose.xlu0.b32.cont [3/16] 0.0, 128
        %2598 = vxpose.xlu0.b32.cont [4/16] 0.0, 128
        %2599 = vxpose.xlu0.b32.cont [5/16] 0.0, 128
        %2600 = vxpose.xlu0.b32.cont [6/16] 0.0, 128
        %2601 = vxpose.xlu0.b32.cont [7/16] 0.0, 128
        %2602 = vxpose.xlu0.b32.cont [8/16] 0.0, 128
        %2603 = vxpose.xlu0.b32.cont [9/16] 0.0, 128
        %2604 = vxpose.xlu0.b32.cont [10/16] 0.0, 128
        %2605 = vxpose.xlu0.b32.cont [11/16] 0.0, 128
        %2606 = vxpose.xlu0.b32.cont [12/16] 0.0, 128
        %2607 = vxpose.xlu0.b32.cont [13/16] 0.0, 128
        %2608 = vxpose.xlu0.b32.cont [14/16] 0.0, 128
        %2609 = vxpose.xlu0.b32.cont [15/16] 0.0, 128
        %2610 = vxpose.xlu0.b32.end [16/16] 0.0, 128
        %v2611 = vpop.trf.xlu0
        %v2612 = vpop.trf.xlu0
        %v2613 = vpop.trf.xlu0
        %v2614 = vpop.trf.xlu0
        %v2615 = vpop.trf.xlu0
        %v2616 = vpop.trf.xlu0
        %v2617 = vpop.trf.xlu0
        %v2618 = vpop.trf.xlu0
        %v2619 = vpop.trf.xlu0
        %v2620 = vpop.trf.xlu0
        %v2621 = vpop.trf.xlu0
        %v2622 = vpop.trf.xlu0
        %v2623 = vpop.trf.xlu0
        %v2624 = vpop.trf.xlu0
        %v2625 = vpop.trf.xlu0
        %v2626 = vpop.trf.xlu0
        %v2628 = vsel %vm1786, %v2611, 0
        %v2631 = vsel %vm1786, %v2612, 0
        %2633 = vmatpush.msra.mxu0 0.0
        %2634 = vmatpush.msra.mxu0 0.0
        %2635 = vmatpush.msra.mxu0 0.0
        %2636 = vmatpush.msra.mxu0 0.0
        %2637 = vmatpush.msra.mxu0 0.0
        %2638 = vmatpush.msra.mxu0 0.0
        %2639 = vmatpush.msra.mxu0 0.0
        %2640 = vmatpush.msra.mxu0 0.0
        %2641 = vmatpush.msra.mxu0 0.0
        %2642 = vmatpush.msra.mxu0 0.0
        %2643 = vmatpush.msra.mxu0 0.0
        %2644 = vmatpush.msra.mxu0 0.0
        %2645 = vmatpush.msra.mxu0 0.0
        %2646 = vmatpush.msra.mxu0 0.0
        %2647 = vmatpush.msra.mxu0 %v873
        %2648 = vmatpush.msra.mxu0 %v872
        %2649 = vmatmul.f32.gmra.mxu0 %v2628
        %v2650 = vpop.f32.mrf.mxu0
        %v2651 = vadd.f32 0.0, %v2650
        %2652 = vmatmul.f32.gmra.mxu0 %v2631
        %v2653 = vpop.f32.mrf.mxu0
        %v2654 = vadd.f32 0.0, %v2653
        %2655 = vdwg.mxu0
        %v2656 = vxor.u32 %v2651, 2147483648
        %v2657 = vxor.u32 %v2654, 2147483648
        %v2658 = vmul.f32 %v2656, 1.442695
        %v2659 = vpow.pop %v2658
        %v2660 = vmul.f32 %v2657, 1.442695
        %v2661 = vpow.pop %v2660
        %v2662 = vadd.f32 %v2659, 1.0
        %v2663 = vadd.f32 %v2661, 1.0
        %v2664 = vrcp.pop %v2662
        %v2665 = vmul.f32 %v2662, %v2664
        %v2666 = vsub.f32 1.0, %v2665
        %v2667 = vmul.f32 %v2664, %v2666
        %v2668 = vadd.f32 %v2664, %v2667
        %vm2669 = vweird.f32 %v2662
        %vm2670 = vweird.f32 %v2664
        %vm2671 = vmor %vm2669, %vm2670
        %v2672 = vsel %vm2671, %v2664, %v2668
        %v2673 = vand.u32 2147483647, %v2662
        %vm2674 = vcmp.eq.f32.partialorder %v2673, 8.507059e+37
        %v2675 = vand.u32 %v2662, 2147483648
        %v2676 = vor.u32 1.1754944e-38, %v2675
        %v2677 = vsel %vm2674, %v2676, %v2672
        %v2678 = vmul.f32 1.0, %v2677
        %v2679 = vrcp.pop %v2663
        %v2680 = vmul.f32 %v2663, %v2679
        %v2681 = vsub.f32 1.0, %v2680
        %v2682 = vmul.f32 %v2679, %v2681
        %v2683 = vadd.f32 %v2679, %v2682
        %vm2684 = vweird.f32 %v2663
        %vm2685 = vweird.f32 %v2679
        %vm2686 = vmor %vm2684, %vm2685
        %v2687 = vsel %vm2686, %v2679, %v2683
        %v2688 = vand.u32 2147483647, %v2663
        %vm2689 = vcmp.eq.f32.partialorder %v2688, 8.507059e+37
        %v2690 = vand.u32 %v2663, 2147483648
        %v2691 = vor.u32 1.1754944e-38, %v2690
        %v2692 = vsel %vm2689, %v2691, %v2687
        %v2693 = vmul.f32 1.0, %v2692
        %v2694 = vmul.f32 %v2678, %v2071
        %v2695 = vmul.f32 %v2693, %v2072
        %v2696 = vadd.f32 %v1856, %v2694
        %v2697 = vadd.f32 %v1857, %v2695
        %v2698 = vadd.f32 %v1858, %v2678
        %v2699 = vadd.f32 %v1859, %v2693
        %2700 = vxpose.xlu0.b32.start [1/16] %v2485, 128
        %2701 = vxpose.xlu0.b32.cont [2/16] %v2486, 128
        %2702 = vxpose.xlu0.b32.cont [3/16] 0.0, 128
        %2703 = vxpose.xlu0.b32.cont [4/16] 0.0, 128
        %2704 = vxpose.xlu0.b32.cont [5/16] 0.0, 128
        %2705 = vxpose.xlu0.b32.cont [6/16] 0.0, 128
        %2706 = vxpose.xlu0.b32.cont [7/16] 0.0, 128
        %2707 = vxpose.xlu0.b32.cont [8/16] 0.0, 128
        %2708 = vxpose.xlu0.b32.cont [9/16] 0.0, 128
        %2709 = vxpose.xlu0.b32.cont [10/16] 0.0, 128
        %2710 = vxpose.xlu0.b32.cont [11/16] 0.0, 128
        %2711 = vxpose.xlu0.b32.cont [12/16] 0.0, 128
        %2712 = vxpose.xlu0.b32.cont [13/16] 0.0, 128
        %2713 = vxpose.xlu0.b32.cont [14/16] 0.0, 128
        %2714 = vxpose.xlu0.b32.cont [15/16] 0.0, 128
        %2715 = vxpose.xlu0.b32.end [16/16] 0.0, 128
        %v2716 = vpop.trf.xlu0
        %v2717 = vpop.trf.xlu0
        %v2718 = vpop.trf.xlu0
        %v2719 = vpop.trf.xlu0
        %v2720 = vpop.trf.xlu0
        %v2721 = vpop.trf.xlu0
        %v2722 = vpop.trf.xlu0
        %v2723 = vpop.trf.xlu0
        %v2724 = vpop.trf.xlu0
        %v2725 = vpop.trf.xlu0
        %v2726 = vpop.trf.xlu0
        %v2727 = vpop.trf.xlu0
        %v2728 = vpop.trf.xlu0
        %v2729 = vpop.trf.xlu0
        %v2730 = vpop.trf.xlu0
        %v2731 = vpop.trf.xlu0
        %v2733 = vsel %vm1786, %v2716, 0
        %v2736 = vsel %vm1786, %v2717, 0
        %2738 = vmatpush.msra.mxu0 0.0
        %2739 = vmatpush.msra.mxu0 0.0
        %2740 = vmatpush.msra.mxu0 0.0
        %2741 = vmatpush.msra.mxu0 0.0
        %2742 = vmatpush.msra.mxu0 0.0
        %2743 = vmatpush.msra.mxu0 0.0
        %2744 = vmatpush.msra.mxu0 0.0
        %2745 = vmatpush.msra.mxu0 0.0
        %2746 = vmatpush.msra.mxu0 0.0
        %2747 = vmatpush.msra.mxu0 0.0
        %2748 = vmatpush.msra.mxu0 0.0
        %2749 = vmatpush.msra.mxu0 0.0
        %2750 = vmatpush.msra.mxu0 0.0
        %2751 = vmatpush.msra.mxu0 0.0
        %2752 = vmatpush.msra.mxu0 %v1009
        %2753 = vmatpush.msra.mxu0 %v1008
        %2754 = vmatmul.f32.gmra.mxu0 %v2733
        %v2755 = vpop.f32.mrf.mxu0
        %v2756 = vadd.f32 0.0, %v2755
        %2757 = vmatmul.f32.gmra.mxu0 %v2736
        %v2758 = vpop.f32.mrf.mxu0
        %v2759 = vadd.f32 0.0, %v2758
        %2760 = vdwg.mxu0
        %v2761 = vxor.u32 %v2756, 2147483648
        %v2762 = vxor.u32 %v2759, 2147483648
        %v2763 = vmul.f32 %v2761, 1.442695
        %v2764 = vpow.pop %v2763
        %v2765 = vmul.f32 %v2762, 1.442695
        %v2766 = vpow.pop %v2765
        %v2767 = vadd.f32 %v2764, 1.0
        %v2768 = vadd.f32 %v2766, 1.0
        %v2769 = vrcp.pop %v2767
        %v2770 = vmul.f32 %v2767, %v2769
        %v2771 = vsub.f32 1.0, %v2770
        %v2772 = vmul.f32 %v2769, %v2771
        %v2773 = vadd.f32 %v2769, %v2772
        %vm2774 = vweird.f32 %v2767
        %vm2775 = vweird.f32 %v2769
        %vm2776 = vmor %vm2774, %vm2775
        %v2777 = vsel %vm2776, %v2769, %v2773
        %v2778 = vand.u32 2147483647, %v2767
        %vm2779 = vcmp.eq.f32.partialorder %v2778, 8.507059e+37
        %v2780 = vand.u32 %v2767, 2147483648
        %v2781 = vor.u32 1.1754944e-38, %v2780
        %v2782 = vsel %vm2779, %v2781, %v2777
        %v2783 = vmul.f32 1.0, %v2782
        %v2784 = vrcp.pop %v2768
        %v2785 = vmul.f32 %v2768, %v2784
        %v2786 = vsub.f32 1.0, %v2785
        %v2787 = vmul.f32 %v2784, %v2786
        %v2788 = vadd.f32 %v2784, %v2787
        %vm2789 = vweird.f32 %v2768
        %vm2790 = vweird.f32 %v2784
        %vm2791 = vmor %vm2789, %vm2790
        %v2792 = vsel %vm2791, %v2784, %v2788
        %v2793 = vand.u32 2147483647, %v2768
        %vm2794 = vcmp.eq.f32.partialorder %v2793, 8.507059e+37
        %v2795 = vand.u32 %v2768, 2147483648
        %v2796 = vor.u32 1.1754944e-38, %v2795
        %v2797 = vsel %vm2794, %v2796, %v2792
        %v2798 = vmul.f32 1.0, %v2797
        %v2799 = vmul.f32 %v2783, %v2074
        %v2800 = vmul.f32 %v2798, %v2075
        %v2801 = vadd.f32 %v1961, %v2799
        %v2802 = vadd.f32 %v1962, %v2800
        %v2803 = vadd.f32 %v1963, %v2783
        %v2804 = vadd.f32 %v1964, %v2798
        %2805 = vxpose.xlu0.b32.start [1/16] %v2593, 128
        %2806 = vxpose.xlu0.b32.cont [2/16] %v2594, 128
        %2807 = vxpose.xlu0.b32.cont [3/16] 0.0, 128
        %2808 = vxpose.xlu0.b32.cont [4/16] 0.0, 128
        %2809 = vxpose.xlu0.b32.cont [5/16] 0.0, 128
        %2810 = vxpose.xlu0.b32.cont [6/16] 0.0, 128
        %2811 = vxpose.xlu0.b32.cont [7/16] 0.0, 128
        %2812 = vxpose.xlu0.b32.cont [8/16] 0.0, 128
        %2813 = vxpose.xlu0.b32.cont [9/16] 0.0, 128
        %2814 = vxpose.xlu0.b32.cont [10/16] 0.0, 128
        %2815 = vxpose.xlu0.b32.cont [11/16] 0.0, 128
        %2816 = vxpose.xlu0.b32.cont [12/16] 0.0, 128
        %2817 = vxpose.xlu0.b32.cont [13/16] 0.0, 128
        %2818 = vxpose.xlu0.b32.cont [14/16] 0.0, 128
        %2819 = vxpose.xlu0.b32.cont [15/16] 0.0, 128
        %2820 = vxpose.xlu0.b32.end [16/16] 0.0, 128
        %v2821 = vpop.trf.xlu0
        %v2822 = vpop.trf.xlu0
        %v2823 = vpop.trf.xlu0
        %v2824 = vpop.trf.xlu0
        %v2825 = vpop.trf.xlu0
        %v2826 = vpop.trf.xlu0
        %v2827 = vpop.trf.xlu0
        %v2828 = vpop.trf.xlu0
        %v2829 = vpop.trf.xlu0
        %v2830 = vpop.trf.xlu0
        %v2831 = vpop.trf.xlu0
        %v2832 = vpop.trf.xlu0
        %v2833 = vpop.trf.xlu0
        %v2834 = vpop.trf.xlu0
        %v2835 = vpop.trf.xlu0
        %v2836 = vpop.trf.xlu0
        %v2838 = vsel %vm1786, %v2821, 0
        %v2841 = vsel %vm1786, %v2822, 0
        %2843 = vmatpush.msra.mxu0 0.0
        %2844 = vmatpush.msra.mxu0 0.0
        %2845 = vmatpush.msra.mxu0 0.0
        %2846 = vmatpush.msra.mxu0 0.0
        %2847 = vmatpush.msra.mxu0 0.0
        %2848 = vmatpush.msra.mxu0 0.0
        %2849 = vmatpush.msra.mxu0 0.0
        %2850 = vmatpush.msra.mxu0 0.0
        %2851 = vmatpush.msra.mxu0 0.0
        %2852 = vmatpush.msra.mxu0 0.0
        %2853 = vmatpush.msra.mxu0 0.0
        %2854 = vmatpush.msra.mxu0 0.0
        %2855 = vmatpush.msra.mxu0 0.0
        %2856 = vmatpush.msra.mxu0 0.0
        %2857 = vmatpush.msra.mxu0 %v1145
        %2858 = vmatpush.msra.mxu0 %v1144
        %2859 = vmatmul.f32.gmra.mxu0 %v2838
        %v2860 = vpop.f32.mrf.mxu0
        %v2861 = vadd.f32 0.0, %v2860
        %2862 = vmatmul.f32.gmra.mxu0 %v2841
        %v2863 = vpop.f32.mrf.mxu0
        %v2864 = vadd.f32 0.0, %v2863
        %2865 = vdwg.mxu0
        %v2866 = vxor.u32 %v2861, 2147483648
        %v2867 = vxor.u32 %v2864, 2147483648
        %v2868 = vmul.f32 %v2866, 1.442695
        %v2869 = vpow.pop %v2868
        %v2870 = vmul.f32 %v2867, 1.442695
        %v2871 = vpow.pop %v2870
        %v2872 = vadd.f32 %v2869, 1.0
        %v2873 = vadd.f32 %v2871, 1.0
        %v2874 = vrcp.pop %v2872
        %v2875 = vmul.f32 %v2872, %v2874
        %v2876 = vsub.f32 1.0, %v2875
        %v2877 = vmul.f32 %v2874, %v2876
        %v2878 = vadd.f32 %v2874, %v2877
        %vm2879 = vweird.f32 %v2872
        %vm2880 = vweird.f32 %v2874
        %vm2881 = vmor %vm2879, %vm2880
        %v2882 = vsel %vm2881, %v2874, %v2878
        %v2883 = vand.u32 2147483647, %v2872
        %vm2884 = vcmp.eq.f32.partialorder %v2883, 8.507059e+37
        %v2885 = vand.u32 %v2872, 2147483648
        %v2886 = vor.u32 1.1754944e-38, %v2885
        %v2887 = vsel %vm2884, %v2886, %v2882
        %v2888 = vmul.f32 1.0, %v2887
        %v2889 = vrcp.pop %v2873
        %v2890 = vmul.f32 %v2873, %v2889
        %v2891 = vsub.f32 1.0, %v2890
        %v2892 = vmul.f32 %v2889, %v2891
        %v2893 = vadd.f32 %v2889, %v2892
        %vm2894 = vweird.f32 %v2873
        %vm2895 = vweird.f32 %v2889
        %vm2896 = vmor %vm2894, %vm2895
        %v2897 = vsel %vm2896, %v2889, %v2893
        %v2898 = vand.u32 2147483647, %v2873
        %vm2899 = vcmp.eq.f32.partialorder %v2898, 8.507059e+37
        %v2900 = vand.u32 %v2873, 2147483648
        %v2901 = vor.u32 1.1754944e-38, %v2900
        %v2902 = vsel %vm2899, %v2901, %v2897
        %v2903 = vmul.f32 1.0, %v2902
        %v2904 = vmul.f32 %v2888, %v2077
        %v2905 = vmul.f32 %v2903, %v2078
        %v2906 = vadd.f32 %v2066, %v2904
        %v2907 = vadd.f32 %v2067, %v2905
        %v2908 = vadd.f32 %v2068, %v2888
        %v2909 = vadd.f32 %v2069, %v2903
        %s2910 = scalar_lea.vmem %s310, 96 [#allocation6]
        %v2911 = vld [vmem:[%s2910] sm:$0xff]
        %v2912 = vld [vmem:[%s2910 + $0x8] sm:$0xff]
        %s2913 = scalar_lea.vmem %s310, 112 [#allocation6]
        %v2914 = vld [vmem:[%s2913] sm:$0xff]
        %v2915 = vld [vmem:[%s2913 + $0x8] sm:$0xff]
        %s2916 = scalar_lea.vmem %s310, 128 [#allocation6]
        %v2917 = vld [vmem:[%s2916] sm:$0xff]
        %v2918 = vld [vmem:[%s2916 + $0x8] sm:$0xff]
        %v2921 = vrot.slane %v2911, 7
        %v2922 = vrot.slane %v2912, 7
        %v2923 = vsel %vm544, %v2921, %v2922
        %v2926 = vsel %vm544, 0.0, %v2921
        %2928 = vrot.lane.b32.xlu0 %v2926, 1
        %v2929 = vpop.permute.xlu0 %2928
        %2930 = vrot.lane.b32.xlu0 %v2923, 1
        %v2931 = vpop.permute.xlu0 %2930
        %v2934 = vsel %vm558, 0.0, %v2929
        %v2935 = vsel %vm558, 0.0, %v2931
        %2936 = vrot.lane.b32.xlu0 %v2926, 127
        %v2937 = vpop.permute.xlu0 %2936
        %2938 = vrot.lane.b32.xlu0 %v2923, 127
        %v2939 = vpop.permute.xlu0 %2938
        %v2942 = vsel %vm567, %v2937, 0.0
        %v2943 = vsel %vm567, %v2939, 0.0
        %2944 = vrot.lane.b32.xlu0 %v2911, 1
        %v2945 = vpop.permute.xlu0 %2944
        %2946 = vrot.lane.b32.xlu0 %v2912, 1
        %v2947 = vpop.permute.xlu0 %2946
        %v2950 = vsel %vm558, 0.0, %v2945
        %v2951 = vsel %vm558, 0.0, %v2947
        %2952 = vrot.lane.b32.xlu0 %v2911, 127
        %v2953 = vpop.permute.xlu0 %2952
        %2954 = vrot.lane.b32.xlu0 %v2912, 127
        %v2955 = vpop.permute.xlu0 %2954
        %v2958 = vsel %vm567, %v2953, 0.0
        %v2959 = vsel %vm567, %v2955, 0.0
        %v2960 = vrot.slane %v2911, 1
        %v2961 = vrot.slane %v2912, 1
        %v2962 = vsel %vm586, %v2960, %v2961
        %v2965 = vsel %vm586, %v2961, 0.0
        %2967 = vrot.lane.b32.xlu0 %v2962, 1
        %v2968 = vpop.permute.xlu0 %2967
        %2969 = vrot.lane.b32.xlu0 %v2965, 1
        %v2970 = vpop.permute.xlu0 %2969
        %v2973 = vsel %vm558, 0.0, %v2968
        %v2974 = vsel %vm558, 0.0, %v2970
        %2975 = vrot.lane.b32.xlu0 %v2962, 127
        %v2976 = vpop.permute.xlu0 %2975
        %2977 = vrot.lane.b32.xlu0 %v2965, 127
        %v2978 = vpop.permute.xlu0 %2977
        %v2981 = vsel %vm567, %v2976, 0.0
        %v2982 = vsel %vm567, %v2978, 0.0
        %v2985 = vrot.slane %v2914, 7
        %v2986 = vrot.slane %v2915, 7
        %v2987 = vsel %vm544, %v2985, %v2986
        %v2990 = vsel %vm544, 0.0, %v2985
        %2992 = vrot.lane.b32.xlu0 %v2990, 1
        %v2993 = vpop.permute.xlu0 %2992
        %2994 = vrot.lane.b32.xlu0 %v2987, 1
        %v2995 = vpop.permute.xlu0 %2994
        %v2998 = vsel %vm558, 0.0, %v2993
        %v2999 = vsel %vm558, 0.0, %v2995
        %3000 = vrot.lane.b32.xlu0 %v2990, 127
        %v3001 = vpop.permute.xlu0 %3000
        %3002 = vrot.lane.b32.xlu0 %v2987, 127
        %v3003 = vpop.permute.xlu0 %3002
        %v3006 = vsel %vm567, %v3001, 0.0
        %v3007 = vsel %vm567, %v3003, 0.0
        %3008 = vrot.lane.b32.xlu0 %v2914, 1
        %v3009 = vpop.permute.xlu0 %3008
        %3010 = vrot.lane.b32.xlu0 %v2915, 1
        %v3011 = vpop.permute.xlu0 %3010
        %v3014 = vsel %vm558, 0.0, %v3009
        %v3015 = vsel %vm558, 0.0, %v3011
        %3016 = vrot.lane.b32.xlu0 %v2914, 127
        %v3017 = vpop.permute.xlu0 %3016
        %3018 = vrot.lane.b32.xlu0 %v2915, 127
        %v3019 = vpop.permute.xlu0 %3018
        %v3022 = vsel %vm567, %v3017, 0.0
        %v3023 = vsel %vm567, %v3019, 0.0
        %v3024 = vrot.slane %v2914, 1
        %v3025 = vrot.slane %v2915, 1
        %v3026 = vsel %vm586, %v3024, %v3025
        %v3029 = vsel %vm586, %v3025, 0.0
        %3031 = vrot.lane.b32.xlu0 %v3026, 1
        %v3032 = vpop.permute.xlu0 %3031
        %3033 = vrot.lane.b32.xlu0 %v3029, 1
        %v3034 = vpop.permute.xlu0 %3033
        %v3037 = vsel %vm558, 0.0, %v3032
        %v3038 = vsel %vm558, 0.0, %v3034
        %3039 = vrot.lane.b32.xlu0 %v3026, 127
        %v3040 = vpop.permute.xlu0 %3039
        %3041 = vrot.lane.b32.xlu0 %v3029, 127
        %v3042 = vpop.permute.xlu0 %3041
        %v3045 = vsel %vm567, %v3040, 0.0
        %v3046 = vsel %vm567, %v3042, 0.0
        %v3049 = vrot.slane %v2917, 7
        %v3050 = vrot.slane %v2918, 7
        %v3051 = vsel %vm544, %v3049, %v3050
        %v3054 = vsel %vm544, 0.0, %v3049
        %3056 = vrot.lane.b32.xlu0 %v3054, 1
        %v3057 = vpop.permute.xlu0 %3056
        %3058 = vrot.lane.b32.xlu0 %v3051, 1
        %v3059 = vpop.permute.xlu0 %3058
        %v3062 = vsel %vm558, 0.0, %v3057
        %v3063 = vsel %vm558, 0.0, %v3059
        %3064 = vrot.lane.b32.xlu0 %v3054, 127
        %v3065 = vpop.permute.xlu0 %3064
        %3066 = vrot.lane.b32.xlu0 %v3051, 127
        %v3067 = vpop.permute.xlu0 %3066
        %v3070 = vsel %vm567, %v3065, 0.0
        %v3071 = vsel %vm567, %v3067, 0.0
        %3072 = vrot.lane.b32.xlu0 %v2917, 1
        %v3073 = vpop.permute.xlu0 %3072
        %3074 = vrot.lane.b32.xlu0 %v2918, 1
        %v3075 = vpop.permute.xlu0 %3074
        %v3078 = vsel %vm558, 0.0, %v3073
        %v3079 = vsel %vm558, 0.0, %v3075
        %3080 = vrot.lane.b32.xlu0 %v2917, 127
        %v3081 = vpop.permute.xlu0 %3080
        %3082 = vrot.lane.b32.xlu0 %v2918, 127
        %v3083 = vpop.permute.xlu0 %3082
        %v3086 = vsel %vm567, %v3081, 0.0
        %v3087 = vsel %vm567, %v3083, 0.0
        %v3088 = vrot.slane %v2917, 1
        %v3089 = vrot.slane %v2918, 1
        %v3090 = vsel %vm586, %v3088, %v3089
        %v3093 = vsel %vm586, %v3089, 0.0
        %3095 = vrot.lane.b32.xlu0 %v3090, 1
        %v3096 = vpop.permute.xlu0 %3095
        %3097 = vrot.lane.b32.xlu0 %v3093, 1
        %v3098 = vpop.permute.xlu0 %3097
        %v3101 = vsel %vm558, 0.0, %v3096
        %v3102 = vsel %vm558, 0.0, %v3098
        %3103 = vrot.lane.b32.xlu0 %v3090, 127
        %v3104 = vpop.permute.xlu0 %3103
        %3105 = vrot.lane.b32.xlu0 %v3093, 127
        %v3106 = vpop.permute.xlu0 %3105
        %v3109 = vsel %vm567, %v3104, 0.0
        %v3110 = vsel %vm567, %v3106, 0.0
        %v3111 = vmul.f32 %v1347, %v2934
        %v3112 = vmul.f32 %v1347, %v2935
        %v3113 = vadd.f32 %v1346, %v3111
        %v3114 = vadd.f32 %v1346, %v3112
        %v3115 = vmul.f32 %v1352, %v2998
        %v3116 = vmul.f32 %v1352, %v2999
        %v3117 = vadd.f32 %v3113, %v3115
        %v3118 = vadd.f32 %v3114, %v3116
        %v3119 = vmul.f32 %v1357, %v3062
        %v3120 = vmul.f32 %v1357, %v3063
        %v3121 = vadd.f32 %v3117, %v3119
        %v3122 = vadd.f32 %v3118, %v3120
        %v3123 = vmul.f32 %v1362, %v2926
        %v3124 = vmul.f32 %v1362, %v2923
        %v3125 = vadd.f32 %v3121, %v3123
        %v3126 = vadd.f32 %v3122, %v3124
        %v3127 = vmul.f32 %v1367, %v2990
        %v3128 = vmul.f32 %v1367, %v2987
        %v3129 = vadd.f32 %v3125, %v3127
        %v3130 = vadd.f32 %v3126, %v3128
        %v3131 = vmul.f32 %v1372, %v3054
        %v3132 = vmul.f32 %v1372, %v3051
        %v3133 = vadd.f32 %v3129, %v3131
        %v3134 = vadd.f32 %v3130, %v3132
        %v3135 = vmul.f32 %v1377, %v2942
        %v3136 = vmul.f32 %v1377, %v2943
        %v3137 = vadd.f32 %v3133, %v3135
        %v3138 = vadd.f32 %v3134, %v3136
        %v3139 = vmul.f32 %v1382, %v3006
        %v3140 = vmul.f32 %v1382, %v3007
        %v3141 = vadd.f32 %v3137, %v3139
        %v3142 = vadd.f32 %v3138, %v3140
        %v3143 = vmul.f32 %v1387, %v3070
        %v3144 = vmul.f32 %v1387, %v3071
        %v3145 = vadd.f32 %v3141, %v3143
        %v3146 = vadd.f32 %v3142, %v3144
        %v3147 = vmul.f32 %v1392, %v2950
        %v3148 = vmul.f32 %v1392, %v2951
        %v3149 = vadd.f32 %v3145, %v3147
        %v3150 = vadd.f32 %v3146, %v3148
        %v3151 = vmul.f32 %v1397, %v3014
        %v3152 = vmul.f32 %v1397, %v3015
        %v3153 = vadd.f32 %v3149, %v3151
        %v3154 = vadd.f32 %v3150, %v3152
        %v3155 = vmul.f32 %v1402, %v3078
        %v3156 = vmul.f32 %v1402, %v3079
        %v3157 = vadd.f32 %v3153, %v3155
        %v3158 = vadd.f32 %v3154, %v3156
        %v3159 = vmul.f32 %v1407, %v2911
        %v3160 = vmul.f32 %v1407, %v2912
        %v3161 = vadd.f32 %v3157, %v3159
        %v3162 = vadd.f32 %v3158, %v3160
        %v3163 = vmul.f32 %v1412, %v2914
        %v3164 = vmul.f32 %v1412, %v2915
        %v3165 = vadd.f32 %v3161, %v3163
        %v3166 = vadd.f32 %v3162, %v3164
        %v3167 = vmul.f32 %v1417, %v2917
        %v3168 = vmul.f32 %v1417, %v2918
        %v3169 = vadd.f32 %v3165, %v3167
        %v3170 = vadd.f32 %v3166, %v3168
        %v3171 = vmul.f32 %v1422, %v2958
        %v3172 = vmul.f32 %v1422, %v2959
        %v3173 = vadd.f32 %v3169, %v3171
        %v3174 = vadd.f32 %v3170, %v3172
        %v3175 = vmul.f32 %v1427, %v3022
        %v3176 = vmul.f32 %v1427, %v3023
        %v3177 = vadd.f32 %v3173, %v3175
        %v3178 = vadd.f32 %v3174, %v3176
        %v3179 = vmul.f32 %v1432, %v3086
        %v3180 = vmul.f32 %v1432, %v3087
        %v3181 = vadd.f32 %v3177, %v3179
        %v3182 = vadd.f32 %v3178, %v3180
        %v3183 = vmul.f32 %v1437, %v2973
        %v3184 = vmul.f32 %v1437, %v2974
        %v3185 = vadd.f32 %v3181, %v3183
        %v3186 = vadd.f32 %v3182, %v3184
        %v3187 = vmul.f32 %v1442, %v3037
        %v3188 = vmul.f32 %v1442, %v3038
        %v3189 = vadd.f32 %v3185, %v3187
        %v3190 = vadd.f32 %v3186, %v3188
        %v3191 = vmul.f32 %v1447, %v3101
        %v3192 = vmul.f32 %v1447, %v3102
        %v3193 = vadd.f32 %v3189, %v3191
        %v3194 = vadd.f32 %v3190, %v3192
        %v3195 = vmul.f32 %v1452, %v2962
        %v3196 = vmul.f32 %v1452, %v2965
        %v3197 = vadd.f32 %v3193, %v3195
        %v3198 = vadd.f32 %v3194, %v3196
        %v3199 = vmul.f32 %v1457, %v3026
        %v3200 = vmul.f32 %v1457, %v3029
        %v3201 = vadd.f32 %v3197, %v3199
        %v3202 = vadd.f32 %v3198, %v3200
        %v3203 = vmul.f32 %v1462, %v3090
        %v3204 = vmul.f32 %v1462, %v3093
        %v3205 = vadd.f32 %v3201, %v3203
        %v3206 = vadd.f32 %v3202, %v3204
        %v3207 = vmul.f32 %v1467, %v2981
        %v3208 = vmul.f32 %v1467, %v2982
        %v3209 = vadd.f32 %v3205, %v3207
        %v3210 = vadd.f32 %v3206, %v3208
        %v3211 = vmul.f32 %v1472, %v3045
        %v3212 = vmul.f32 %v1472, %v3046
        %v3213 = vadd.f32 %v3209, %v3211
        %v3214 = vadd.f32 %v3210, %v3212
        %v3215 = vmul.f32 %v1477, %v3109
        %v3216 = vmul.f32 %v1477, %v3110
        %v3217 = vadd.f32 %v3213, %v3215
        %v3218 = vadd.f32 %v3214, %v3216
        %v3219 = vmul.f32 %v1483, %v2934
        %v3220 = vmul.f32 %v1483, %v2935
        %v3221 = vadd.f32 %v1482, %v3219
        %v3222 = vadd.f32 %v1482, %v3220
        %v3223 = vmul.f32 %v1488, %v2998
        %v3224 = vmul.f32 %v1488, %v2999
        %v3225 = vadd.f32 %v3221, %v3223
        %v3226 = vadd.f32 %v3222, %v3224
        %v3227 = vmul.f32 %v1493, %v3062
        %v3228 = vmul.f32 %v1493, %v3063
        %v3229 = vadd.f32 %v3225, %v3227
        %v3230 = vadd.f32 %v3226, %v3228
        %v3231 = vmul.f32 %v1498, %v2926
        %v3232 = vmul.f32 %v1498, %v2923
        %v3233 = vadd.f32 %v3229, %v3231
        %v3234 = vadd.f32 %v3230, %v3232
        %v3235 = vmul.f32 %v1503, %v2990
        %v3236 = vmul.f32 %v1503, %v2987
        %v3237 = vadd.f32 %v3233, %v3235
        %v3238 = vadd.f32 %v3234, %v3236
        %v3239 = vmul.f32 %v1508, %v3054
        %v3240 = vmul.f32 %v1508, %v3051
        %v3241 = vadd.f32 %v3237, %v3239
        %v3242 = vadd.f32 %v3238, %v3240
        %v3243 = vmul.f32 %v1513, %v2942
        %v3244 = vmul.f32 %v1513, %v2943
        %v3245 = vadd.f32 %v3241, %v3243
        %v3246 = vadd.f32 %v3242, %v3244
        %v3247 = vmul.f32 %v1518, %v3006
        %v3248 = vmul.f32 %v1518, %v3007
        %v3249 = vadd.f32 %v3245, %v3247
        %v3250 = vadd.f32 %v3246, %v3248
        %v3251 = vmul.f32 %v1523, %v3070
        %v3252 = vmul.f32 %v1523, %v3071
        %v3253 = vadd.f32 %v3249, %v3251
        %v3254 = vadd.f32 %v3250, %v3252
        %v3255 = vmul.f32 %v1528, %v2950
        %v3256 = vmul.f32 %v1528, %v2951
        %v3257 = vadd.f32 %v3253, %v3255
        %v3258 = vadd.f32 %v3254, %v3256
        %v3259 = vmul.f32 %v1533, %v3014
        %v3260 = vmul.f32 %v1533, %v3015
        %v3261 = vadd.f32 %v3257, %v3259
        %v3262 = vadd.f32 %v3258, %v3260
        %v3263 = vmul.f32 %v1538, %v3078
        %v3264 = vmul.f32 %v1538, %v3079
        %v3265 = vadd.f32 %v3261, %v3263
        %v3266 = vadd.f32 %v3262, %v3264
        %v3267 = vmul.f32 %v1543, %v2911
        %v3268 = vmul.f32 %v1543, %v2912
        %v3269 = vadd.f32 %v3265, %v3267
        %v3270 = vadd.f32 %v3266, %v3268
        %v3271 = vmul.f32 %v1548, %v2914
        %v3272 = vmul.f32 %v1548, %v2915
        %v3273 = vadd.f32 %v3269, %v3271
        %v3274 = vadd.f32 %v3270, %v3272
        %v3275 = vmul.f32 %v1553, %v2917
        %v3276 = vmul.f32 %v1553, %v2918
        %v3277 = vadd.f32 %v3273, %v3275
        %v3278 = vadd.f32 %v3274, %v3276
        %v3279 = vmul.f32 %v1558, %v2958
        %v3280 = vmul.f32 %v1558, %v2959
        %v3281 = vadd.f32 %v3277, %v3279
        %v3282 = vadd.f32 %v3278, %v3280
        %v3283 = vmul.f32 %v1563, %v3022
        %v3284 = vmul.f32 %v1563, %v3023
        %v3285 = vadd.f32 %v3281, %v3283
        %v3286 = vadd.f32 %v3282, %v3284
        %v3287 = vmul.f32 %v1568, %v3086
        %v3288 = vmul.f32 %v1568, %v3087
        %v3289 = vadd.f32 %v3285, %v3287
        %v3290 = vadd.f32 %v3286, %v3288
        %v3291 = vmul.f32 %v1573, %v2973
        %v3292 = vmul.f32 %v1573, %v2974
        %v3293 = vadd.f32 %v3289, %v3291
        %v3294 = vadd.f32 %v3290, %v3292
        %v3295 = vmul.f32 %v1578, %v3037
        %v3296 = vmul.f32 %v1578, %v3038
        %v3297 = vadd.f32 %v3293, %v3295
        %v3298 = vadd.f32 %v3294, %v3296
        %v3299 = vmul.f32 %v1583, %v3101
        %v3300 = vmul.f32 %v1583, %v3102
        %v3301 = vadd.f32 %v3297, %v3299
        %v3302 = vadd.f32 %v3298, %v3300
        %v3303 = vmul.f32 %v1588, %v2962
        %v3304 = vmul.f32 %v1588, %v2965
        %v3305 = vadd.f32 %v3301, %v3303
        %v3306 = vadd.f32 %v3302, %v3304
        %v3307 = vmul.f32 %v1593, %v3026
        %v3308 = vmul.f32 %v1593, %v3029
        %v3309 = vadd.f32 %v3305, %v3307
        %v3310 = vadd.f32 %v3306, %v3308
        %v3311 = vmul.f32 %v1598, %v3090
        %v3312 = vmul.f32 %v1598, %v3093
        %v3313 = vadd.f32 %v3309, %v3311
        %v3314 = vadd.f32 %v3310, %v3312
        %v3315 = vmul.f32 %v1603, %v2981
        %v3316 = vmul.f32 %v1603, %v2982
        %v3317 = vadd.f32 %v3313, %v3315
        %v3318 = vadd.f32 %v3314, %v3316
        %v3319 = vmul.f32 %v1608, %v3045
        %v3320 = vmul.f32 %v1608, %v3046
        %v3321 = vadd.f32 %v3317, %v3319
        %v3322 = vadd.f32 %v3318, %v3320
        %v3323 = vmul.f32 %v1613, %v3109
        %v3324 = vmul.f32 %v1613, %v3110
        %v3325 = vadd.f32 %v3321, %v3323
        %v3326 = vadd.f32 %v3322, %v3324
        %v3327 = vmul.f32 %v1619, %v2934
        %v3328 = vmul.f32 %v1619, %v2935
        %v3329 = vadd.f32 %v1618, %v3327
        %v3330 = vadd.f32 %v1618, %v3328
        %v3331 = vmul.f32 %v1624, %v2998
        %v3332 = vmul.f32 %v1624, %v2999
        %v3333 = vadd.f32 %v3329, %v3331
        %v3334 = vadd.f32 %v3330, %v3332
        %v3335 = vmul.f32 %v1629, %v3062
        %v3336 = vmul.f32 %v1629, %v3063
        %v3337 = vadd.f32 %v3333, %v3335
        %v3338 = vadd.f32 %v3334, %v3336
        %v3339 = vmul.f32 %v1634, %v2926
        %v3340 = vmul.f32 %v1634, %v2923
        %v3341 = vadd.f32 %v3337, %v3339
        %v3342 = vadd.f32 %v3338, %v3340
        %v3343 = vmul.f32 %v1639, %v2990
        %v3344 = vmul.f32 %v1639, %v2987
        %v3345 = vadd.f32 %v3341, %v3343
        %v3346 = vadd.f32 %v3342, %v3344
        %v3347 = vmul.f32 %v1644, %v3054
        %v3348 = vmul.f32 %v1644, %v3051
        %v3349 = vadd.f32 %v3345, %v3347
        %v3350 = vadd.f32 %v3346, %v3348
        %v3351 = vmul.f32 %v1649, %v2942
        %v3352 = vmul.f32 %v1649, %v2943
        %v3353 = vadd.f32 %v3349, %v3351
        %v3354 = vadd.f32 %v3350, %v3352
        %v3355 = vmul.f32 %v1654, %v3006
        %v3356 = vmul.f32 %v1654, %v3007
        %v3357 = vadd.f32 %v3353, %v3355
        %v3358 = vadd.f32 %v3354, %v3356
        %v3359 = vmul.f32 %v1659, %v3070
        %v3360 = vmul.f32 %v1659, %v3071
        %v3361 = vadd.f32 %v3357, %v3359
        %v3362 = vadd.f32 %v3358, %v3360
        %v3363 = vmul.f32 %v1664, %v2950
        %v3364 = vmul.f32 %v1664, %v2951
        %v3365 = vadd.f32 %v3361, %v3363
        %v3366 = vadd.f32 %v3362, %v3364
        %v3367 = vmul.f32 %v1669, %v3014
        %v3368 = vmul.f32 %v1669, %v3015
        %v3369 = vadd.f32 %v3365, %v3367
        %v3370 = vadd.f32 %v3366, %v3368
        %v3371 = vmul.f32 %v1674, %v3078
        %v3372 = vmul.f32 %v1674, %v3079
        %v3373 = vadd.f32 %v3369, %v3371
        %v3374 = vadd.f32 %v3370, %v3372
        %v3375 = vmul.f32 %v1679, %v2911
        %v3376 = vmul.f32 %v1679, %v2912
        %v3377 = vadd.f32 %v3373, %v3375
        %v3378 = vadd.f32 %v3374, %v3376
        %v3379 = vmul.f32 %v1684, %v2914
        %v3380 = vmul.f32 %v1684, %v2915
        %v3381 = vadd.f32 %v3377, %v3379
        %v3382 = vadd.f32 %v3378, %v3380
        %v3383 = vmul.f32 %v1689, %v2917
        %v3384 = vmul.f32 %v1689, %v2918
        %v3385 = vadd.f32 %v3381, %v3383
        %v3386 = vadd.f32 %v3382, %v3384
        %v3387 = vmul.f32 %v1694, %v2958
        %v3388 = vmul.f32 %v1694, %v2959
        %v3389 = vadd.f32 %v3385, %v3387
        %v3390 = vadd.f32 %v3386, %v3388
        %v3391 = vmul.f32 %v1699, %v3022
        %v3392 = vmul.f32 %v1699, %v3023
        %v3393 = vadd.f32 %v3389, %v3391
        %v3394 = vadd.f32 %v3390, %v3392
        %v3395 = vmul.f32 %v1704, %v3086
        %v3396 = vmul.f32 %v1704, %v3087
        %v3397 = vadd.f32 %v3393, %v3395
        %v3398 = vadd.f32 %v3394, %v3396
        %v3399 = vmul.f32 %v1709, %v2973
        %v3400 = vmul.f32 %v1709, %v2974
        %v3401 = vadd.f32 %v3397, %v3399
        %v3402 = vadd.f32 %v3398, %v3400
        %v3403 = vmul.f32 %v1714, %v3037
        %v3404 = vmul.f32 %v1714, %v3038
        %v3405 = vadd.f32 %v3401, %v3403
        %v3406 = vadd.f32 %v3402, %v3404
        %v3407 = vmul.f32 %v1719, %v3101
        %v3408 = vmul.f32 %v1719, %v3102
        %v3409 = vadd.f32 %v3405, %v3407
        %v3410 = vadd.f32 %v3406, %v3408
        %v3411 = vmul.f32 %v1724, %v2962
        %v3412 = vmul.f32 %v1724, %v2965
        %v3413 = vadd.f32 %v3409, %v3411
        %v3414 = vadd.f32 %v3410, %v3412
        %v3415 = vmul.f32 %v1729, %v3026
        %v3416 = vmul.f32 %v1729, %v3029
        %v3417 = vadd.f32 %v3413, %v3415
        %v3418 = vadd.f32 %v3414, %v3416
        %v3419 = vmul.f32 %v1734, %v3090
        %v3420 = vmul.f32 %v1734, %v3093
        %v3421 = vadd.f32 %v3417, %v3419
        %v3422 = vadd.f32 %v3418, %v3420
        %v3423 = vmul.f32 %v1739, %v2981
        %v3424 = vmul.f32 %v1739, %v2982
        %v3425 = vadd.f32 %v3421, %v3423
        %v3426 = vadd.f32 %v3422, %v3424
        %v3427 = vmul.f32 %v1744, %v3045
        %v3428 = vmul.f32 %v1744, %v3046
        %v3429 = vadd.f32 %v3425, %v3427
        %v3430 = vadd.f32 %v3426, %v3428
        %v3431 = vmul.f32 %v1749, %v3109
        %v3432 = vmul.f32 %v1749, %v3110
        %v3433 = vadd.f32 %v3429, %v3431
        %v3434 = vadd.f32 %v3430, %v3432
        %3435 = vxpose.xlu0.b32.start [1/16] %v3217, 128
        %3436 = vxpose.xlu0.b32.cont [2/16] %v3218, 128
        %3437 = vxpose.xlu0.b32.cont [3/16] 0.0, 128
        %3438 = vxpose.xlu0.b32.cont [4/16] 0.0, 128
        %3439 = vxpose.xlu0.b32.cont [5/16] 0.0, 128
        %3440 = vxpose.xlu0.b32.cont [6/16] 0.0, 128
        %3441 = vxpose.xlu0.b32.cont [7/16] 0.0, 128
        %3442 = vxpose.xlu0.b32.cont [8/16] 0.0, 128
        %3443 = vxpose.xlu0.b32.cont [9/16] 0.0, 128
        %3444 = vxpose.xlu0.b32.cont [10/16] 0.0, 128
        %3445 = vxpose.xlu0.b32.cont [11/16] 0.0, 128
        %3446 = vxpose.xlu0.b32.cont [12/16] 0.0, 128
        %3447 = vxpose.xlu0.b32.cont [13/16] 0.0, 128
        %3448 = vxpose.xlu0.b32.cont [14/16] 0.0, 128
        %3449 = vxpose.xlu0.b32.cont [15/16] 0.0, 128
        %3450 = vxpose.xlu0.b32.end [16/16] 0.0, 128
        %v3451 = vpop.trf.xlu0
        %v3452 = vpop.trf.xlu0
        %v3453 = vpop.trf.xlu0
        %v3454 = vpop.trf.xlu0
        %v3455 = vpop.trf.xlu0
        %v3456 = vpop.trf.xlu0
        %v3457 = vpop.trf.xlu0
        %v3458 = vpop.trf.xlu0
        %v3459 = vpop.trf.xlu0
        %v3460 = vpop.trf.xlu0
        %v3461 = vpop.trf.xlu0
        %v3462 = vpop.trf.xlu0
        %v3463 = vpop.trf.xlu0
        %v3464 = vpop.trf.xlu0
        %v3465 = vpop.trf.xlu0
        %v3466 = vpop.trf.xlu0
        %v3468 = vsel %vm1786, %v3451, 0
        %v3471 = vsel %vm1786, %v3452, 0
        %3473 = vmatpush.msra.mxu0 0.0
        %3474 = vmatpush.msra.mxu0 0.0
        %3475 = vmatpush.msra.mxu0 0.0
        %3476 = vmatpush.msra.mxu0 0.0
        %3477 = vmatpush.msra.mxu0 0.0
        %3478 = vmatpush.msra.mxu0 0.0
        %3479 = vmatpush.msra.mxu0 0.0
        %3480 = vmatpush.msra.mxu0 0.0
        %3481 = vmatpush.msra.mxu0 0.0
        %3482 = vmatpush.msra.mxu0 0.0
        %3483 = vmatpush.msra.mxu0 0.0
        %3484 = vmatpush.msra.mxu0 0.0
        %3485 = vmatpush.msra.mxu0 0.0
        %3486 = vmatpush.msra.mxu0 0.0
        %3487 = vmatpush.msra.mxu0 %v873
        %3488 = vmatpush.msra.mxu0 %v872
        %3489 = vmatmul.f32.gmra.mxu0 %v3468
        %v3490 = vpop.f32.mrf.mxu0
        %v3491 = vadd.f32 0.0, %v3490
        %3492 = vmatmul.f32.gmra.mxu0 %v3471
        %v3493 = vpop.f32.mrf.mxu0
        %v3494 = vadd.f32 0.0, %v3493
        %3495 = vdwg.mxu0
        %v3496 = vxor.u32 %v3491, 2147483648
        %v3497 = vxor.u32 %v3494, 2147483648
        %v3498 = vmul.f32 %v3496, 1.442695
        %v3499 = vpow.pop %v3498
        %v3500 = vmul.f32 %v3497, 1.442695
        %v3501 = vpow.pop %v3500
        %v3502 = vadd.f32 %v3499, 1.0
        %v3503 = vadd.f32 %v3501, 1.0
        %v3504 = vrcp.pop %v3502
        %v3505 = vmul.f32 %v3502, %v3504
        %v3506 = vsub.f32 1.0, %v3505
        %v3507 = vmul.f32 %v3504, %v3506
        %v3508 = vadd.f32 %v3504, %v3507
        %vm3509 = vweird.f32 %v3502
        %vm3510 = vweird.f32 %v3504
        %vm3511 = vmor %vm3509, %vm3510
        %v3512 = vsel %vm3511, %v3504, %v3508
        %v3513 = vand.u32 2147483647, %v3502
        %vm3514 = vcmp.eq.f32.partialorder %v3513, 8.507059e+37
        %v3515 = vand.u32 %v3502, 2147483648
        %v3516 = vor.u32 1.1754944e-38, %v3515
        %v3517 = vsel %vm3514, %v3516, %v3512
        %v3518 = vmul.f32 1.0, %v3517
        %v3519 = vrcp.pop %v3503
        %v3520 = vmul.f32 %v3503, %v3519
        %v3521 = vsub.f32 1.0, %v3520
        %v3522 = vmul.f32 %v3519, %v3521
        %v3523 = vadd.f32 %v3519, %v3522
        %vm3524 = vweird.f32 %v3503
        %vm3525 = vweird.f32 %v3519
        %vm3526 = vmor %vm3524, %vm3525
        %v3527 = vsel %vm3526, %v3519, %v3523
        %v3528 = vand.u32 2147483647, %v3503
        %vm3529 = vcmp.eq.f32.partialorder %v3528, 8.507059e+37
        %v3530 = vand.u32 %v3503, 2147483648
        %v3531 = vor.u32 1.1754944e-38, %v3530
        %v3532 = vsel %vm3529, %v3531, %v3527
        %v3533 = vmul.f32 1.0, %v3532
        %v3534 = vmul.f32 %v3518, %v2911
        %v3535 = vmul.f32 %v3533, %v2912
        %v3536 = vadd.f32 %v2696, %v3534
        %v3537 = vadd.f32 %v2697, %v3535
        %v3538 = vadd.f32 %v2698, %v3518
        %v3539 = vadd.f32 %v2699, %v3533
        %3540 = vxpose.xlu0.b32.start [1/16] %v3325, 128
        %3541 = vxpose.xlu0.b32.cont [2/16] %v3326, 128
        %3542 = vxpose.xlu0.b32.cont [3/16] 0.0, 128
        %3543 = vxpose.xlu0.b32.cont [4/16] 0.0, 128
        %3544 = vxpose.xlu0.b32.cont [5/16] 0.0, 128
        %3545 = vxpose.xlu0.b32.cont [6/16] 0.0, 128
        %3546 = vxpose.xlu0.b32.cont [7/16] 0.0, 128
        %3547 = vxpose.xlu0.b32.cont [8/16] 0.0, 128
        %3548 = vxpose.xlu0.b32.cont [9/16] 0.0, 128
        %3549 = vxpose.xlu0.b32.cont [10/16] 0.0, 128
        %3550 = vxpose.xlu0.b32.cont [11/16] 0.0, 128
        %3551 = vxpose.xlu0.b32.cont [12/16] 0.0, 128
        %3552 = vxpose.xlu0.b32.cont [13/16] 0.0, 128
        %3553 = vxpose.xlu0.b32.cont [14/16] 0.0, 128
        %3554 = vxpose.xlu0.b32.cont [15/16] 0.0, 128
        %3555 = vxpose.xlu0.b32.end [16/16] 0.0, 128
        %v3556 = vpop.trf.xlu0
        %v3557 = vpop.trf.xlu0
        %v3558 = vpop.trf.xlu0
        %v3559 = vpop.trf.xlu0
        %v3560 = vpop.trf.xlu0
        %v3561 = vpop.trf.xlu0
        %v3562 = vpop.trf.xlu0
        %v3563 = vpop.trf.xlu0
        %v3564 = vpop.trf.xlu0
        %v3565 = vpop.trf.xlu0
        %v3566 = vpop.trf.xlu0
        %v3567 = vpop.trf.xlu0
        %v3568 = vpop.trf.xlu0
        %v3569 = vpop.trf.xlu0
        %v3570 = vpop.trf.xlu0
        %v3571 = vpop.trf.xlu0
        %v3573 = vsel %vm1786, %v3556, 0
        %v3576 = vsel %vm1786, %v3557, 0
        %3578 = vmatpush.msra.mxu0 0.0
        %3579 = vmatpush.msra.mxu0 0.0
        %3580 = vmatpush.msra.mxu0 0.0
        %3581 = vmatpush.msra.mxu0 0.0
        %3582 = vmatpush.msra.mxu0 0.0
        %3583 = vmatpush.msra.mxu0 0.0
        %3584 = vmatpush.msra.mxu0 0.0
        %3585 = vmatpush.msra.mxu0 0.0
        %3586 = vmatpush.msra.mxu0 0.0
        %3587 = vmatpush.msra.mxu0 0.0
        %3588 = vmatpush.msra.mxu0 0.0
        %3589 = vmatpush.msra.mxu0 0.0
        %3590 = vmatpush.msra.mxu0 0.0
        %3591 = vmatpush.msra.mxu0 0.0
        %3592 = vmatpush.msra.mxu0 %v1009
        %3593 = vmatpush.msra.mxu0 %v1008
        %3594 = vmatmul.f32.gmra.mxu0 %v3573
        %v3595 = vpop.f32.mrf.mxu0
        %v3596 = vadd.f32 0.0, %v3595
        %3597 = vmatmul.f32.gmra.mxu0 %v3576
        %v3598 = vpop.f32.mrf.mxu0
        %v3599 = vadd.f32 0.0, %v3598
        %3600 = vdwg.mxu0
        %v3601 = vxor.u32 %v3596, 2147483648
        %v3602 = vxor.u32 %v3599, 2147483648
        %v3603 = vmul.f32 %v3601, 1.442695
        %v3604 = vpow.pop %v3603
        %v3605 = vmul.f32 %v3602, 1.442695
        %v3606 = vpow.pop %v3605
        %v3607 = vadd.f32 %v3604, 1.0
        %v3608 = vadd.f32 %v3606, 1.0
        %v3609 = vrcp.pop %v3607
        %v3610 = vmul.f32 %v3607, %v3609
        %v3611 = vsub.f32 1.0, %v3610
        %v3612 = vmul.f32 %v3609, %v3611
        %v3613 = vadd.f32 %v3609, %v3612
        %vm3614 = vweird.f32 %v3607
        %vm3615 = vweird.f32 %v3609
        %vm3616 = vmor %vm3614, %vm3615
        %v3617 = vsel %vm3616, %v3609, %v3613
        %v3618 = vand.u32 2147483647, %v3607
        %vm3619 = vcmp.eq.f32.partialorder %v3618, 8.507059e+37
        %v3620 = vand.u32 %v3607, 2147483648
        %v3621 = vor.u32 1.1754944e-38, %v3620
        %v3622 = vsel %vm3619, %v3621, %v3617
        %v3623 = vmul.f32 1.0, %v3622
        %v3624 = vrcp.pop %v3608
        %v3625 = vmul.f32 %v3608, %v3624
        %v3626 = vsub.f32 1.0, %v3625
        %v3627 = vmul.f32 %v3624, %v3626
        %v3628 = vadd.f32 %v3624, %v3627
        %vm3629 = vweird.f32 %v3608
        %vm3630 = vweird.f32 %v3624
        %vm3631 = vmor %vm3629, %vm3630
        %v3632 = vsel %vm3631, %v3624, %v3628
        %v3633 = vand.u32 2147483647, %v3608
        %vm3634 = vcmp.eq.f32.partialorder %v3633, 8.507059e+37
        %v3635 = vand.u32 %v3608, 2147483648
        %v3636 = vor.u32 1.1754944e-38, %v3635
        %v3637 = vsel %vm3634, %v3636, %v3632
        %v3638 = vmul.f32 1.0, %v3637
        %v3639 = vmul.f32 %v3623, %v2914
        %v3640 = vmul.f32 %v3638, %v2915
        %v3641 = vadd.f32 %v2801, %v3639
        %v3642 = vadd.f32 %v2802, %v3640
        %v3643 = vadd.f32 %v2803, %v3623
        %v3644 = vadd.f32 %v2804, %v3638
        %3645 = vxpose.xlu0.b32.start [1/16] %v3433, 128
        %3646 = vxpose.xlu0.b32.cont [2/16] %v3434, 128
        %3647 = vxpose.xlu0.b32.cont [3/16] 0.0, 128
        %3648 = vxpose.xlu0.b32.cont [4/16] 0.0, 128
        %3649 = vxpose.xlu0.b32.cont [5/16] 0.0, 128
        %3650 = vxpose.xlu0.b32.cont [6/16] 0.0, 128
        %3651 = vxpose.xlu0.b32.cont [7/16] 0.0, 128
        %3652 = vxpose.xlu0.b32.cont [8/16] 0.0, 128
        %3653 = vxpose.xlu0.b32.cont [9/16] 0.0, 128
        %3654 = vxpose.xlu0.b32.cont [10/16] 0.0, 128
        %3655 = vxpose.xlu0.b32.cont [11/16] 0.0, 128
        %3656 = vxpose.xlu0.b32.cont [12/16] 0.0, 128
        %3657 = vxpose.xlu0.b32.cont [13/16] 0.0, 128
        %3658 = vxpose.xlu0.b32.cont [14/16] 0.0, 128
        %3659 = vxpose.xlu0.b32.cont [15/16] 0.0, 128
        %3660 = vxpose.xlu0.b32.end [16/16] 0.0, 128
        %v3661 = vpop.trf.xlu0
        %v3662 = vpop.trf.xlu0
        %v3663 = vpop.trf.xlu0
        %v3664 = vpop.trf.xlu0
        %v3665 = vpop.trf.xlu0
        %v3666 = vpop.trf.xlu0
        %v3667 = vpop.trf.xlu0
        %v3668 = vpop.trf.xlu0
        %v3669 = vpop.trf.xlu0
        %v3670 = vpop.trf.xlu0
        %v3671 = vpop.trf.xlu0
        %v3672 = vpop.trf.xlu0
        %v3673 = vpop.trf.xlu0
        %v3674 = vpop.trf.xlu0
        %v3675 = vpop.trf.xlu0
        %v3676 = vpop.trf.xlu0
        %v3678 = vsel %vm1786, %v3661, 0
        %v3681 = vsel %vm1786, %v3662, 0
        %3683 = vmatpush.msra.mxu0 0.0
        %3684 = vmatpush.msra.mxu0 0.0
        %3685 = vmatpush.msra.mxu0 0.0
        %3686 = vmatpush.msra.mxu0 0.0
        %3687 = vmatpush.msra.mxu0 0.0
        %3688 = vmatpush.msra.mxu0 0.0
        %3689 = vmatpush.msra.mxu0 0.0
        %3690 = vmatpush.msra.mxu0 0.0
        %3691 = vmatpush.msra.mxu0 0.0
        %3692 = vmatpush.msra.mxu0 0.0
        %3693 = vmatpush.msra.mxu0 0.0
        %3694 = vmatpush.msra.mxu0 0.0
        %3695 = vmatpush.msra.mxu0 0.0
        %3696 = vmatpush.msra.mxu0 0.0
        %3697 = vmatpush.msra.mxu0 %v1145
        %3698 = vmatpush.msra.mxu0 %v1144
        %3699 = vmatmul.f32.gmra.mxu0 %v3678
        %v3700 = vpop.f32.mrf.mxu0
        %v3701 = vadd.f32 0.0, %v3700
        %3702 = vmatmul.f32.gmra.mxu0 %v3681
        %v3703 = vpop.f32.mrf.mxu0
        %v3704 = vadd.f32 0.0, %v3703
        %3705 = vdwg.mxu0
        %v3706 = vxor.u32 %v3701, 2147483648
        %v3707 = vxor.u32 %v3704, 2147483648
        %v3708 = vmul.f32 %v3706, 1.442695
        %v3709 = vpow.pop %v3708
        %v3710 = vmul.f32 %v3707, 1.442695
        %v3711 = vpow.pop %v3710
        %v3712 = vadd.f32 %v3709, 1.0
        %v3713 = vadd.f32 %v3711, 1.0
        %v3714 = vrcp.pop %v3712
        %v3715 = vmul.f32 %v3712, %v3714
        %v3716 = vsub.f32 1.0, %v3715
        %v3717 = vmul.f32 %v3714, %v3716
        %v3718 = vadd.f32 %v3714, %v3717
        %vm3719 = vweird.f32 %v3712
        %vm3720 = vweird.f32 %v3714
        %vm3721 = vmor %vm3719, %vm3720
        %v3722 = vsel %vm3721, %v3714, %v3718
        %v3723 = vand.u32 2147483647, %v3712
        %vm3724 = vcmp.eq.f32.partialorder %v3723, 8.507059e+37
        %v3725 = vand.u32 %v3712, 2147483648
        %v3726 = vor.u32 1.1754944e-38, %v3725
        %v3727 = vsel %vm3724, %v3726, %v3722
        %v3728 = vmul.f32 1.0, %v3727
        %v3729 = vrcp.pop %v3713
        %v3730 = vmul.f32 %v3713, %v3729
        %v3731 = vsub.f32 1.0, %v3730
        %v3732 = vmul.f32 %v3729, %v3731
        %v3733 = vadd.f32 %v3729, %v3732
        %vm3734 = vweird.f32 %v3713
        %vm3735 = vweird.f32 %v3729
        %vm3736 = vmor %vm3734, %vm3735
        %v3737 = vsel %vm3736, %v3729, %v3733
        %v3738 = vand.u32 2147483647, %v3713
        %vm3739 = vcmp.eq.f32.partialorder %v3738, 8.507059e+37
        %v3740 = vand.u32 %v3713, 2147483648
        %v3741 = vor.u32 1.1754944e-38, %v3740
        %v3742 = vsel %vm3739, %v3741, %v3737
        %v3743 = vmul.f32 1.0, %v3742
        %v3744 = vmul.f32 %v3728, %v2917
        %v3745 = vmul.f32 %v3743, %v2918
        %v3746 = vadd.f32 %v2906, %v3744
        %v3747 = vadd.f32 %v2907, %v3745
        %v3748 = vadd.f32 %v2908, %v3728
        %v3749 = vadd.f32 %v2909, %v3743
        %v3750 = vrcp.pop %v3538
        %v3751 = vmul.f32 %v3538, %v3750
        %v3752 = vsub.f32 1.0, %v3751
        %v3753 = vmul.f32 %v3750, %v3752
        %v3754 = vadd.f32 %v3750, %v3753
        %vm3755 = vweird.f32 %v3538
        %vm3756 = vweird.f32 %v3750
        %vm3757 = vmor %vm3755, %vm3756
        %v3758 = vsel %vm3757, %v3750, %v3754
        %v3759 = vand.u32 2147483647, %v3538
        %vm3760 = vcmp.eq.f32.partialorder %v3759, 8.507059e+37
        %v3761 = vand.u32 %v3538, 2147483648
        %v3762 = vor.u32 1.1754944e-38, %v3761
        %v3763 = vsel %vm3760, %v3762, %v3758
        %v3764 = vmul.f32 %v3536, %v3763
        %v3765 = vrcp.pop %v3539
        %v3766 = vmul.f32 %v3539, %v3765
        %v3767 = vsub.f32 1.0, %v3766
        %v3768 = vmul.f32 %v3765, %v3767
        %v3769 = vadd.f32 %v3765, %v3768
        %vm3770 = vweird.f32 %v3539
        %vm3771 = vweird.f32 %v3765
        %vm3772 = vmor %vm3770, %vm3771
        %v3773 = vsel %vm3772, %v3765, %v3769
        %v3774 = vand.u32 2147483647, %v3539
        %vm3775 = vcmp.eq.f32.partialorder %v3774, 8.507059e+37
        %v3776 = vand.u32 %v3539, 2147483648
        %v3777 = vor.u32 1.1754944e-38, %v3776
        %v3778 = vsel %vm3775, %v3777, %v3773
        %v3779 = vmul.f32 %v3537, %v3778
        %v3780 = vadd.f32 %v3764, %v534
        %v3781 = vadd.f32 %v3779, %v535
        %3782 = vst.msk [vmem:[%s365] sm:$0xff] %vm1786, %v3780
        %3783 = vst.msk [vmem:[%s365 + $0x8] sm:$0xff] %vm1786, %v3781
        %v3784 = vrcp.pop %v3643
        %v3785 = vmul.f32 %v3643, %v3784
        %v3786 = vsub.f32 1.0, %v3785
        %v3787 = vmul.f32 %v3784, %v3786
        %v3788 = vadd.f32 %v3784, %v3787
        %vm3789 = vweird.f32 %v3643
        %vm3790 = vweird.f32 %v3784
        %vm3791 = vmor %vm3789, %vm3790
        %v3792 = vsel %vm3791, %v3784, %v3788
        %v3793 = vand.u32 2147483647, %v3643
        %vm3794 = vcmp.eq.f32.partialorder %v3793, 8.507059e+37
        %v3795 = vand.u32 %v3643, 2147483648
        %v3796 = vor.u32 1.1754944e-38, %v3795
        %v3797 = vsel %vm3794, %v3796, %v3792
        %v3798 = vmul.f32 %v3641, %v3797
        %v3799 = vrcp.pop %v3644
        %v3800 = vmul.f32 %v3644, %v3799
        %v3801 = vsub.f32 1.0, %v3800
        %v3802 = vmul.f32 %v3799, %v3801
        %v3803 = vadd.f32 %v3799, %v3802
        %vm3804 = vweird.f32 %v3644
        %vm3805 = vweird.f32 %v3799
        %vm3806 = vmor %vm3804, %vm3805
        %v3807 = vsel %vm3806, %v3799, %v3803
        %v3808 = vand.u32 2147483647, %v3644
        %vm3809 = vcmp.eq.f32.partialorder %v3808, 8.507059e+37
        %v3810 = vand.u32 %v3644, 2147483648
        %v3811 = vor.u32 1.1754944e-38, %v3810
        %v3812 = vsel %vm3809, %v3811, %v3807
        %v3813 = vmul.f32 %v3642, %v3812
        %v3814 = vadd.f32 %v3798, %v537
        %v3815 = vadd.f32 %v3813, %v538
        %s3816 = scalar_lea.vmem %s365, 16 [#allocation14]
        %3817 = vst.msk [vmem:[%s3816] sm:$0xff] %vm1786, %v3814
        %3818 = vst.msk [vmem:[%s3816 + $0x8] sm:$0xff] %vm1786, %v3815
        %v3819 = vrcp.pop %v3748
        %v3820 = vmul.f32 %v3748, %v3819
        %v3821 = vsub.f32 1.0, %v3820
        %v3822 = vmul.f32 %v3819, %v3821
        %v3823 = vadd.f32 %v3819, %v3822
        %vm3824 = vweird.f32 %v3748
        %vm3825 = vweird.f32 %v3819
        %vm3826 = vmor %vm3824, %vm3825
        %v3827 = vsel %vm3826, %v3819, %v3823
        %v3828 = vand.u32 2147483647, %v3748
        %vm3829 = vcmp.eq.f32.partialorder %v3828, 8.507059e+37
        %v3830 = vand.u32 %v3748, 2147483648
        %v3831 = vor.u32 1.1754944e-38, %v3830
        %v3832 = vsel %vm3829, %v3831, %v3827
        %v3833 = vmul.f32 %v3746, %v3832
        %v3834 = vrcp.pop %v3749
        %v3835 = vmul.f32 %v3749, %v3834
        %v3836 = vsub.f32 1.0, %v3835
        %v3837 = vmul.f32 %v3834, %v3836
        %v3838 = vadd.f32 %v3834, %v3837
        %vm3839 = vweird.f32 %v3749
        %vm3840 = vweird.f32 %v3834
        %vm3841 = vmor %vm3839, %vm3840
        %v3842 = vsel %vm3841, %v3834, %v3838
        %v3843 = vand.u32 2147483647, %v3749
        %vm3844 = vcmp.eq.f32.partialorder %v3843, 8.507059e+37
        %v3845 = vand.u32 %v3749, 2147483648
        %v3846 = vor.u32 1.1754944e-38, %v3845
        %v3847 = vsel %vm3844, %v3846, %v3842
        %v3848 = vmul.f32 %v3747, %v3847
        %v3849 = vadd.f32 %v3833, %v540
        %v3850 = vadd.f32 %v3848, %v541
        %s3851 = scalar_lea.vmem %s365, 32 [#allocation14]
        %3852 = vst.msk [vmem:[%s3851] sm:$0xff] %vm1786, %v3849
        %3853 = vst.msk [vmem:[%s3851 + $0x8] sm:$0xff] %vm1786, %v3850
        %s3854 = sand.u32 %s173, 1
        %s3855 = scalar_lea.sflag [#allocation4], %s3854
        %s3856 = sand.u32 %s173, 1
        %s3857 = smul.addr %s3856, 48
        %s3858 = scalar_lea.vmem [#allocation14], %s3857
        // Predicated region
        $region69: #{feature_aggregation.1} parent=43 // pred_check
          %p3859 = pneg %p183
        $region70: #{feature_aggregation.1} parent=43 // pred_check_branch
          %3861 = sbr.rel (%p3859) target = $region72
        $region71: #{feature_aggregation.1} parent=43 // pred_region
          %3863 = vsyncadd %s3855, 0
          %s3864 = smul.addr %s29, 6
          %s3865 = smul.addr %s3864, 8
          %s3866 = scalar_lea.hbm %s6, %s3865
          %s3867 = sshll.u32 %s3858, 4
          %s3868 = int_to_ptr.vmem [resolvable:$true] %s3867
          %s3869 = sshll.u32 %s3866, 4
          %s3870 = int_to_ptr.hbm [resolvable:$true] %s3869
          %3875 = dma.vmem_to_hbm [thread:$0]  %s3868, 768, %s3870, %s3855, 128, 128, 8
        $region72: #{feature_aggregation.1} parent=43 // pred_fallthru
          _
      $region44: #{feature_aggregation.1} parent=5 // pred_fallthru
        _
      %p3876 = scmp.le.s32.totalorder 2, %s24
      // Predicated region
      $region73: #{feature_aggregation.1} parent=5 // pred_check
        %p3877 = pneg %p3876
      $region74: #{feature_aggregation.1} parent=5 // pred_check_branch
        %3879 = sbr.rel (%p3877) target = $region76
      $region75: #{feature_aggregation.1} parent=5 // pred_region
        %s3880 = ssub.s32 %s24, 2
        // Predicated region
        $region77: #{feature_aggregation.1} parent=75 // pred_check
          %p3881 = pneg %p189
        $region78: #{feature_aggregation.1} parent=75 // pred_check_branch
          %3883 = sbr.rel (%p3881) target = $region80
        $region79: #{feature_aggregation.1} parent=75 // pred_region
          %s3884 = sand.u32 %s174, 1
          %s3885 = scalar_lea.sflag [#allocation4], %s3884
          %s3886 = sand.u32 %s174, 1
          %s3887 = smul.addr %s3886, 48
          %s3888 = scalar_lea.vmem [#allocation14], %s3887
          %3890 = dma.done %s3885, 768
        $region80: #{feature_aggregation.1} parent=75 // pred_fallthru
          _
      $region76: #{feature_aggregation.1} parent=5 // pred_fallthru
        _
    $region6: #{feature_aggregation.1} parent=1 // loop_footer
      %s28 = sadd.s32 1, %s24
    $region7: #{feature_aggregation.1} parent=1 // loop_footer_branch
      %23 = sbr.rel target = $region3
    $region8: #{feature_aggregation.1} parent=1 // loop_exit
      _
    %3891 = vsyncpa [#allocation3], 1
    %s3892 = scalar_lea.sflag [#allocation3], 1
    %3893 = vsyncpa %s3892, 1
    %3894 = vsyncpa [#allocation7], 1
    %s3895 = scalar_lea.sflag [#allocation7], 1
    %3896 = vsyncpa %s3895, 1
    %3897 = vsyncpa [#allocation4], 1
    %s3898 = scalar_lea.sflag [#allocation4], 1
    %3899 = vsyncpa %s3898, 1
    %3900 = vsyncpa [#allocation5], 1
    %s3901 = scalar_lea.sflag [#allocation5], 1
    %3902 = vsyncpa %s3901, 1
    %3903 = vsyncpa [#allocation10], 1
    %3904 = vsyncpa [#allocation13], 1

</llo_original>
